<compile_context>
chip_gen: v7x
topology: tpu7x:2x2x1
jax: 0.10.0
libtpu: 0.0.40
codegen_flags: <defaults>
</compile_context>

<pallas_src>
import jax
import jax.numpy as jnp
import numpy as np
from jax.experimental import pallas as pl
from jax.experimental.pallas import tpu as pltpu

BN_EPS = 1e-5
LANE = 128
VMEM_LIMIT = 32 * 1024 * 1024  # >= default scoped VMEM on v5e/v6e/v7x


def _round_up(x, m):
    return (x + m - 1) // m * m


def _pick_tile(m, cap=512):
    t = cap
    while t > 1 and m % t != 0:
        t //= 2
    return max(t, 1)


# ------------------- kernel 1: conv (one depth tap) + BN stats ---------------
def _make_conv_stats_kernel(H, W, c_in):
    HW = H * W
    K9 = 9 * c_in

    def kernel(xp_ref, w_ref, ypre_ref, stats_ref, patches_ref, acc_ref):
        # xp_ref:    (1, 1, H+2, W+2, Cin)  bf16, one haloed depth plane (d+kd)
        # w_ref:     (1, 9*Cin, Cout_p)     bf16, weights of depth tap kd
        # ypre_ref:  (1, 1, H*W, Cout_p)    f32, pre-BN conv output for (n, d)
        # stats_ref: (1, 1, 8, Cout_p)      f32, rows 0/1 = sum / sum-of-squares
        # patches_ref: VMEM (H, W, 9*Cin)   f32 im2col tile (in-plane taps)
        # acc_ref:     VMEM (H*W, Cout_p)   f32 accumulator over the 3 depth taps
        kd = pl.program_id(2)

        @pl.when(kd == 0)
        def _init_acc():
            acc_ref[...] = jnp.zeros_like(acc_ref)

        # Assemble the 9 (kh, kw) taps of this depth tap into an im2col tile
        # held in VMEM (no HBM inflation).
        x = xp_ref[0, 0, :, :, :].astype(jnp.float32)          # (H+2, W+2, Cin)
        for kh in range(3):
            for kw in range(3):
                c0 = (kh * 3 + kw) * c_in
                patches_ref[:, :, c0:c0 + c_in] = x[kh:kh + H, kw:kw + W, :]

        patches = patches_ref[...].reshape(HW, K9).astype(jnp.bfloat16)
        acc_ref[...] += jnp.dot(patches, w_ref[0, :, :],
                                preferred_element_type=jnp.float32)

        @pl.when(kd == 2)
        def _finalize():
            y = acc_ref[...]                                   # (HW, Cout_p) f32
            ypre_ref[0, 0, :, :] = y
            stats_ref[...] = jnp.zeros_like(stats_ref)
            stats_ref[0, 0, 0:1, :] = jnp.sum(y, axis=0, keepdims=True)
            stats_ref[0, 0, 1:2, :] = jnp.sum(y * y, axis=0, keepdims=True)

    return kernel


# ------------------- kernel 2: BN affine + ReLU finalize ----------------------
def _make_bn_relu_kernel(c_out):
    def kernel(y_ref, scale_ref, shift_ref, o_ref):
        # y_ref: (tile_m, Cout_p) f32; scale/shift: (1, Cout); o_ref: (tile_m, Cout)
        y = y_ref[:, :c_out]
        z = y * scale_ref[...] + shift_ref[...]
        o_ref[...] = jnp.maximum(z, 0.0).astype(o_ref.dtype)
    return kernel


# --------------------------- one conv+BN+ReLU stage ---------------------------
def conv_bn_relu_stage(x, w, gamma, beta, out_dtype):
    """x: (N, D, H, W, Cin); w: (3,3,3,Cin,Cout) DHWIO; gamma/beta: (1, Cout)."""
    N, D, H, W, c_in = x.shape
    c_out = w.shape[-1]
    c_out_p = _round_up(c_out, LANE)
    HW = H * W
    K9 = 9 * c_in

    # Pad spatially once; bf16 halves DMA bytes and feeds the MXU directly.
    xp = jnp.pad(x, ((0, 0), (1, 1), (1, 1), (1, 1), (0, 0))).astype(jnp.bfloat16)
    # (3, 9*Cin, Cout_p): depth tap major, rows ordered (kh, kw, ci), lane-padded.
    w_p = jnp.pad(w.reshape(3, K9, c_out),
                  ((0, 0), (0, 0), (0, c_out_p - c_out))).astype(jnp.bfloat16)

    flops = 2 * N * D * HW * (3 * K9) * c_out_p
    bytes_accessed = (3 * xp.size * 2            # each padded plane read 3x (kd)
                      + w_p.size * 2
                      + N * D * HW * c_out_p * 4
                      + N * D * 8 * c_out_p * 4)

    y_pre, stats = pl.pallas_call(
        _make_conv_stats_kernel(H, W, c_in),
        out_shape=(
            jax.ShapeDtypeStruct((N, D, HW, c_out_p), jnp.float32),  # pre-BN conv
            jax.ShapeDtypeStruct((N, D, 8, c_out_p), jnp.float32),   # partial stats
        ),
        grid_spec=pltpu.PrefetchScalarGridSpec(
            num_scalar_prefetch=0,
            grid=(N, D, 3),                                          # kd innermost
            in_specs=[
                pl.BlockSpec((1, 1, H + 2, W + 2, c_in),
                             lambda n, d, kd: (n, d + kd, 0, 0, 0)),
                pl.BlockSpec((1, K9, c_out_p), lambda n, d, kd: (kd, 0, 0)),
            ],
            out_specs=(
                pl.BlockSpec((1, 1, HW, c_out_p), lambda n, d, kd: (n, d, 0, 0)),
                pl.BlockSpec((1, 1, 8, c_out_p), lambda n, d, kd: (n, d, 0, 0)),
            ),
            scratch_shapes=[
                pltpu.VMEM((H, W, K9), jnp.float32),      # im2col tile
                pltpu.VMEM((HW, c_out_p), jnp.float32),   # f32 accumulator
            ],
        ),
        compiler_params=pltpu.CompilerParams(
            dimension_semantics=("parallel", "parallel", "arbitrary"),
            vmem_limit_bytes=VMEM_LIMIT,
        ),
        cost_estimate=pl.CostEstimate(flops=flops, transcendentals=0,
                                      bytes_accessed=bytes_accessed),
    )(xp, w_p)

    # Finalize the BatchNorm statistics on the host (tiny per-channel vectors).
    m_count = jnp.float32(N * D * H * W)
    s = jnp.sum(stats[:, :, 0, :c_out], axis=(0, 1))
    s2 = jnp.sum(stats[:, :, 1, :c_out], axis=(0, 1))
    mean = s / m_count
    var = jnp.maximum(s2 / m_count - mean * mean, 0.0)     # biased, one-pass
    inv_std = jax.lax.rsqrt(var + BN_EPS)
    scale = (gamma.reshape(-1) * inv_std).reshape(1, c_out).astype(jnp.float32)
    shift = (beta.reshape(-1) - mean * gamma.reshape(-1) * inv_std
             ).reshape(1, c_out).astype(jnp.float32)

    # Elementwise scale/shift + ReLU over row tiles (lane-dense f32 input).
    m_rows = N * D * HW
    tile_m = _pick_tile(m_rows, cap=512)
    y2d = y_pre.reshape(m_rows, c_out_p)
    out2d = pl.pallas_call(
        _make_bn_relu_kernel(c_out),
        out_shape=jax.ShapeDtypeStruct((m_rows, c_out), out_dtype),
        grid_spec=pltpu.PrefetchScalarGridSpec(
            num_scalar_prefetch=0,
            grid=(m_rows // tile_m,),
            in_specs=[
                pl.BlockSpec((tile_m, c_out_p), lambda i: (i, 0)),
                pl.BlockSpec((1, c_out), lambda i: (0, 0)),
                pl.BlockSpec((1, c_out), lambda i: (0, 0)),
            ],
            out_specs=pl.BlockSpec((tile_m, c_out), lambda i: (i, 0)),
        ),
        compiler_params=pltpu.CompilerParams(
            dimension_semantics=("parallel",),
            vmem_limit_bytes=VMEM_LIMIT,
        ),
    )(y2d, scale, shift)

    return out2d.reshape(N, D, H, W, c_out)


@jax.jit
def double_conv(x, w1, g1, b1, w2, g2, b2):
    """x: (N, D, H, W, Cin); w*: (3,3,3,Ci,Co) DHWIO; g*/b*: (1, Co)."""
    z1 = conv_bn_relu_stage(x, w1, g1, b1, out_dtype=jnp.bfloat16)
    z2 = conv_bn_relu_stage(z1, w2, g2, b2, out_dtype=jnp.float32)
    return z2


# ------------------------------ pure-JAX reference ----------------------------
def ref_double_conv(x, w1, g1, b1, w2, g2, b2):
    def stage(x, w, g, b):
        y = jax.lax.conv_general_dilated(
            x, w, window_strides=(1, 1, 1), padding="SAME",
            dimension_numbers=("NDHWC", "DHWIO", "NDHWC"),
            precision=jax.lax.Precision.HIGHEST,
        )
        mean = jnp.mean(y, axis=(0, 1, 2, 3), keepdims=True)
        var = jnp.mean(jnp.square(y - mean), axis=(0, 1, 2, 3), keepdims=True)
        y_hat = (y - mean) * jax.lax.rsqrt(var + BN_EPS)
        return jnp.maximum(
            y_hat * g.reshape(1, 1, 1, 1, -1) + b.reshape(1, 1, 1, 1, -1), 0.0
        )
    return stage(stage(x, w1, g1, b1), w2, g2, b2)


# ------------------------------------ main ------------------------------------
if __name__ == "__main__":
    N, Cin, Cout, D, H, W = 2, 4, 8, 8, 8, 8

    key = jax.random.PRNGKey(0)
    kx, kw1, kw2, kg1, kb1, kg2, kb2 = jax.random.split(key, 7)

    # PyTorch-layout input (NCDHW) -> channels-last NDHWC for the TPU kernels.
    x_ncdhw = jax.random.normal(kx, (N, Cin, D, H, W), jnp.float32)
    x = jnp.transpose(x_ncdhw, (0, 2, 3, 4, 1))

    # Conv weights in DHWIO layout (== torch weight (O,I,kD,kH,kW) permuted).
    w1 = 0.1 * jax.random.normal(kw1, (3, 3, 3, Cin, Cout), jnp.float32)
    w2 = 0.1 * jax.random.normal(kw2, (3, 3, 3, Cout, Cout), jnp.float32)
    g1 = 1.0 + 0.1 * jax.random.normal(kg1, (1, Cout), jnp.float32)
    b1 = 0.1 * jax.random.normal(kb1, (1, Cout), jnp.float32)
    g2 = 1.0 + 0.1 * jax.random.normal(kg2, (1, Cout), jnp.float32)
    b2 = 0.1 * jax.random.normal(kb2, (1, Cout), jnp.float32)

    out_ndhwc = double_conv(x, w1, g1, b1, w2, g2, b2)
    out_ncdhw = jnp.transpose(out_ndhwc, (0, 4, 1, 2, 3))   # back to NCDHW
    jax.block_until_ready(out_ncdhw)

    ref_ncdhw = jnp.transpose(ref_double_conv(x, w1, g1, b1, w2, g2, b2),
                              (0, 4, 1, 2, 3))
    # Tolerance accounts for bf16 MXU inputs (f32 accumulation) vs f32/HIGHEST ref.
    np.testing.assert_allclose(np.asarray(out_ncdhw), np.asarray(ref_ncdhw),
                               rtol=2e-2, atol=2e-2)
    print("KERNEL_OK")
</pallas_src>

<mosaic_0001>
module attributes {stable_mosaic.version = 11 : i64} {
  func.func @kernel(%arg0: i32, %arg1: i32, %arg2: i32, %arg3: memref<1x1x10x10x4xbf16, #tpu.memory_space<vmem>>, %arg4: memref<1x36x128xbf16, #tpu.memory_space<vmem>>, %arg5: memref<1x1x64x128xf32, #tpu.memory_space<vmem>>, %arg6: memref<1x1x8x128xf32, #tpu.memory_space<vmem>>, %arg7: memref<8x8x36xf32, #tpu.memory_space<vmem>>, %arg8: memref<64x128xf32, #tpu.memory_space<vmem>>) attributes {dimension_semantics = [#tpu.dimension_semantics<parallel>, #tpu.dimension_semantics<parallel>, #tpu.dimension_semantics<arbitrary>], iteration_bounds = array<i64: 2, 8, 3>, scalar_prefetch = 0 : i64, scratch_operands = 2 : i64, tpu.core_type = #tpu.core_type<tc>, window_params = [{transform_indices = @transform_0, window_bounds = array<i64: 1, 1, 10, 10, 4>}, {transform_indices = @transform_1, window_bounds = array<i64: 1, 36, 128>}, {transform_indices = @transform_2, window_bounds = array<i64: 1, 1, 64, 128>}, {transform_indices = @transform_3, window_bounds = array<i64: 1, 1, 8, 128>}]} {
    %c0_i32 = arith.constant 0 : i32
    %0 = arith.cmpi eq, %arg2, %c0_i32 : i32
    %1 = arith.extui %0 : i1 to i32
    %c0_i32_0 = arith.constant 0 : i32
    %2 = arith.cmpi ne, %1, %c0_i32_0 : i32
    scf.if %2 {
      %cst_35 = arith.constant 0.000000e+00 : f32
      %36 = vector.broadcast %cst_35 : f32 to vector<64x128xf32>
      %c0_36 = arith.constant 0 : index
      %c0_37 = arith.constant 0 : index
      %37 = vector.load %arg8[%c0_36, %c0_37] : memref<64x128xf32, #tpu.memory_space<vmem>>, vector<64x128xf32>
      tpu.vector_store %arg8[%c0_36, %c0_37], %36 {strides = array<i32>} : memref<64x128xf32, #tpu.memory_space<vmem>>, vector<64x128xf32>,
    } else {
    }
    %c0 = arith.constant 0 : index
    %c0_1 = arith.constant 0 : index
    %c0_2 = arith.constant 0 : index
    %c0_3 = arith.constant 0 : index
    %c0_4 = arith.constant 0 : index
    %3 = vector.load %arg3[%c0, %c0_1, %c0_2, %c0_3, %c0_4] : memref<1x1x10x10x4xbf16, #tpu.memory_space<vmem>>, vector<1x1x10x10x4xbf16>
    %4 = vector.shape_cast %3 : vector<1x1x10x10x4xbf16> to vector<10x10x4xbf16>
    %5 = arith.extf %4 : vector<10x10x4xbf16> to vector<10x10x4xf32>
    %6 = vector.extract_strided_slice %5 {offsets = [0, 0, 0], sizes = [8, 8, 4], strides = [1, 1, 1]} : vector<10x10x4xf32> to vector<8x8x4xf32>
    %c0_5 = arith.constant 0 : index
    %c0_6 = arith.constant 0 : index
    %c0_7 = arith.constant 0 : index
    %7 = vector.load %arg7[%c0_5, %c0_6, %c0_7] : memref<8x8x36xf32, #tpu.memory_space<vmem>>, vector<8x8x4xf32>
    tpu.vector_store %arg7[%c0_5, %c0_6, %c0_7], %6 {strides = array<i32>} : memref<8x8x36xf32, #tpu.memory_space<vmem>>, vector<8x8x4xf32>,
    %8 = vector.extract_strided_slice %5 {offsets = [0, 1, 0], sizes = [8, 8, 4], strides = [1, 1, 1]} : vector<10x10x4xf32> to vector<8x8x4xf32>
    %c0_8 = arith.constant 0 : index
    %c0_9 = arith.constant 0 : index
    %c4 = arith.constant 4 : index
    %9 = vector.load %arg7[%c0_8, %c0_9, %c4] : memref<8x8x36xf32, #tpu.memory_space<vmem>>, vector<8x8x4xf32>
    tpu.vector_store %arg7[%c0_8, %c0_9, %c4], %8 {strides = array<i32>} : memref<8x8x36xf32, #tpu.memory_space<vmem>>, vector<8x8x4xf32>,
    %10 = vector.extract_strided_slice %5 {offsets = [0, 2, 0], sizes = [8, 8, 4], strides = [1, 1, 1]} : vector<10x10x4xf32> to vector<8x8x4xf32>
    %c0_10 = arith.constant 0 : index
    %c0_11 = arith.constant 0 : index
    %c8 = arith.constant 8 : index
    %11 = vector.load %arg7[%c0_10, %c0_11, %c8] : memref<8x8x36xf32, #tpu.memory_space<vmem>>, vector<8x8x4xf32>
    tpu.vector_store %arg7[%c0_10, %c0_11, %c8], %10 {strides = array<i32>} : memref<8x8x36xf32, #tpu.memory_space<vmem>>, vector<8x8x4xf32>,
    %12 = vector.extract_strided_slice %5 {offsets = [1, 0, 0], sizes = [8, 8, 4], strides = [1, 1, 1]} : vector<10x10x4xf32> to vector<8x8x4xf32>
    %c0_12 = arith.constant 0 : index
    %c0_13 = arith.constant 0 : index
    %c12 = arith.constant 12 : index
    %13 = vector.load %arg7[%c0_12, %c0_13, %c12] : memref<8x8x36xf32, #tpu.memory_space<vmem>>, vector<8x8x4xf32>
    tpu.vector_store %arg7[%c0_12, %c0_13, %c12], %12 {strides = array<i32>} : memref<8x8x36xf32, #tpu.memory_space<vmem>>, vector<8x8x4xf32>,
    %14 = vector.extract_strided_slice %5 {offsets = [1, 1, 0], sizes = [8, 8, 4], strides = [1, 1, 1]} : vector<10x10x4xf32> to vector<8x8x4xf32>
    %c0_14 = arith.constant 0 : index
    %c0_15 = arith.constant 0 : index
    %c16 = arith.constant 16 : index
    %15 = vector.load %arg7[%c0_14, %c0_15, %c16] : memref<8x8x36xf32, #tpu.memory_space<vmem>>, vector<8x8x4xf32>
    tpu.vector_store %arg7[%c0_14, %c0_15, %c16], %14 {strides = array<i32>} : memref<8x8x36xf32, #tpu.memory_space<vmem>>, vector<8x8x4xf32>,
    %16 = vector.extract_strided_slice %5 {offsets = [1, 2, 0], sizes = [8, 8, 4], strides = [1, 1, 1]} : vector<10x10x4xf32> to vector<8x8x4xf32>
    %c0_16 = arith.constant 0 : index
    %c0_17 = arith.constant 0 : index
    %c20 = arith.constant 20 : index
    %17 = vector.load %arg7[%c0_16, %c0_17, %c20] : memref<8x8x36xf32, #tpu.memory_space<vmem>>, vector<8x8x4xf32>
    tpu.vector_store %arg7[%c0_16, %c0_17, %c20], %16 {strides = array<i32>} : memref<8x8x36xf32, #tpu.memory_space<vmem>>, vector<8x8x4xf32>,
    %18 = vector.extract_strided_slice %5 {offsets = [2, 0, 0], sizes = [8, 8, 4], strides = [1, 1, 1]} : vector<10x10x4xf32> to vector<8x8x4xf32>
    %c0_18 = arith.constant 0 : index
    %c0_19 = arith.constant 0 : index
    %c24 = arith.constant 24 : index
    %19 = vector.load %arg7[%c0_18, %c0_19, %c24] : memref<8x8x36xf32, #tpu.memory_space<vmem>>, vector<8x8x4xf32>
    tpu.vector_store %arg7[%c0_18, %c0_19, %c24], %18 {strides = array<i32>} : memref<8x8x36xf32, #tpu.memory_space<vmem>>, vector<8x8x4xf32>,
    %20 = vector.extract_strided_slice %5 {offsets = [2, 1, 0], sizes = [8, 8, 4], strides = [1, 1, 1]} : vector<10x10x4xf32> to vector<8x8x4xf32>
    %c0_20 = arith.constant 0 : index
    %c0_21 = arith.constant 0 : index
    %c28 = arith.constant 28 : index
    %21 = vector.load %arg7[%c0_20, %c0_21, %c28] : memref<8x8x36xf32, #tpu.memory_space<vmem>>, vector<8x8x4xf32>
    tpu.vector_store %arg7[%c0_20, %c0_21, %c28], %20 {strides = array<i32>} : memref<8x8x36xf32, #tpu.memory_space<vmem>>, vector<8x8x4xf32>,
    %22 = vector.extract_strided_slice %5 {offsets = [2, 2, 0], sizes = [8, 8, 4], strides = [1, 1, 1]} : vector<10x10x4xf32> to vector<8x8x4xf32>
    %c0_22 = arith.constant 0 : index
    %c0_23 = arith.constant 0 : index
    %c32 = arith.constant 32 : index
    %23 = vector.load %arg7[%c0_22, %c0_23, %c32] : memref<8x8x36xf32, #tpu.memory_space<vmem>>, vector<8x8x4xf32>
    tpu.vector_store %arg7[%c0_22, %c0_23, %c32], %22 {strides = array<i32>} : memref<8x8x36xf32, #tpu.memory_space<vmem>>, vector<8x8x4xf32>,
    %c0_24 = arith.constant 0 : index
    %c0_25 = arith.constant 0 : index
    %c0_26 = arith.constant 0 : index
    %24 = vector.load %arg7[%c0_24, %c0_25, %c0_26] : memref<8x8x36xf32, #tpu.memory_space<vmem>>, vector<8x8x36xf32>
    %25 = vector.shape_cast %24 : vector<8x8x36xf32> to vector<64x36xf32>
    %26 = arith.truncf %25 : vector<64x36xf32> to vector<64x36xbf16>
    %c0_27 = arith.constant 0 : index
    %c0_28 = arith.constant 0 : index
    %27 = vector.load %arg8[%c0_27, %c0_28] : memref<64x128xf32, #tpu.memory_space<vmem>>, vector<64x128xf32>
    %c0_29 = arith.constant 0 : index
    %c0_30 = arith.constant 0 : index
    %c0_31 = arith.constant 0 : index
    %28 = vector.load %arg4[%c0_29, %c0_30, %c0_31] : memref<1x36x128xbf16, #tpu.memory_space<vmem>>, vector<1x36x128xbf16>
    %29 = vector.shape_cast %28 : vector<1x36x128xbf16> to vector<36x128xbf16>
    %cst = arith.constant dense<0.000000e+00> : vector<64x128xf32>
    %30 = tpu.matmul %26, %29, %cst {dimension_numbers = #tpu.dot_dimension_numbers<[1], [0], [0], [1], [0, 0, 1, 1], [], []>} : vector<64x36xbf16>, vector<36x128xbf16>, vector<64x128xf32> -> vector<64x128xf32>
    %31 = arith.addf %27, %30 : vector<64x128xf32>
    %c0_32 = arith.constant 0 : index
    %c0_33 = arith.constant 0 : index
    %32 = vector.load %arg8[%c0_32, %c0_33] : memref<64x128xf32, #tpu.memory_space<vmem>>, vector<64x128xf32>
    tpu.vector_store %arg8[%c0_32, %c0_33], %31 {strides = array<i32>} : memref<64x128xf32, #tpu.memory_space<vmem>>, vector<64x128xf32>,
    %c2_i32 = arith.constant 2 : i32
    %33 = arith.cmpi eq, %arg2, %c2_i32 : i32
    %34 = arith.extui %33 : i1 to i32
    %c0_i32_34 = arith.constant 0 : i32
    %35 = arith.cmpi ne, %34, %c0_i32_34 : i32
    scf.if %35 {
      %c0_35 = arith.constant 0 : index
      %c0_36 = arith.constant 0 : index
      %36 = vector.load %arg8[%c0_35, %c0_36] : memref<64x128xf32, #tpu.memory_space<vmem>>, vector<64x128xf32>
      %c0_37 = arith.constant 0 : index
      %c0_38 = arith.constant 0 : index
      %c0_39 = arith.constant 0 : index
      %c0_40 = arith.constant 0 : index
      %37 = vector.load %arg5[%c0_37, %c0_38, %c0_39, %c0_40] : memref<1x1x64x128xf32, #tpu.memory_space<vmem>>, vector<1x1x64x128xf32>
      %38 = vector.shape_cast %37 : vector<1x1x64x128xf32> to vector<64x128xf32>
      %39 = vector.shape_cast %36 : vector<64x128xf32> to vector<1x1x64x128xf32>
      tpu.vector_store %arg5[%c0_37, %c0_38, %c0_39, %c0_40], %39 {strides = array<i32>} : memref<1x1x64x128xf32, #tpu.memory_space<vmem>>, vector<1x1x64x128xf32>,
      %cst_41 = arith.constant 0.000000e+00 : f32
      %40 = vector.broadcast %cst_41 : f32 to vector<1x1x8x128xf32>
      %c0_42 = arith.constant 0 : index
      %c0_43 = arith.constant 0 : index
      %c0_44 = arith.constant 0 : index
      %c0_45 = arith.constant 0 : index
      %41 = vector.load %arg6[%c0_42, %c0_43, %c0_44, %c0_45] : memref<1x1x8x128xf32, #tpu.memory_space<vmem>>, vector<1x1x8x128xf32>
      tpu.vector_store %arg6[%c0_42, %c0_43, %c0_44, %c0_45], %40 {strides = array<i32>} : memref<1x1x8x128xf32, #tpu.memory_space<vmem>>, vector<1x1x8x128xf32>,
      %cst_46 = arith.constant dense<0.000000e+00> : vector<128xf32>
      %42 = vector.multi_reduction <add>, %36, %cst_46 [0] : vector<64x128xf32> to vector<128xf32>
      %43 = vector.shape_cast %42 : vector<128xf32> to vector<1x128xf32>
      %c0_47 = arith.constant 0 : index
      %c0_48 = arith.constant 0 : index
      %c0_49 = arith.constant 0 : index
      %c0_50 = arith.constant 0 : index
      %44 = vector.load %arg6[%c0_47, %c0_48, %c0_49, %c0_50] : memref<1x1x8x128xf32, #tpu.memory_space<vmem>>, vector<1x1x1x128xf32>
      %45 = vector.shape_cast %44 : vector<1x1x1x128xf32> to vector<1x128xf32>
      %46 = vector.shape_cast %43 : vector<1x128xf32> to vector<1x1x1x128xf32>
      tpu.vector_store %arg6[%c0_47, %c0_48, %c0_49, %c0_50], %46 {strides = array<i32>} : memref<1x1x8x128xf32, #tpu.memory_space<vmem>>, vector<1x1x1x128xf32>,
      %47 = arith.mulf %36, %36 : vector<64x128xf32>
      %cst_51 = arith.constant dense<0.000000e+00> : vector<128xf32>
      %48 = vector.multi_reduction <add>, %47, %cst_51 [0] : vector<64x128xf32> to vector<128xf32>
      %49 = vector.shape_cast %48 : vector<128xf32> to vector<1x128xf32>
      %c0_52 = arith.constant 0 : index
      %c0_53 = arith.constant 0 : index
      %c1 = arith.constant 1 : index
      %c0_54 = arith.constant 0 : index
      %50 = vector.load %arg6[%c0_52, %c0_53, %c1, %c0_54] : memref<1x1x8x128xf32, #tpu.memory_space<vmem>>, vector<1x1x1x128xf32>
      %51 = vector.shape_cast %50 : vector<1x1x1x128xf32> to vector<1x128xf32>
      %52 = vector.shape_cast %49 : vector<1x128xf32> to vector<1x1x1x128xf32>
      tpu.vector_store %arg6[%c0_52, %c0_53, %c1, %c0_54], %52 {strides = array<i32>} : memref<1x1x8x128xf32, #tpu.memory_space<vmem>>, vector<1x1x1x128xf32>,
    } else {
    }
    return
  }
  func.func @transform_0(%arg0: i32, %arg1: i32, %arg2: i32) -> (i32, i32, i32, i32, i32) {
    %0 = arith.addi %arg1, %arg2 : i32
    %c0_i32 = arith.constant 0 : i32
    %c0_i32_0 = arith.constant 0 : i32
    %c0_i32_1 = arith.constant 0 : i32
    %c0_i32_2 = arith.constant 0 : i32
    return %arg0, %0, %c0_i32, %c0_i32_0, %c0_i32_1 : i32, i32, i32, i32, i32
  }
  func.func @transform_1(%arg0: i32, %arg1: i32, %arg2: i32) -> (i32, i32, i32) {
    %c0_i32 = arith.constant 0 : i32
    %c0_i32_0 = arith.constant 0 : i32
    %c0_i32_1 = arith.constant 0 : i32
    return %arg2, %c0_i32, %c0_i32_0 : i32, i32, i32
  }
  func.func @transform_2(%arg0: i32, %arg1: i32, %arg2: i32) -> (i32, i32, i32, i32) {
    %c0_i32 = arith.constant 0 : i32
    %c0_i32_0 = arith.constant 0 : i32
    %c0_i32_1 = arith.constant 0 : i32
    return %arg0, %arg1, %c0_i32, %c0_i32_0 : i32, i32, i32, i32
  }
  func.func @transform_3(%arg0: i32, %arg1: i32, %arg2: i32) -> (i32, i32, i32, i32) {
    %c0_i32 = arith.constant 0 : i32
    %c0_i32_0 = arith.constant 0 : i32
    %c0_i32_1 = arith.constant 0 : i32
    return %arg0, %arg1, %c0_i32, %c0_i32_0 : i32, i32, i32, i32
  }
}

module attributes {stable_mosaic.version = 11 : i64} {
  func.func @kernel(%arg0: i32, %arg1: memref<512x128xf32, #tpu.memory_space<vmem>>, %arg2: memref<1x8xf32, #tpu.memory_space<vmem>>, %arg3: memref<1x8xf32, #tpu.memory_space<vmem>>, %arg4: memref<512x8xbf16, #tpu.memory_space<vmem>>) attributes {dimension_semantics = [#tpu.dimension_semantics<parallel>], iteration_bounds = array<i64: 2>, scalar_prefetch = 0 : i64, scratch_operands = 0 : i64, tpu.core_type = #tpu.core_type<tc>, window_params = [{transform_indices = @transform_0, window_bounds = array<i64: 512, 128>}, {pipeline_mode = #tpu.pipeline_mode<synchronous>, transform_indices = @transform_1, window_bounds = array<i64: 1, 8>}, {pipeline_mode = #tpu.pipeline_mode<synchronous>, transform_indices = @transform_2, window_bounds = array<i64: 1, 8>}, {transform_indices = @transform_3, window_bounds = array<i64: 512, 8>}]} {
    %c0 = arith.constant 0 : index
    %c0_0 = arith.constant 0 : index
    %0 = vector.load %arg1[%c0, %c0_0] : memref<512x128xf32, #tpu.memory_space<vmem>>, vector<512x8xf32>
    %c0_1 = arith.constant 0 : index
    %c0_2 = arith.constant 0 : index
    %1 = vector.load %arg2[%c0_1, %c0_2] : memref<1x8xf32, #tpu.memory_space<vmem>>, vector<1x8xf32>
    %2 = vector.broadcast %1 : vector<1x8xf32> to vector<512x8xf32>
    %3 = arith.mulf %0, %2 : vector<512x8xf32>
    %c0_3 = arith.constant 0 : index
    %c0_4 = arith.constant 0 : index
    %4 = vector.load %arg3[%c0_3, %c0_4] : memref<1x8xf32, #tpu.memory_space<vmem>>, vector<1x8xf32>
    %5 = vector.broadcast %4 : vector<1x8xf32> to vector<512x8xf32>
    %6 = arith.addf %3, %5 : vector<512x8xf32>
    %cst = arith.constant 0.000000e+00 : f32
    %7 = vector.broadcast %cst : f32 to vector<512x8xf32>
    %8 = arith.maximumf %6, %7 : vector<512x8xf32>
    %9 = arith.truncf %8 : vector<512x8xf32> to vector<512x8xbf16>
    %c0_5 = arith.constant 0 : index
    %c0_6 = arith.constant 0 : index
    %10 = vector.load %arg4[%c0_5, %c0_6] : memref<512x8xbf16, #tpu.memory_space<vmem>>, vector<512x8xbf16>
    tpu.vector_store %arg4[%c0_5, %c0_6], %9 {strides = array<i32>} : memref<512x8xbf16, #tpu.memory_space<vmem>>, vector<512x8xbf16>,
    return
  }
  func.func @transform_0(%arg0: i32) -> (i32, i32) {
    %c0_i32 = arith.constant 0 : i32
    %c0_i32_0 = arith.constant 0 : i32
    return %arg0, %c0_i32 : i32, i32
  }
  func.func @transform_1(%arg0: i32) -> (i32, i32) {
    %c0_i32 = arith.constant 0 : i32
    %c0_i32_0 = arith.constant 0 : i32
    %c0_i32_1 = arith.constant 0 : i32
    return %c0_i32, %c0_i32_0 : i32, i32
  }
  func.func @transform_2(%arg0: i32) -> (i32, i32) {
    %c0_i32 = arith.constant 0 : i32
    %c0_i32_0 = arith.constant 0 : i32
    %c0_i32_1 = arith.constant 0 : i32
    return %c0_i32, %c0_i32_0 : i32, i32
  }
  func.func @transform_3(%arg0: i32) -> (i32, i32) {
    %c0_i32 = arith.constant 0 : i32
    %c0_i32_0 = arith.constant 0 : i32
    return %arg0, %c0_i32 : i32, i32
  }
}

module attributes {stable_mosaic.version = 11 : i64} {
  func.func @kernel(%arg0: i32, %arg1: memref<512x128xf32, #tpu.memory_space<vmem>>, %arg2: memref<1x8xf32, #tpu.memory_space<vmem>>, %arg3: memref<1x8xf32, #tpu.memory_space<vmem>>, %arg4: memref<512x8xf32, #tpu.memory_space<vmem>>) attributes {dimension_semantics = [#tpu.dimension_semantics<parallel>], iteration_bounds = array<i64: 2>, scalar_prefetch = 0 : i64, scratch_operands = 0 : i64, tpu.core_type = #tpu.core_type<tc>, window_params = [{transform_indices = @transform_0, window_bounds = array<i64: 512, 128>}, {pipeline_mode = #tpu.pipeline_mode<synchronous>, transform_indices = @transform_1, window_bounds = array<i64: 1, 8>}, {pipeline_mode = #tpu.pipeline_mode<synchronous>, transform_indices = @transform_2, window_bounds = array<i64: 1, 8>}, {transform_indices = @transform_3, window_bounds = array<i64: 512, 8>}]} {
    %c0 = arith.constant 0 : index
    %c0_0 = arith.constant 0 : index
    %0 = vector.load %arg1[%c0, %c0_0] : memref<512x128xf32, #tpu.memory_space<vmem>>, vector<512x8xf32>
    %c0_1 = arith.constant 0 : index
    %c0_2 = arith.constant 0 : index
    %1 = vector.load %arg2[%c0_1, %c0_2] : memref<1x8xf32, #tpu.memory_space<vmem>>, vector<1x8xf32>
    %2 = vector.broadcast %1 : vector<1x8xf32> to vector<512x8xf32>
    %3 = arith.mulf %0, %2 : vector<512x8xf32>
    %c0_3 = arith.constant 0 : index
    %c0_4 = arith.constant 0 : index
    %4 = vector.load %arg3[%c0_3, %c0_4] : memref<1x8xf32, #tpu.memory_space<vmem>>, vector<1x8xf32>
    %5 = vector.broadcast %4 : vector<1x8xf32> to vector<512x8xf32>
    %6 = arith.addf %3, %5 : vector<512x8xf32>
    %cst = arith.constant 0.000000e+00 : f32
    %7 = vector.broadcast %cst : f32 to vector<512x8xf32>
    %8 = arith.maximumf %6, %7 : vector<512x8xf32>
    %c0_5 = arith.constant 0 : index
    %c0_6 = arith.constant 0 : index
    %9 = vector.load %arg4[%c0_5, %c0_6] : memref<512x8xf32, #tpu.memory_space<vmem>>, vector<512x8xf32>
    tpu.vector_store %arg4[%c0_5, %c0_6], %8 {strides = array<i32>} : memref<512x8xf32, #tpu.memory_space<vmem>>, vector<512x8xf32>,
    return
  }
  func.func @transform_0(%arg0: i32) -> (i32, i32) {
    %c0_i32 = arith.constant 0 : i32
    %c0_i32_0 = arith.constant 0 : i32
    return %arg0, %c0_i32 : i32, i32
  }
  func.func @transform_1(%arg0: i32) -> (i32, i32) {
    %c0_i32 = arith.constant 0 : i32
    %c0_i32_0 = arith.constant 0 : i32
    %c0_i32_1 = arith.constant 0 : i32
    return %c0_i32, %c0_i32_0 : i32, i32
  }
  func.func @transform_2(%arg0: i32) -> (i32, i32) {
    %c0_i32 = arith.constant 0 : i32
    %c0_i32_0 = arith.constant 0 : i32
    %c0_i32_1 = arith.constant 0 : i32
    return %c0_i32, %c0_i32_0 : i32, i32
  }
  func.func @transform_3(%arg0: i32) -> (i32, i32) {
    %c0_i32 = arith.constant 0 : i32
    %c0_i32_0 = arith.constant 0 : i32
    return %arg0, %c0_i32 : i32, i32
  }
}

module attributes {stable_mosaic.version = 11 : i64} {
  func.func @kernel(%arg0: i32, %arg1: i32, %arg2: i32, %arg3: memref<1x1x10x10x8xbf16, #tpu.memory_space<vmem>>, %arg4: memref<1x72x128xbf16, #tpu.memory_space<vmem>>, %arg5: memref<1x1x64x128xf32, #tpu.memory_space<vmem>>, %arg6: memref<1x1x8x128xf32, #tpu.memory_space<vmem>>, %arg7: memref<8x8x72xf32, #tpu.memory_space<vmem>>, %arg8: memref<64x128xf32, #tpu.memory_space<vmem>>) attributes {dimension_semantics = [#tpu.dimension_semantics<parallel>, #tpu.dimension_semantics<parallel>, #tpu.dimension_semantics<arbitrary>], iteration_bounds = array<i64: 2, 8, 3>, scalar_prefetch = 0 : i64, scratch_operands = 2 : i64, tpu.core_type = #tpu.core_type<tc>, window_params = [{transform_indices = @transform_0, window_bounds = array<i64: 1, 1, 10, 10, 8>}, {transform_indices = @transform_1, window_bounds = array<i64: 1, 72, 128>}, {transform_indices = @transform_2, window_bounds = array<i64: 1, 1, 64, 128>}, {transform_indices = @transform_3, window_bounds = array<i64: 1, 1, 8, 128>}]} {
    %c0_i32 = arith.constant 0 : i32
    %0 = arith.cmpi eq, %arg2, %c0_i32 : i32
    %1 = arith.extui %0 : i1 to i32
    %c0_i32_0 = arith.constant 0 : i32
    %2 = arith.cmpi ne, %1, %c0_i32_0 : i32
    scf.if %2 {
      %cst_35 = arith.constant 0.000000e+00 : f32
      %36 = vector.broadcast %cst_35 : f32 to vector<64x128xf32>
      %c0_36 = arith.constant 0 : index
      %c0_37 = arith.constant 0 : index
      %37 = vector.load %arg8[%c0_36, %c0_37] : memref<64x128xf32, #tpu.memory_space<vmem>>, vector<64x128xf32>
      tpu.vector_store %arg8[%c0_36, %c0_37], %36 {strides = array<i32>} : memref<64x128xf32, #tpu.memory_space<vmem>>, vector<64x128xf32>,
    } else {
    }
    %c0 = arith.constant 0 : index
    %c0_1 = arith.constant 0 : index
    %c0_2 = arith.constant 0 : index
    %c0_3 = arith.constant 0 : index
    %c0_4 = arith.constant 0 : index
    %3 = vector.load %arg3[%c0, %c0_1, %c0_2, %c0_3, %c0_4] : memref<1x1x10x10x8xbf16, #tpu.memory_space<vmem>>, vector<1x1x10x10x8xbf16>
    %4 = vector.shape_cast %3 : vector<1x1x10x10x8xbf16> to vector<10x10x8xbf16>
    %5 = arith.extf %4 : vector<10x10x8xbf16> to vector<10x10x8xf32>
    %6 = vector.extract_strided_slice %5 {offsets = [0, 0, 0], sizes = [8, 8, 8], strides = [1, 1, 1]} : vector<10x10x8xf32> to vector<8x8x8xf32>
    %c0_5 = arith.constant 0 : index
    %c0_6 = arith.constant 0 : index
    %c0_7 = arith.constant 0 : index
    %7 = vector.load %arg7[%c0_5, %c0_6, %c0_7] : memref<8x8x72xf32, #tpu.memory_space<vmem>>, vector<8x8x8xf32>
    tpu.vector_store %arg7[%c0_5, %c0_6, %c0_7], %6 {strides = array<i32>} : memref<8x8x72xf32, #tpu.memory_space<vmem>>, vector<8x8x8xf32>,
    %8 = vector.extract_strided_slice %5 {offsets = [0, 1, 0], sizes = [8, 8, 8], strides = [1, 1, 1]} : vector<10x10x8xf32> to vector<8x8x8xf32>
    %c0_8 = arith.constant 0 : index
    %c0_9 = arith.constant 0 : index
    %c8 = arith.constant 8 : index
    %9 = vector.load %arg7[%c0_8, %c0_9, %c8] : memref<8x8x72xf32, #tpu.memory_space<vmem>>, vector<8x8x8xf32>
    tpu.vector_store %arg7[%c0_8, %c0_9, %c8], %8 {strides = array<i32>} : memref<8x8x72xf32, #tpu.memory_space<vmem>>, vector<8x8x8xf32>,
    %10 = vector.extract_strided_slice %5 {offsets = [0, 2, 0], sizes = [8, 8, 8], strides = [1, 1, 1]} : vector<10x10x8xf32> to vector<8x8x8xf32>
    %c0_10 = arith.constant 0 : index
    %c0_11 = arith.constant 0 : index
    %c16 = arith.constant 16 : index
    %11 = vector.load %arg7[%c0_10, %c0_11, %c16] : memref<8x8x72xf32, #tpu.memory_space<vmem>>, vector<8x8x8xf32>
    tpu.vector_store %arg7[%c0_10, %c0_11, %c16], %10 {strides = array<i32>} : memref<8x8x72xf32, #tpu.memory_space<vmem>>, vector<8x8x8xf32>,
    %12 = vector.extract_strided_slice %5 {offsets = [1, 0, 0], sizes = [8, 8, 8], strides = [1, 1, 1]} : vector<10x10x8xf32> to vector<8x8x8xf32>
    %c0_12 = arith.constant 0 : index
    %c0_13 = arith.constant 0 : index
    %c24 = arith.constant 24 : index
    %13 = vector.load %arg7[%c0_12, %c0_13, %c24] : memref<8x8x72xf32, #tpu.memory_space<vmem>>, vector<8x8x8xf32>
    tpu.vector_store %arg7[%c0_12, %c0_13, %c24], %12 {strides = array<i32>} : memref<8x8x72xf32, #tpu.memory_space<vmem>>, vector<8x8x8xf32>,
    %14 = vector.extract_strided_slice %5 {offsets = [1, 1, 0], sizes = [8, 8, 8], strides = [1, 1, 1]} : vector<10x10x8xf32> to vector<8x8x8xf32>
    %c0_14 = arith.constant 0 : index
    %c0_15 = arith.constant 0 : index
    %c32 = arith.constant 32 : index
    %15 = vector.load %arg7[%c0_14, %c0_15, %c32] : memref<8x8x72xf32, #tpu.memory_space<vmem>>, vector<8x8x8xf32>
    tpu.vector_store %arg7[%c0_14, %c0_15, %c32], %14 {strides = array<i32>} : memref<8x8x72xf32, #tpu.memory_space<vmem>>, vector<8x8x8xf32>,
    %16 = vector.extract_strided_slice %5 {offsets = [1, 2, 0], sizes = [8, 8, 8], strides = [1, 1, 1]} : vector<10x10x8xf32> to vector<8x8x8xf32>
    %c0_16 = arith.constant 0 : index
    %c0_17 = arith.constant 0 : index
    %c40 = arith.constant 40 : index
    %17 = vector.load %arg7[%c0_16, %c0_17, %c40] : memref<8x8x72xf32, #tpu.memory_space<vmem>>, vector<8x8x8xf32>
    tpu.vector_store %arg7[%c0_16, %c0_17, %c40], %16 {strides = array<i32>} : memref<8x8x72xf32, #tpu.memory_space<vmem>>, vector<8x8x8xf32>,
    %18 = vector.extract_strided_slice %5 {offsets = [2, 0, 0], sizes = [8, 8, 8], strides = [1, 1, 1]} : vector<10x10x8xf32> to vector<8x8x8xf32>
    %c0_18 = arith.constant 0 : index
    %c0_19 = arith.constant 0 : index
    %c48 = arith.constant 48 : index
    %19 = vector.load %arg7[%c0_18, %c0_19, %c48] : memref<8x8x72xf32, #tpu.memory_space<vmem>>, vector<8x8x8xf32>
    tpu.vector_store %arg7[%c0_18, %c0_19, %c48], %18 {strides = array<i32>} : memref<8x8x72xf32, #tpu.memory_space<vmem>>, vector<8x8x8xf32>,
    %20 = vector.extract_strided_slice %5 {offsets = [2, 1, 0], sizes = [8, 8, 8], strides = [1, 1, 1]} : vector<10x10x8xf32> to vector<8x8x8xf32>
    %c0_20 = arith.constant 0 : index
    %c0_21 = arith.constant 0 : index
    %c56 = arith.constant 56 : index
    %21 = vector.load %arg7[%c0_20, %c0_21, %c56] : memref<8x8x72xf32, #tpu.memory_space<vmem>>, vector<8x8x8xf32>
    tpu.vector_store %arg7[%c0_20, %c0_21, %c56], %20 {strides = array<i32>} : memref<8x8x72xf32, #tpu.memory_space<vmem>>, vector<8x8x8xf32>,
    %22 = vector.extract_strided_slice %5 {offsets = [2, 2, 0], sizes = [8, 8, 8], strides = [1, 1, 1]} : vector<10x10x8xf32> to vector<8x8x8xf32>
    %c0_22 = arith.constant 0 : index
    %c0_23 = arith.constant 0 : index
    %c64 = arith.constant 64 : index
    %23 = vector.load %arg7[%c0_22, %c0_23, %c64] : memref<8x8x72xf32, #tpu.memory_space<vmem>>, vector<8x8x8xf32>
    tpu.vector_store %arg7[%c0_22, %c0_23, %c64], %22 {strides = array<i32>} : memref<8x8x72xf32, #tpu.memory_space<vmem>>, vector<8x8x8xf32>,
    %c0_24 = arith.constant 0 : index
    %c0_25 = arith.constant 0 : index
    %c0_26 = arith.constant 0 : index
    %24 = vector.load %arg7[%c0_24, %c0_25, %c0_26] : memref<8x8x72xf32, #tpu.memory_space<vmem>>, vector<8x8x72xf32>
    %25 = vector.shape_cast %24 : vector<8x8x72xf32> to vector<64x72xf32>
    %26 = arith.truncf %25 : vector<64x72xf32> to vector<64x72xbf16>
    %c0_27 = arith.constant 0 : index
    %c0_28 = arith.constant 0 : index
    %27 = vector.load %arg8[%c0_27, %c0_28] : memref<64x128xf32, #tpu.memory_space<vmem>>, vector<64x128xf32>
    %c0_29 = arith.constant 0 : index
    %c0_30 = arith.constant 0 : index
    %c0_31 = arith.constant 0 : index
    %28 = vector.load %arg4[%c0_29, %c0_30, %c0_31] : memref<1x72x128xbf16, #tpu.memory_space<vmem>>, vector<1x72x128xbf16>
    %29 = vector.shape_cast %28 : vector<1x72x128xbf16> to vector<72x128xbf16>
    %cst = arith.constant dense<0.000000e+00> : vector<64x128xf32>
    %30 = tpu.matmul %26, %29, %cst {dimension_numbers = #tpu.dot_dimension_numbers<[1], [0], [0], [1], [0, 0, 1, 1], [], []>} : vector<64x72xbf16>, vector<72x128xbf16>, vector<64x128xf32> -> vector<64x128xf32>
    %31 = arith.addf %27, %30 : vector<64x128xf32>
    %c0_32 = arith.constant 0 : index
    %c0_33 = arith.constant 0 : index
    %32 = vector.load %arg8[%c0_32, %c0_33] : memref<64x128xf32, #tpu.memory_space<vmem>>, vector<64x128xf32>
    tpu.vector_store %arg8[%c0_32, %c0_33], %31 {strides = array<i32>} : memref<64x128xf32, #tpu.memory_space<vmem>>, vector<64x128xf32>,
    %c2_i32 = arith.constant 2 : i32
    %33 = arith.cmpi eq, %arg2, %c2_i32 : i32
    %34 = arith.extui %33 : i1 to i32
    %c0_i32_34 = arith.constant 0 : i32
    %35 = arith.cmpi ne, %34, %c0_i32_34 : i32
    scf.if %35 {
      %c0_35 = arith.constant 0 : index
      %c0_36 = arith.constant 0 : index
      %36 = vector.load %arg8[%c0_35, %c0_36] : memref<64x128xf32, #tpu.memory_space<vmem>>, vector<64x128xf32>
      %c0_37 = arith.constant 0 : index
      %c0_38 = arith.constant 0 : index
      %c0_39 = arith.constant 0 : index
      %c0_40 = arith.constant 0 : index
      %37 = vector.load %arg5[%c0_37, %c0_38, %c0_39, %c0_40] : memref<1x1x64x128xf32, #tpu.memory_space<vmem>>, vector<1x1x64x128xf32>
      %38 = vector.shape_cast %37 : vector<1x1x64x128xf32> to vector<64x128xf32>
      %39 = vector.shape_cast %36 : vector<64x128xf32> to vector<1x1x64x128xf32>
      tpu.vector_store %arg5[%c0_37, %c0_38, %c0_39, %c0_40], %39 {strides = array<i32>} : memref<1x1x64x128xf32, #tpu.memory_space<vmem>>, vector<1x1x64x128xf32>,
      %cst_41 = arith.constant 0.000000e+00 : f32
      %40 = vector.broadcast %cst_41 : f32 to vector<1x1x8x128xf32>
      %c0_42 = arith.constant 0 : index
      %c0_43 = arith.constant 0 : index
      %c0_44 = arith.constant 0 : index
      %c0_45 = arith.constant 0 : index
      %41 = vector.load %arg6[%c0_42, %c0_43, %c0_44, %c0_45] : memref<1x1x8x128xf32, #tpu.memory_space<vmem>>, vector<1x1x8x128xf32>
      tpu.vector_store %arg6[%c0_42, %c0_43, %c0_44, %c0_45], %40 {strides = array<i32>} : memref<1x1x8x128xf32, #tpu.memory_space<vmem>>, vector<1x1x8x128xf32>,
      %cst_46 = arith.constant dense<0.000000e+00> : vector<128xf32>
      %42 = vector.multi_reduction <add>, %36, %cst_46 [0] : vector<64x128xf32> to vector<128xf32>
      %43 = vector.shape_cast %42 : vector<128xf32> to vector<1x128xf32>
      %c0_47 = arith.constant 0 : index
      %c0_48 = arith.constant 0 : index
      %c0_49 = arith.constant 0 : index
      %c0_50 = arith.constant 0 : index
      %44 = vector.load %arg6[%c0_47, %c0_48, %c0_49, %c0_50] : memref<1x1x8x128xf32, #tpu.memory_space<vmem>>, vector<1x1x1x128xf32>
      %45 = vector.shape_cast %44 : vector<1x1x1x128xf32> to vector<1x128xf32>
      %46 = vector.shape_cast %43 : vector<1x128xf32> to vector<1x1x1x128xf32>
      tpu.vector_store %arg6[%c0_47, %c0_48, %c0_49, %c0_50], %46 {strides = array<i32>} : memref<1x1x8x128xf32, #tpu.memory_space<vmem>>, vector<1x1x1x128xf32>,
      %47 = arith.mulf %36, %36 : vector<64x128xf32>
      %cst_51 = arith.constant dense<0.000000e+00> : vector<128xf32>
      %48 = vector.multi_reduction <add>, %47, %cst_51 [0] : vector<64x128xf32> to vector<128xf32>
      %49 = vector.shape_cast %48 : vector<128xf32> to vector<1x128xf32>
      %c0_52 = arith.constant 0 : index
      %c0_53 = arith.constant 0 : index
      %c1 = arith.constant 1 : index
      %c0_54 = arith.constant 0 : index
      %50 = vector.load %arg6[%c0_52, %c0_53, %c1, %c0_54] : memref<1x1x8x128xf32, #tpu.memory_space<vmem>>, vector<1x1x1x128xf32>
      %51 = vector.shape_cast %50 : vector<1x1x1x128xf32> to vector<1x128xf32>
      %52 = vector.shape_cast %49 : vector<1x128xf32> to vector<1x1x1x128xf32>
      tpu.vector_store %arg6[%c0_52, %c0_53, %c1, %c0_54], %52 {strides = array<i32>} : memref<1x1x8x128xf32, #tpu.memory_space<vmem>>, vector<1x1x1x128xf32>,
    } else {
    }
    return
  }
  func.func @transform_0(%arg0: i32, %arg1: i32, %arg2: i32) -> (i32, i32, i32, i32, i32) {
    %0 = arith.addi %arg1, %arg2 : i32
    %c0_i32 = arith.constant 0 : i32
    %c0_i32_0 = arith.constant 0 : i32
    %c0_i32_1 = arith.constant 0 : i32
    %c0_i32_2 = arith.constant 0 : i32
    return %arg0, %0, %c0_i32, %c0_i32_0, %c0_i32_1 : i32, i32, i32, i32, i32
  }
  func.func @transform_1(%arg0: i32, %arg1: i32, %arg2: i32) -> (i32, i32, i32) {
    %c0_i32 = arith.constant 0 : i32
    %c0_i32_0 = arith.constant 0 : i32
    %c0_i32_1 = arith.constant 0 : i32
    return %arg2, %c0_i32, %c0_i32_0 : i32, i32, i32
  }
  func.func @transform_2(%arg0: i32, %arg1: i32, %arg2: i32) -> (i32, i32, i32, i32) {
    %c0_i32 = arith.constant 0 : i32
    %c0_i32_0 = arith.constant 0 : i32
    %c0_i32_1 = arith.constant 0 : i32
    return %arg0, %arg1, %c0_i32, %c0_i32_0 : i32, i32, i32, i32
  }
  func.func @transform_3(%arg0: i32, %arg1: i32, %arg2: i32) -> (i32, i32, i32, i32) {
    %c0_i32 = arith.constant 0 : i32
    %c0_i32_0 = arith.constant 0 : i32
    %c0_i32_1 = arith.constant 0 : i32
    return %arg0, %arg1, %c0_i32, %c0_i32_0 : i32, i32, i32, i32
  }
}

</mosaic_0001>

<llo_original>
// kernel: double_conv.4
$region0: #{double_conv.4}
  #allocation0 [shape = 'u32[]', space=smem, size = 0x4, offset = 0x4, fixed_abs, tag = 'smem constant byte address 0x4 - core index']
  #allocation1 [shape = 'u32[144,128]{1,0:T(1,128)}', space=vmem, size = 0x12000, scoped, tag = 'internal scratch']
  #allocation2 [shape = 'f32[8,8,36]{2,1,0:T(8,128)}', space=vmem, size = 0x8000, scoped, tag = 'scratch operand']
  #allocation3 [shape = 'f32[64,128]{1,0:T(8,128)}', space=vmem, size = 0x8000, scoped, tag = 'scratch operand']
  %s0 = inlined_call_operand.vmem [shape: bf16[2,10,10,10,4], index: 0, kind: input, shape index: {}]
  %s1 = inlined_call_operand.vmem [shape: bf16[3,36,128], index: 1, kind: input, shape index: {}]
  %s2 = inlined_call_operand.vmem [shape: f32[2,8,64,128], index: 2, kind: output, shape index: {0}]
  %s3 = inlined_call_operand.vmem [shape: f32[2,8,8,128], index: 3, kind: output, shape index: {1}]
  %4 = xla_tuple %s2, %s3
  %s5 = sld [smem:[#allocation0]]
  $region57: #{double_conv.4} parent=0
    _
  %s7 = ssub.s32 1, %s5
  %s8 = scalar_select 0, %s7, %s5
  loop: start=0, step=1, limit=50
  $region2: #{double_conv.4} parent=0 // loop_pre_header
    _
  $region3: #{double_conv.4} parent=0 // loop_header
    %s10 = sphi 0, %s14
    %p11 = scmp.ge.s32.totalorder %s10, 50
    %s17 = sphi 0, %s36
    %s18 = sphi 0, %s32
    %s19 = sphi 0, %s28
    %s20 = sphi 0, %s17
    %s21 = sphi 0, %s18
    %s22 = sphi 0, %s19
    %s23 = sphi 0, %s20
    %s24 = sphi 0, %s21
    %s25 = sphi 0, %s22
    %s43 = sphi 0, %s45
    %s46 = sphi 0, %s43
    %s47 = sphi 0, %s46
    %s63 = sphi 0, %s47
    %s69 = sphi 0, %s71
    %s72 = sphi 0, %s69
    %s73 = sphi 0, %s72
    %s89 = sphi 0, %s73
    %s97 = sphi 0, %s99
    %s100 = sphi 0, %s97
    %s101 = sphi 0, %s100
    %s117 = sphi 0, %s101
    %s125 = sphi 0, %s127
    %s128 = sphi 0, %s125
    %s129 = sphi 0, %s128
    %s145 = sphi 0, %s129
  $region4: #{double_conv.4} parent=0 // loop_header_branch
    %13 = sbr.rel (%p11) target = $region8
  $region5: #{double_conv.4} parent=0 // loop_body
    %s15 = ssub.s32 %s10, 1
    %s16 = ssub.s32 %s10, 2
    %s26 = sadd.s32 1, %s19
    %p27 = scmp.ge.s32.totalorder %s26, 3
    %s28 = scalar_select %p27, 0, %s26
    %s29 = sadd.s32 1, %s18
    %s30 = scalar_select %p27, %s29, %s18
    %p31 = scmp.ge.s32.totalorder %s30, 8
    %s32 = scalar_select %p31, 0, %s30
    %s33 = sadd.s32 1, %s17
    %s34 = scalar_select %p31, %s33, %s17
    %p35 = scmp.ge.s32.totalorder %s34, 2
    %s36 = scalar_select %p35, 0, %s34
    %s37 = sadd.s32 %s18, %s19
    %s38 = sadd.s32 %s32, %s28
    %s39 = ssub.s32 %s17, %s36
    %s40 = ssub.s32 %s37, %s38
    %s41 = sor.u32 %s39, %s40
    %p42 = scmp.eq.s32.totalorder %s41, 0
    %s44 = sadd.s32 %s43, 1
    %s45 = scalar_select %p42, %s43, %s44
    %p48 = pneg %p42
    %p49 = scmp.eq.s32.totalorder %s10, 47
    %p50 = por %p48, %p49
    %p51 = scmp.ne.s32.totalorder %s43, %s46
    %p52 = scmp.eq.s32.totalorder %s10, 0
    %p53 = por %p51, %p52
    %p54 = scmp.ne.s32.totalorder %s43, %s46
    %p55 = scmp.eq.s32.totalorder %s15, 47
    %p56 = por %p54, %p55
    %p57 = scmp.ne.s32.totalorder %s46, %s47
    %p58 = scmp.eq.s32.totalorder %s15, 0
    %p59 = por %p57, %p58
    %p60 = scmp.ne.s32.totalorder %s46, %s47
    %p61 = scmp.eq.s32.totalorder %s16, 47
    %p62 = por %p60, %p61
    %p64 = scmp.ne.s32.totalorder %s47, %s63
    %p65 = scmp.eq.s32.totalorder %s16, 0
    %p66 = por %p64, %p65
    %s67 = ssub.s32 %s19, %s28
    %p68 = scmp.eq.s32.totalorder %s67, 0
    %s70 = sadd.s32 %s69, 1
    %s71 = scalar_select %p68, %s69, %s70
    %p74 = pneg %p68
    %p75 = scmp.eq.s32.totalorder %s10, 47
    %p76 = por %p74, %p75
    %p77 = scmp.ne.s32.totalorder %s69, %s72
    %p78 = scmp.eq.s32.totalorder %s10, 0
    %p79 = por %p77, %p78
    %p80 = scmp.ne.s32.totalorder %s69, %s72
    %p81 = scmp.eq.s32.totalorder %s15, 47
    %p82 = por %p80, %p81
    %p83 = scmp.ne.s32.totalorder %s72, %s73
    %p84 = scmp.eq.s32.totalorder %s15, 0
    %p85 = por %p83, %p84
    %p86 = scmp.ne.s32.totalorder %s72, %s73
    %p87 = scmp.eq.s32.totalorder %s16, 47
    %p88 = por %p86, %p87
    %p90 = scmp.ne.s32.totalorder %s73, %s89
    %p91 = scmp.eq.s32.totalorder %s16, 0
    %p92 = por %p90, %p91
    %s93 = ssub.s32 %s17, %s36
    %s94 = ssub.s32 %s18, %s32
    %s95 = sor.u32 %s93, %s94
    %p96 = scmp.eq.s32.totalorder %s95, 0
    %s98 = sadd.s32 %s97, 1
    %s99 = scalar_select %p96, %s97, %s98
    %p102 = pneg %p96
    %p103 = scmp.eq.s32.totalorder %s10, 47
    %p104 = por %p102, %p103
    %p105 = scmp.ne.s32.totalorder %s97, %s100
    %p106 = scmp.eq.s32.totalorder %s10, 0
    %p107 = por %p105, %p106
    %p108 = scmp.ne.s32.totalorder %s97, %s100
    %p109 = scmp.eq.s32.totalorder %s15, 47
    %p110 = por %p108, %p109
    %p111 = scmp.ne.s32.totalorder %s100, %s101
    %p112 = scmp.eq.s32.totalorder %s15, 0
    %p113 = por %p111, %p112
    %p114 = scmp.ne.s32.totalorder %s100, %s101
    %p115 = scmp.eq.s32.totalorder %s16, 47
    %p116 = por %p114, %p115
    %p118 = scmp.ne.s32.totalorder %s101, %s117
    %p119 = scmp.eq.s32.totalorder %s16, 0
    %p120 = por %p118, %p119
    %s121 = ssub.s32 %s17, %s36
    %s122 = ssub.s32 %s18, %s32
    %s123 = sor.u32 %s121, %s122
    %p124 = scmp.eq.s32.totalorder %s123, 0
    %s126 = sadd.s32 %s125, 1
    %s127 = scalar_select %p124, %s125, %s126
    %p130 = pneg %p124
    %p131 = scmp.eq.s32.totalorder %s10, 47
    %p132 = por %p130, %p131
    %p133 = scmp.ne.s32.totalorder %s125, %s128
    %p134 = scmp.eq.s32.totalorder %s10, 0
    %p135 = por %p133, %p134
    %p136 = scmp.ne.s32.totalorder %s125, %s128
    %p137 = scmp.eq.s32.totalorder %s15, 47
    %p138 = por %p136, %p137
    %p139 = scmp.ne.s32.totalorder %s128, %s129
    %p140 = scmp.eq.s32.totalorder %s15, 0
    %p141 = por %p139, %p140
    %p142 = scmp.ne.s32.totalorder %s128, %s129
    %p143 = scmp.eq.s32.totalorder %s16, 47
    %p144 = por %p142, %p143
    %p146 = scmp.ne.s32.totalorder %s129, %s145
    %p147 = scmp.eq.s32.totalorder %s16, 0
    %p148 = por %p146, %p147
    %p149 = scmp.le.s32.totalorder 1, %s10
    %p150 = scmp.lt.s32.totalorder %s10, 49
    %p151 = pnand %p149, %p150
    %p152 = pneg %p151
    // Predicated region
    $region9: #{double_conv.4} parent=5 // pred_check
      _
    $region10: #{double_conv.4} parent=5 // pred_check_branch
      %154 = sbr.rel (%p151) target = $region12
    $region11: #{double_conv.4} parent=5 // pred_region
      %s155 = ssub.s32 %s10, 1
    $region12: #{double_conv.4} parent=5 // pred_fallthru
      _
    %p156 = scmp.lt.s32.totalorder %s10, 48
    // Predicated region
    $region13: #{double_conv.4} parent=5 // pred_check
      %p157 = pneg %p156
    $region14: #{double_conv.4} parent=5 // pred_check_branch
      %159 = sbr.rel (%p157) target = $region16
    $region15: #{double_conv.4} parent=5 // pred_region
      // Predicated region
      $region17: #{double_conv.4} parent=15 // pred_check
        %p160 = pneg %p53
      $region18: #{double_conv.4} parent=15 // pred_check_branch
        %162 = sbr.rel (%p160) target = $region20
      $region19: #{double_conv.4} parent=15 // pred_region
        %s163 = sadd.s32 %s18, %s19
        %p164 = scmp.lt.s32.totalorder %s17, 1
        %s165 = scalar_select %p164, %s17, 1
        %p166 = scmp.lt.s32.totalorder %s163, 9
        %s167 = scalar_select %p166, %s163, 9
        %s168 = smul.addr %s167, 20
        %s169 = smul.addr %s165, 200
        %s170 = sadd.s32 %s168, %s169
        %s171 = smul.addr %s170, 4
        %s172 = scalar_lea.vmem %s0, %s171
        %s173 = sadd.s32 %s18, %s19
      $region20: #{double_conv.4} parent=15 // pred_fallthru
        _
      // Predicated region
      $region21: #{double_conv.4} parent=15 // pred_check
        %p174 = pneg %p79
      $region22: #{double_conv.4} parent=15 // pred_check_branch
        %176 = sbr.rel (%p174) target = $region24
      $region23: #{double_conv.4} parent=15 // pred_region
        %p177 = scmp.lt.s32.totalorder %s19, 2
        %s178 = scalar_select %p177, %s19, 2
        %s179 = smul.addr %s178, 5
        %s180 = smul.addr %s179, 4
        %s181 = scalar_lea.vmem %s1, %s180
      $region24: #{double_conv.4} parent=15 // pred_fallthru
        _
    $region16: #{double_conv.4} parent=5 // pred_fallthru
      _
    %p182 = scmp.le.s32.totalorder 1, %s10
    %p183 = scmp.lt.s32.totalorder %s10, 49
    %p184 = pnand %p182, %p183
    %p185 = pneg %p184
    // Predicated region
    $region25: #{double_conv.4} parent=5 // pred_check
      _
    $region26: #{double_conv.4} parent=5 // pred_check_branch
      %187 = sbr.rel (%p184) target = $region28
    $region27: #{double_conv.4} parent=5 // pred_region
      %s188 = ssub.s32 %s10, 1
      %s189 = sadd.s32 %s21, %s22
      %p190 = scmp.lt.s32.totalorder %s20, 1
      %s191 = scalar_select %p190, %s20, 1
      %p192 = scmp.lt.s32.totalorder %s189, 9
      %s193 = scalar_select %p192, %s189, 9
      %s194 = smul.addr %s193, 20
      %s195 = smul.addr %s191, 200
      %s196 = sadd.s32 %s194, %s195
      %s197 = smul.addr %s196, 4
      %s198 = scalar_lea.vmem %s0, %s197
      %p199 = pneg %p59
      %p200 = pneg %p56
      %p201 = scmp.lt.s32.totalorder %s22, 2
      %s202 = scalar_select %p201, %s22, 2
      %s203 = smul.addr %s202, 5
      %s204 = smul.addr %s203, 4
      %s205 = scalar_lea.vmem %s1, %s204
      %p206 = pneg %p85
      %p207 = pneg %p82
      %p208 = pneg %p113
      %p209 = pneg %p110
      %p210 = scmp.lt.s32.totalorder %s20, 1
      %s211 = scalar_select %p210, %s20, 1
      %p212 = scmp.lt.s32.totalorder %s21, 7
      %s213 = scalar_select %p212, %s21, 7
      %s214 = smul.addr %s213, 8
      %s215 = smul.addr %s211, 64
      %s216 = sadd.s32 %s214, %s215
      %s217 = smul.addr %s216, 8
      %s218 = scalar_lea.vmem %s2, %s217
      %p219 = pneg %p141
      %p220 = pneg %p138
      %p221 = scmp.lt.s32.totalorder %s20, 1
      %s222 = scalar_select %p221, %s20, 1
      %p223 = scmp.lt.s32.totalorder %s21, 7
      %s224 = scalar_select %p223, %s21, 7
      %s225 = smul.addr %s222, 8
      %s226 = sadd.s32 %s224, %s225
      %s227 = smul.addr %s226, 8
      %s228 = scalar_lea.vmem %s3, %s227
      %s229 = sadd.s32 %s21, %s22
      %p230 = scmp.lt.s32.totalorder %s20, 1
      %s231 = scalar_select %p230, %s20, 1
      %p232 = scmp.lt.s32.totalorder %s229, 9
      %s233 = scalar_select %p232, %s229, 9
      %s234 = smul.addr %s233, 20
      %s235 = smul.addr %s231, 200
      %s236 = sadd.s32 %s234, %s235
      %s237 = smul.addr %s236, 4
      %s238 = scalar_lea.vmem %s0, %s237
      %s239 = sadd.s32 %s21, %s22
      %p240 = scmp.lt.s32.totalorder %s22, 2
      %s241 = scalar_select %p240, %s22, 2
      %s242 = smul.addr %s241, 5
      %s243 = smul.addr %s242, 4
      %s244 = scalar_lea.vmem %s1, %s243
      %p245 = scmp.lt.s32.totalorder %s20, 1
      %s246 = scalar_select %p245, %s20, 1
      %p247 = scmp.lt.s32.totalorder %s21, 7
      %s248 = scalar_select %p247, %s21, 7
      %s249 = smul.addr %s248, 8
      %s250 = smul.addr %s246, 64
      %s251 = sadd.s32 %s249, %s250
      %s252 = smul.addr %s251, 8
      %s253 = scalar_lea.vmem %s2, %s252
      %p254 = scmp.lt.s32.totalorder %s20, 1
      %s255 = scalar_select %p254, %s20, 1
      %p256 = scmp.lt.s32.totalorder %s21, 7
      %s257 = scalar_select %p256, %s21, 7
      %s258 = smul.addr %s255, 8
      %s259 = sadd.s32 %s257, %s258
      %s260 = smul.addr %s259, 8
      %s261 = scalar_lea.vmem %s3, %s260
      %p263 = scmp.eq.s32.totalorder %s22, 0
      // Predicated region
      $region29: #{double_conv.4} parent=27 // pred_check
        %p264 = pneg %p263
      $region30: #{double_conv.4} parent=27 // pred_check_branch
        %266 = sbr.rel (%p264) target = $region32
      $region31: #{double_conv.4} parent=27 // pred_region
        %267 = vst [vmem:[#allocation3] sm:$0xff] 0.0
        %268 = vst [vmem:[#allocation3 + $0x8] sm:$0xff] 0.0
        %269 = vst [vmem:[#allocation3 + $0x10] sm:$0xff] 0.0
        %270 = vst [vmem:[#allocation3 + $0x18] sm:$0xff] 0.0
        %271 = vst [vmem:[#allocation3 + $0x20] sm:$0xff] 0.0
        %272 = vst [vmem:[#allocation3 + $0x28] sm:$0xff] 0.0
        %273 = vst [vmem:[#allocation3 + $0x30] sm:$0xff] 0.0
        %274 = vst [vmem:[#allocation3 + $0x38] sm:$0xff] 0.0
      $region32: #{double_conv.4} parent=27 // pred_fallthru
        _
      %v275 = vld [vmem:[%s238] sm:$0xf]
      %v276 = vld [vmem:[%s238 + $0x4] sm:$0x1]
      %v277 = vld [vmem:[%s238 + $0x8] sm:$0xf]
      %v278 = vld [vmem:[%s238 + $0xc] sm:$0x1]
      %v279 = vld [vmem:[%s238 + $0x10] sm:$0xf]
      %v280 = vld [vmem:[%s238 + $0x14] sm:$0x1]
      %v281 = vld [vmem:[%s238 + $0x18] sm:$0xf]
      %v282 = vld [vmem:[%s238 + $0x1c] sm:$0x1]
      %v283 = vld [vmem:[%s238 + $0x20] sm:$0xf]
      %v284 = vld [vmem:[%s238 + $0x24] sm:$0x1]
      %v285 = vld [vmem:[%s238 + $0x28] sm:$0xf]
      %v286 = vld [vmem:[%s238 + $0x2c] sm:$0x1]
      %v287 = vld [vmem:[%s238 + $0x30] sm:$0xf]
      %v288 = vld [vmem:[%s238 + $0x34] sm:$0x1]
      %v289 = vld [vmem:[%s238 + $0x38] sm:$0xf]
      %v290 = vld [vmem:[%s238 + $0x3c] sm:$0x1]
      %v291 = vld [vmem:[%s238 + $0x40] sm:$0xf]
      %v292 = vld [vmem:[%s238 + $0x44] sm:$0x1]
      %v293 = vld [vmem:[%s238 + $0x48] sm:$0xf]
      %v294 = vld [vmem:[%s238 + $0x4c] sm:$0x1]
      %v295 = vunpack.c.l.bf16 %v275
      %v296 = vunpack.c.l.bf16 %v276
      %v297 = vunpack.c.l.bf16 %v277
      %v298 = vunpack.c.l.bf16 %v278
      %v299 = vunpack.c.l.bf16 %v279
      %v300 = vunpack.c.l.bf16 %v280
      %v301 = vunpack.c.l.bf16 %v281
      %v302 = vunpack.c.l.bf16 %v282
      %v303 = vunpack.c.l.bf16 %v283
      %v304 = vunpack.c.l.bf16 %v284
      %v305 = vunpack.c.l.bf16 %v285
      %v306 = vunpack.c.l.bf16 %v286
      %v307 = vunpack.c.l.bf16 %v287
      %v308 = vunpack.c.l.bf16 %v288
      %v309 = vunpack.c.l.bf16 %v289
      %v310 = vunpack.c.l.bf16 %v290
      %v311 = vunpack.c.l.bf16 %v291
      %v312 = vunpack.c.l.bf16 %v292
      %v313 = vunpack.c.l.bf16 %v293
      %v314 = vunpack.c.l.bf16 %v294
      %vm315 = vcmask 31744
      %316 = vst.msk [vmem:[#allocation2] sm:$0xff] %vm315, %v295
      %317 = vst.msk [vmem:[#allocation2 + $0x8] sm:$0xff] %vm315, %v297
      %318 = vst.msk [vmem:[#allocation2 + $0x10] sm:$0xff] %vm315, %v299
      %319 = vst.msk [vmem:[#allocation2 + $0x18] sm:$0xff] %vm315, %v301
      %320 = vst.msk [vmem:[#allocation2 + $0x20] sm:$0xff] %vm315, %v303
      %321 = vst.msk [vmem:[#allocation2 + $0x28] sm:$0xff] %vm315, %v305
      %322 = vst.msk [vmem:[#allocation2 + $0x30] sm:$0xff] %vm315, %v307
      %323 = vst.msk [vmem:[#allocation2 + $0x38] sm:$0xff] %vm315, %v309
      %340 = vrot.lane.b32.xlu0 %v295, 4
      %v341 = vpop.permute.xlu0 %340
      %342 = vrot.lane.b32.xlu0 %v296, 4
      %v343 = vpop.permute.xlu0 %342
      %344 = vrot.lane.b32.xlu0 %v297, 4
      %v345 = vpop.permute.xlu0 %344
      %346 = vrot.lane.b32.xlu0 %v298, 4
      %v347 = vpop.permute.xlu0 %346
      %348 = vrot.lane.b32.xlu0 %v299, 4
      %v349 = vpop.permute.xlu0 %348
      %350 = vrot.lane.b32.xlu0 %v300, 4
      %v351 = vpop.permute.xlu0 %350
      %352 = vrot.lane.b32.xlu0 %v301, 4
      %v353 = vpop.permute.xlu0 %352
      %354 = vrot.lane.b32.xlu0 %v302, 4
      %v355 = vpop.permute.xlu0 %354
      %356 = vrot.lane.b32.xlu0 %v303, 4
      %v357 = vpop.permute.xlu0 %356
      %358 = vrot.lane.b32.xlu0 %v304, 4
      %v359 = vpop.permute.xlu0 %358
      %360 = vrot.lane.b32.xlu0 %v305, 4
      %v361 = vpop.permute.xlu0 %360
      %362 = vrot.lane.b32.xlu0 %v306, 4
      %v363 = vpop.permute.xlu0 %362
      %364 = vrot.lane.b32.xlu0 %v307, 4
      %v365 = vpop.permute.xlu0 %364
      %366 = vrot.lane.b32.xlu0 %v308, 4
      %v367 = vpop.permute.xlu0 %366
      %368 = vrot.lane.b32.xlu0 %v309, 4
      %v369 = vpop.permute.xlu0 %368
      %370 = vrot.lane.b32.xlu0 %v310, 4
      %v371 = vpop.permute.xlu0 %370
      %vm388 = vcmask 64545
      %389 = vst.msk [vmem:[#allocation2 - $0x1] sm:$0xfe] %vm388, %v341
      %vm390 = vcmask 57376
      %391 = vst.msk [vmem:[#allocation2 + $0x7] sm:$0x1] %vm390, %v343
      %392 = vst.msk [vmem:[#allocation2 + $0x7] sm:$0xfe] %vm388, %v345
      %393 = vst.msk [vmem:[#allocation2 + $0xf] sm:$0x1] %vm390, %v347
      %394 = vst.msk [vmem:[#allocation2 + $0xf] sm:$0xfe] %vm388, %v349
      %395 = vst.msk [vmem:[#allocation2 + $0x17] sm:$0x1] %vm390, %v351
      %396 = vst.msk [vmem:[#allocation2 + $0x17] sm:$0xfe] %vm388, %v353
      %397 = vst.msk [vmem:[#allocation2 + $0x1f] sm:$0x1] %vm390, %v355
      %398 = vst.msk [vmem:[#allocation2 + $0x1f] sm:$0xfe] %vm388, %v357
      %399 = vst.msk [vmem:[#allocation2 + $0x27] sm:$0x1] %vm390, %v359
      %400 = vst.msk [vmem:[#allocation2 + $0x27] sm:$0xfe] %vm388, %v361
      %401 = vst.msk [vmem:[#allocation2 + $0x2f] sm:$0x1] %vm390, %v363
      %402 = vst.msk [vmem:[#allocation2 + $0x2f] sm:$0xfe] %vm388, %v365
      %403 = vst.msk [vmem:[#allocation2 + $0x37] sm:$0x1] %vm390, %v367
      %404 = vst.msk [vmem:[#allocation2 + $0x37] sm:$0xfe] %vm388, %v369
      %405 = vst.msk [vmem:[#allocation2 + $0x3f] sm:$0x1] %vm390, %v371
      %406 = vrot.lane.b32.xlu0 %v295, 8
      %v407 = vpop.permute.xlu0 %406
      %408 = vrot.lane.b32.xlu0 %v296, 8
      %v409 = vpop.permute.xlu0 %408
      %410 = vrot.lane.b32.xlu0 %v297, 8
      %v411 = vpop.permute.xlu0 %410
      %412 = vrot.lane.b32.xlu0 %v298, 8
      %v413 = vpop.permute.xlu0 %412
      %414 = vrot.lane.b32.xlu0 %v299, 8
      %v415 = vpop.permute.xlu0 %414
      %416 = vrot.lane.b32.xlu0 %v300, 8
      %v417 = vpop.permute.xlu0 %416
      %418 = vrot.lane.b32.xlu0 %v301, 8
      %v419 = vpop.permute.xlu0 %418
      %420 = vrot.lane.b32.xlu0 %v302, 8
      %v421 = vpop.permute.xlu0 %420
      %422 = vrot.lane.b32.xlu0 %v303, 8
      %v423 = vpop.permute.xlu0 %422
      %424 = vrot.lane.b32.xlu0 %v304, 8
      %v425 = vpop.permute.xlu0 %424
      %426 = vrot.lane.b32.xlu0 %v305, 8
      %v427 = vpop.permute.xlu0 %426
      %428 = vrot.lane.b32.xlu0 %v306, 8
      %v429 = vpop.permute.xlu0 %428
      %430 = vrot.lane.b32.xlu0 %v307, 8
      %v431 = vpop.permute.xlu0 %430
      %432 = vrot.lane.b32.xlu0 %v308, 8
      %v433 = vpop.permute.xlu0 %432
      %434 = vrot.lane.b32.xlu0 %v309, 8
      %v435 = vpop.permute.xlu0 %434
      %436 = vrot.lane.b32.xlu0 %v310, 8
      %v437 = vpop.permute.xlu0 %436
      %vm454 = vcmask 97346
      %455 = vst.msk [vmem:[#allocation2 - $0x2] sm:$0xfc] %vm454, %v407
      %vm456 = vcmask 91200
      %457 = vst.msk [vmem:[#allocation2 + $0x6] sm:$0x3] %vm456, %v409
      %458 = vst.msk [vmem:[#allocation2 + $0x6] sm:$0xfc] %vm454, %v411
      %459 = vst.msk [vmem:[#allocation2 + $0xe] sm:$0x3] %vm456, %v413
      %460 = vst.msk [vmem:[#allocation2 + $0xe] sm:$0xfc] %vm454, %v415
      %461 = vst.msk [vmem:[#allocation2 + $0x16] sm:$0x3] %vm456, %v417
      %462 = vst.msk [vmem:[#allocation2 + $0x16] sm:$0xfc] %vm454, %v419
      %463 = vst.msk [vmem:[#allocation2 + $0x1e] sm:$0x3] %vm456, %v421
      %464 = vst.msk [vmem:[#allocation2 + $0x1e] sm:$0xfc] %vm454, %v423
      %465 = vst.msk [vmem:[#allocation2 + $0x26] sm:$0x3] %vm456, %v425
      %466 = vst.msk [vmem:[#allocation2 + $0x26] sm:$0xfc] %vm454, %v427
      %467 = vst.msk [vmem:[#allocation2 + $0x2e] sm:$0x3] %vm456, %v429
      %468 = vst.msk [vmem:[#allocation2 + $0x2e] sm:$0xfc] %vm454, %v431
      %469 = vst.msk [vmem:[#allocation2 + $0x36] sm:$0x3] %vm456, %v433
      %470 = vst.msk [vmem:[#allocation2 + $0x36] sm:$0xfc] %vm454, %v435
      %471 = vst.msk [vmem:[#allocation2 + $0x3e] sm:$0x3] %vm456, %v437
      %473 = vrot.lane.b32.xlu0 %v297, 12
      %v474 = vpop.permute.xlu0 %473
      %475 = vrot.lane.b32.xlu0 %v299, 12
      %v476 = vpop.permute.xlu0 %475
      %477 = vrot.lane.b32.xlu0 %v301, 12
      %v478 = vpop.permute.xlu0 %477
      %479 = vrot.lane.b32.xlu0 %v303, 12
      %v480 = vpop.permute.xlu0 %479
      %481 = vrot.lane.b32.xlu0 %v305, 12
      %v482 = vpop.permute.xlu0 %481
      %483 = vrot.lane.b32.xlu0 %v307, 12
      %v484 = vpop.permute.xlu0 %483
      %485 = vrot.lane.b32.xlu0 %v309, 12
      %v486 = vpop.permute.xlu0 %485
      %487 = vrot.lane.b32.xlu0 %v311, 12
      %v488 = vpop.permute.xlu0 %487
      %vm497 = vcmask 130144
      %498 = vst.msk [vmem:[#allocation2] sm:$0xff] %vm497, %v474
      %499 = vst.msk [vmem:[#allocation2 + $0x8] sm:$0xff] %vm497, %v476
      %500 = vst.msk [vmem:[#allocation2 + $0x10] sm:$0xff] %vm497, %v478
      %501 = vst.msk [vmem:[#allocation2 + $0x18] sm:$0xff] %vm497, %v480
      %502 = vst.msk [vmem:[#allocation2 + $0x20] sm:$0xff] %vm497, %v482
      %503 = vst.msk [vmem:[#allocation2 + $0x28] sm:$0xff] %vm497, %v484
      %504 = vst.msk [vmem:[#allocation2 + $0x30] sm:$0xff] %vm497, %v486
      %505 = vst.msk [vmem:[#allocation2 + $0x38] sm:$0xff] %vm497, %v488
      %507 = vrot.lane.b32.xlu0 %v297, 16
      %v508 = vpop.permute.xlu0 %507
      %509 = vrot.lane.b32.xlu0 %v298, 16
      %v510 = vpop.permute.xlu0 %509
      %511 = vrot.lane.b32.xlu0 %v299, 16
      %v512 = vpop.permute.xlu0 %511
      %513 = vrot.lane.b32.xlu0 %v300, 16
      %v514 = vpop.permute.xlu0 %513
      %515 = vrot.lane.b32.xlu0 %v301, 16
      %v516 = vpop.permute.xlu0 %515
      %517 = vrot.lane.b32.xlu0 %v302, 16
      %v518 = vpop.permute.xlu0 %517
      %519 = vrot.lane.b32.xlu0 %v303, 16
      %v520 = vpop.permute.xlu0 %519
      %521 = vrot.lane.b32.xlu0 %v304, 16
      %v522 = vpop.permute.xlu0 %521
      %523 = vrot.lane.b32.xlu0 %v305, 16
      %v524 = vpop.permute.xlu0 %523
      %525 = vrot.lane.b32.xlu0 %v306, 16
      %v526 = vpop.permute.xlu0 %525
      %527 = vrot.lane.b32.xlu0 %v307, 16
      %v528 = vpop.permute.xlu0 %527
      %529 = vrot.lane.b32.xlu0 %v308, 16
      %v530 = vpop.permute.xlu0 %529
      %531 = vrot.lane.b32.xlu0 %v309, 16
      %v532 = vpop.permute.xlu0 %531
      %533 = vrot.lane.b32.xlu0 %v310, 16
      %v534 = vpop.permute.xlu0 %533
      %535 = vrot.lane.b32.xlu0 %v311, 16
      %v536 = vpop.permute.xlu0 %535
      %537 = vrot.lane.b32.xlu0 %v312, 16
      %v538 = vpop.permute.xlu0 %537
      %vm555 = vcmask 162945
      %556 = vst.msk [vmem:[#allocation2 - $0x1] sm:$0xfe] %vm555, %v508
      %vm557 = vcmask 155776
      %558 = vst.msk [vmem:[#allocation2 + $0x7] sm:$0x1] %vm557, %v510
      %559 = vst.msk [vmem:[#allocation2 + $0x7] sm:$0xfe] %vm555, %v512
      %560 = vst.msk [vmem:[#allocation2 + $0xf] sm:$0x1] %vm557, %v514
      %561 = vst.msk [vmem:[#allocation2 + $0xf] sm:$0xfe] %vm555, %v516
      %562 = vst.msk [vmem:[#allocation2 + $0x17] sm:$0x1] %vm557, %v518
      %563 = vst.msk [vmem:[#allocation2 + $0x17] sm:$0xfe] %vm555, %v520
      %564 = vst.msk [vmem:[#allocation2 + $0x1f] sm:$0x1] %vm557, %v522
      %565 = vst.msk [vmem:[#allocation2 + $0x1f] sm:$0xfe] %vm555, %v524
      %566 = vst.msk [vmem:[#allocation2 + $0x27] sm:$0x1] %vm557, %v526
      %567 = vst.msk [vmem:[#allocation2 + $0x27] sm:$0xfe] %vm555, %v528
      %568 = vst.msk [vmem:[#allocation2 + $0x2f] sm:$0x1] %vm557, %v530
      %569 = vst.msk [vmem:[#allocation2 + $0x2f] sm:$0xfe] %vm555, %v532
      %570 = vst.msk [vmem:[#allocation2 + $0x37] sm:$0x1] %vm557, %v534
      %571 = vst.msk [vmem:[#allocation2 + $0x37] sm:$0xfe] %vm555, %v536
      %572 = vst.msk [vmem:[#allocation2 + $0x3f] sm:$0x1] %vm557, %v538
      %573 = vrot.lane.b32.xlu0 %v297, 20
      %v574 = vpop.permute.xlu0 %573
      %575 = vrot.lane.b32.xlu0 %v298, 20
      %v576 = vpop.permute.xlu0 %575
      %577 = vrot.lane.b32.xlu0 %v299, 20
      %v578 = vpop.permute.xlu0 %577
      %579 = vrot.lane.b32.xlu0 %v300, 20
      %v580 = vpop.permute.xlu0 %579
      %581 = vrot.lane.b32.xlu0 %v301, 20
      %v582 = vpop.permute.xlu0 %581
      %583 = vrot.lane.b32.xlu0 %v302, 20
      %v584 = vpop.permute.xlu0 %583
      %585 = vrot.lane.b32.xlu0 %v303, 20
      %v586 = vpop.permute.xlu0 %585
      %587 = vrot.lane.b32.xlu0 %v304, 20
      %v588 = vpop.permute.xlu0 %587
      %589 = vrot.lane.b32.xlu0 %v305, 20
      %v590 = vpop.permute.xlu0 %589
      %591 = vrot.lane.b32.xlu0 %v306, 20
      %v592 = vpop.permute.xlu0 %591
      %593 = vrot.lane.b32.xlu0 %v307, 20
      %v594 = vpop.permute.xlu0 %593
      %595 = vrot.lane.b32.xlu0 %v308, 20
      %v596 = vpop.permute.xlu0 %595
      %597 = vrot.lane.b32.xlu0 %v309, 20
      %v598 = vpop.permute.xlu0 %597
      %599 = vrot.lane.b32.xlu0 %v310, 20
      %v600 = vpop.permute.xlu0 %599
      %601 = vrot.lane.b32.xlu0 %v311, 20
      %v602 = vpop.permute.xlu0 %601
      %603 = vrot.lane.b32.xlu0 %v312, 20
      %v604 = vpop.permute.xlu0 %603
      %vm621 = vcmask 195746
      %622 = vst.msk [vmem:[#allocation2 - $0x2] sm:$0xfc] %vm621, %v574
      %vm623 = vcmask 189600
      %624 = vst.msk [vmem:[#allocation2 + $0x6] sm:$0x3] %vm623, %v576
      %625 = vst.msk [vmem:[#allocation2 + $0x6] sm:$0xfc] %vm621, %v578
      %626 = vst.msk [vmem:[#allocation2 + $0xe] sm:$0x3] %vm623, %v580
      %627 = vst.msk [vmem:[#allocation2 + $0xe] sm:$0xfc] %vm621, %v582
      %628 = vst.msk [vmem:[#allocation2 + $0x16] sm:$0x3] %vm623, %v584
      %629 = vst.msk [vmem:[#allocation2 + $0x16] sm:$0xfc] %vm621, %v586
      %630 = vst.msk [vmem:[#allocation2 + $0x1e] sm:$0x3] %vm623, %v588
      %631 = vst.msk [vmem:[#allocation2 + $0x1e] sm:$0xfc] %vm621, %v590
      %632 = vst.msk [vmem:[#allocation2 + $0x26] sm:$0x3] %vm623, %v592
      %633 = vst.msk [vmem:[#allocation2 + $0x26] sm:$0xfc] %vm621, %v594
      %634 = vst.msk [vmem:[#allocation2 + $0x2e] sm:$0x3] %vm623, %v596
      %635 = vst.msk [vmem:[#allocation2 + $0x2e] sm:$0xfc] %vm621, %v598
      %636 = vst.msk [vmem:[#allocation2 + $0x36] sm:$0x3] %vm623, %v600
      %637 = vst.msk [vmem:[#allocation2 + $0x36] sm:$0xfc] %vm621, %v602
      %638 = vst.msk [vmem:[#allocation2 + $0x3e] sm:$0x3] %vm623, %v604
      %640 = vrot.lane.b32.xlu0 %v299, 24
      %v641 = vpop.permute.xlu0 %640
      %642 = vrot.lane.b32.xlu0 %v301, 24
      %v643 = vpop.permute.xlu0 %642
      %644 = vrot.lane.b32.xlu0 %v303, 24
      %v645 = vpop.permute.xlu0 %644
      %646 = vrot.lane.b32.xlu0 %v305, 24
      %v647 = vpop.permute.xlu0 %646
      %648 = vrot.lane.b32.xlu0 %v307, 24
      %v649 = vpop.permute.xlu0 %648
      %650 = vrot.lane.b32.xlu0 %v309, 24
      %v651 = vpop.permute.xlu0 %650
      %652 = vrot.lane.b32.xlu0 %v311, 24
      %v653 = vpop.permute.xlu0 %652
      %654 = vrot.lane.b32.xlu0 %v313, 24
      %v655 = vpop.permute.xlu0 %654
      %vm664 = vcmask 228544
      %665 = vst.msk [vmem:[#allocation2] sm:$0xff] %vm664, %v641
      %666 = vst.msk [vmem:[#allocation2 + $0x8] sm:$0xff] %vm664, %v643
      %667 = vst.msk [vmem:[#allocation2 + $0x10] sm:$0xff] %vm664, %v645
      %668 = vst.msk [vmem:[#allocation2 + $0x18] sm:$0xff] %vm664, %v647
      %669 = vst.msk [vmem:[#allocation2 + $0x20] sm:$0xff] %vm664, %v649
      %670 = vst.msk [vmem:[#allocation2 + $0x28] sm:$0xff] %vm664, %v651
      %671 = vst.msk [vmem:[#allocation2 + $0x30] sm:$0xff] %vm664, %v653
      %672 = vst.msk [vmem:[#allocation2 + $0x38] sm:$0xff] %vm664, %v655
      %674 = vrot.lane.b32.xlu0 %v299, 28
      %v675 = vpop.permute.xlu0 %674
      %676 = vrot.lane.b32.xlu0 %v300, 28
      %v677 = vpop.permute.xlu0 %676
      %678 = vrot.lane.b32.xlu0 %v301, 28
      %v679 = vpop.permute.xlu0 %678
      %680 = vrot.lane.b32.xlu0 %v302, 28
      %v681 = vpop.permute.xlu0 %680
      %682 = vrot.lane.b32.xlu0 %v303, 28
      %v683 = vpop.permute.xlu0 %682
      %684 = vrot.lane.b32.xlu0 %v304, 28
      %v685 = vpop.permute.xlu0 %684
      %686 = vrot.lane.b32.xlu0 %v305, 28
      %v687 = vpop.permute.xlu0 %686
      %688 = vrot.lane.b32.xlu0 %v306, 28
      %v689 = vpop.permute.xlu0 %688
      %690 = vrot.lane.b32.xlu0 %v307, 28
      %v691 = vpop.permute.xlu0 %690
      %692 = vrot.lane.b32.xlu0 %v308, 28
      %v693 = vpop.permute.xlu0 %692
      %694 = vrot.lane.b32.xlu0 %v309, 28
      %v695 = vpop.permute.xlu0 %694
      %696 = vrot.lane.b32.xlu0 %v310, 28
      %v697 = vpop.permute.xlu0 %696
      %698 = vrot.lane.b32.xlu0 %v311, 28
      %v699 = vpop.permute.xlu0 %698
      %700 = vrot.lane.b32.xlu0 %v312, 28
      %v701 = vpop.permute.xlu0 %700
      %702 = vrot.lane.b32.xlu0 %v313, 28
      %v703 = vpop.permute.xlu0 %702
      %704 = vrot.lane.b32.xlu0 %v314, 28
      %v705 = vpop.permute.xlu0 %704
      %vm722 = vcmask 261345
      %723 = vst.msk [vmem:[#allocation2 - $0x1] sm:$0xfe] %vm722, %v675
      %vm724 = vcmask 254176
      %725 = vst.msk [vmem:[#allocation2 + $0x7] sm:$0x1] %vm724, %v677
      %726 = vst.msk [vmem:[#allocation2 + $0x7] sm:$0xfe] %vm722, %v679
      %727 = vst.msk [vmem:[#allocation2 + $0xf] sm:$0x1] %vm724, %v681
      %728 = vst.msk [vmem:[#allocation2 + $0xf] sm:$0xfe] %vm722, %v683
      %729 = vst.msk [vmem:[#allocation2 + $0x17] sm:$0x1] %vm724, %v685
      %730 = vst.msk [vmem:[#allocation2 + $0x17] sm:$0xfe] %vm722, %v687
      %731 = vst.msk [vmem:[#allocation2 + $0x1f] sm:$0x1] %vm724, %v689
      %732 = vst.msk [vmem:[#allocation2 + $0x1f] sm:$0xfe] %vm722, %v691
      %733 = vst.msk [vmem:[#allocation2 + $0x27] sm:$0x1] %vm724, %v693
      %734 = vst.msk [vmem:[#allocation2 + $0x27] sm:$0xfe] %vm722, %v695
      %735 = vst.msk [vmem:[#allocation2 + $0x2f] sm:$0x1] %vm724, %v697
      %736 = vst.msk [vmem:[#allocation2 + $0x2f] sm:$0xfe] %vm722, %v699
      %737 = vst.msk [vmem:[#allocation2 + $0x37] sm:$0x1] %vm724, %v701
      %738 = vst.msk [vmem:[#allocation2 + $0x37] sm:$0xfe] %vm722, %v703
      %739 = vst.msk [vmem:[#allocation2 + $0x3f] sm:$0x1] %vm724, %v705
      %740 = vrot.lane.b32.xlu0 %v299, 32
      %v741 = vpop.permute.xlu0 %740
      %742 = vrot.lane.b32.xlu0 %v300, 32
      %v743 = vpop.permute.xlu0 %742
      %744 = vrot.lane.b32.xlu0 %v301, 32
      %v745 = vpop.permute.xlu0 %744
      %746 = vrot.lane.b32.xlu0 %v302, 32
      %v747 = vpop.permute.xlu0 %746
      %748 = vrot.lane.b32.xlu0 %v303, 32
      %v749 = vpop.permute.xlu0 %748
      %750 = vrot.lane.b32.xlu0 %v304, 32
      %v751 = vpop.permute.xlu0 %750
      %752 = vrot.lane.b32.xlu0 %v305, 32
      %v753 = vpop.permute.xlu0 %752
      %754 = vrot.lane.b32.xlu0 %v306, 32
      %v755 = vpop.permute.xlu0 %754
      %756 = vrot.lane.b32.xlu0 %v307, 32
      %v757 = vpop.permute.xlu0 %756
      %758 = vrot.lane.b32.xlu0 %v308, 32
      %v759 = vpop.permute.xlu0 %758
      %760 = vrot.lane.b32.xlu0 %v309, 32
      %v761 = vpop.permute.xlu0 %760
      %762 = vrot.lane.b32.xlu0 %v310, 32
      %v763 = vpop.permute.xlu0 %762
      %764 = vrot.lane.b32.xlu0 %v311, 32
      %v765 = vpop.permute.xlu0 %764
      %766 = vrot.lane.b32.xlu0 %v312, 32
      %v767 = vpop.permute.xlu0 %766
      %768 = vrot.lane.b32.xlu0 %v313, 32
      %v769 = vpop.permute.xlu0 %768
      %770 = vrot.lane.b32.xlu0 %v314, 32
      %v771 = vpop.permute.xlu0 %770
      %vm788 = vcmask 294146
      %789 = vst.msk [vmem:[#allocation2 - $0x2] sm:$0xfc] %vm788, %v741
      %vm790 = vcmask 288000
      %791 = vst.msk [vmem:[#allocation2 + $0x6] sm:$0x3] %vm790, %v743
      %792 = vst.msk [vmem:[#allocation2 + $0x6] sm:$0xfc] %vm788, %v745
      %793 = vst.msk [vmem:[#allocation2 + $0xe] sm:$0x3] %vm790, %v747
      %794 = vst.msk [vmem:[#allocation2 + $0xe] sm:$0xfc] %vm788, %v749
      %795 = vst.msk [vmem:[#allocation2 + $0x16] sm:$0x3] %vm790, %v751
      %796 = vst.msk [vmem:[#allocation2 + $0x16] sm:$0xfc] %vm788, %v753
      %797 = vst.msk [vmem:[#allocation2 + $0x1e] sm:$0x3] %vm790, %v755
      %798 = vst.msk [vmem:[#allocation2 + $0x1e] sm:$0xfc] %vm788, %v757
      %799 = vst.msk [vmem:[#allocation2 + $0x26] sm:$0x3] %vm790, %v759
      %800 = vst.msk [vmem:[#allocation2 + $0x26] sm:$0xfc] %vm788, %v761
      %801 = vst.msk [vmem:[#allocation2 + $0x2e] sm:$0x3] %vm790, %v763
      %802 = vst.msk [vmem:[#allocation2 + $0x2e] sm:$0xfc] %vm788, %v765
      %803 = vst.msk [vmem:[#allocation2 + $0x36] sm:$0x3] %vm790, %v767
      %804 = vst.msk [vmem:[#allocation2 + $0x36] sm:$0xfc] %vm788, %v769
      %805 = vst.msk [vmem:[#allocation2 + $0x3e] sm:$0x3] %vm790, %v771
      %v806 = vld [vmem:[#allocation2] sm:$0xff]
      %v807 = vld [vmem:[#allocation2 + $0x8] sm:$0xff]
      %v808 = vld [vmem:[#allocation2 + $0x10] sm:$0xff]
      %v809 = vld [vmem:[#allocation2 + $0x18] sm:$0xff]
      %v810 = vld [vmem:[#allocation2 + $0x20] sm:$0xff]
      %v811 = vld [vmem:[#allocation2 + $0x28] sm:$0xff]
      %v812 = vld [vmem:[#allocation2 + $0x30] sm:$0xff]
      %v813 = vld [vmem:[#allocation2 + $0x38] sm:$0xff]
      %v814 = vpack.c.bf16 %v807, %v806
      %v815 = vpack.c.bf16 %v809, %v808
      %v816 = vpack.c.bf16 %v811, %v810
      %v817 = vpack.c.bf16 %v813, %v812
      %v818 = vld [vmem:[#allocation3] sm:$0xff]
      %v819 = vld [vmem:[#allocation3 + $0x8] sm:$0xff]
      %v820 = vld [vmem:[#allocation3 + $0x10] sm:$0xff]
      %v821 = vld [vmem:[#allocation3 + $0x18] sm:$0xff]
      %v822 = vld [vmem:[#allocation3 + $0x20] sm:$0xff]
      %v823 = vld [vmem:[#allocation3 + $0x28] sm:$0xff]
      %v824 = vld [vmem:[#allocation3 + $0x30] sm:$0xff]
      %v825 = vld [vmem:[#allocation3 + $0x38] sm:$0xff]
      %v826 = vld [vmem:[%s244] sm:$0xf]
      %v827 = vld [vmem:[%s244 + $0x4] sm:$0xf]
      %v828 = vld [vmem:[%s244 + $0x8] sm:$0xf]
      %v829 = vld [vmem:[%s244 + $0xc] sm:$0xf]
      %v830 = vld [vmem:[%s244 + $0x10] sm:$0x3]
      %v836 = vunpack.c.l.b16 %v826
      %v837 = vunpack.c.l.b16 %v827
      %v838 = vunpack.c.l.b16 %v828
      %v839 = vunpack.c.l.b16 %v829
      %v840 = vunpack.c.l.b16 %v830
      %v841 = vpack.c.b16 %v837, %v836
      %v842 = vpack.c.b16 %v839, %v838
      %v843 = vpack.c.b16 %v840, %v840
      %vm846 = vcmask 293888
      %v848 = vsel %vm846, %v814, 0
      %v851 = vsel %vm846, %v815, 0
      %v854 = vsel %vm846, %v816, 0
      %v857 = vsel %vm846, %v817, 0
      %vm859 = vcmask 1041408
      %v861 = vsel %vm859, %v843, 0
      %863 = vmatprep.subr.bf16.mxu0 0
      %864 = vmatpush1.bf16.msra.mxu0 %v841
      %865 = vmatprep.subr.bf16.mxu0 0
      %866 = vmatpush1.bf16.msra.mxu0 %v842
      %867 = vmatprep.subr.bf16.mxu0 0
      %868 = vmatpush1.bf16.msra.mxu0 %v861
      %869 = vmatprep.subr.bf16.mxu0 0
      %870 = vmatpush1.bf16.msra.mxu0 0
      %871 = vmatprep.subr.bf16.mxu0 0
      %872 = vmatpush1.bf16.msra.mxu0 0
      %873 = vmatprep.subr.bf16.mxu0 0
      %874 = vmatpush1.bf16.msra.mxu0 0
      %875 = vmatprep.subr.bf16.mxu0 0
      %876 = vmatpush1.bf16.msra.mxu0 0
      %877 = vmatprep.subr.bf16.mxu0 0
      %878 = vmatpush1.bf16.msra.mxu0 0
      %879 = vmatprep.subr.bf16.mxu0 0
      %880 = vmatpush1.bf16.msra.mxu0 0
      %881 = vmatprep.subr.bf16.mxu0 0
      %882 = vmatpush1.bf16.msra.mxu0 0
      %883 = vmatprep.subr.bf16.mxu0 0
      %884 = vmatpush1.bf16.msra.mxu0 0
      %885 = vmatprep.subr.bf16.mxu0 0
      %886 = vmatpush1.bf16.msra.mxu0 0
      %887 = vmatprep.subr.bf16.mxu0 0
      %888 = vmatpush1.bf16.msra.mxu0 0
      %889 = vmatprep.subr.bf16.mxu0 0
      %890 = vmatpush1.bf16.msra.mxu0 0
      %891 = vmatprep.subr.bf16.mxu0 0
      %892 = vmatpush1.bf16.msra.mxu0 0
      %893 = vmatprep.subr.bf16.mxu0 0
      %894 = vmatpush1.bf16.msra.mxu0 0
      %895 = vmatprep.mubr.bf16.mxu0 0
      %896 = vmatmul.mubr.bf16.gmra.mrb[0].mxu0 %v848
      %v897 = vpop.f32.mrb[0].mxu0
      %v898 = vadd.f32 0.0, %v897
      %v899 = vpop.f32.mrb[0].mxu0
      %v900 = vpop.f32.mrb[0].mxu0
      %v901 = vadd.f32 0.0, %v900
      %v902 = vpop.f32.mrb[0].mxu0
      %903 = vmatprep.mubr.bf16.mxu0 0
      %904 = vmatmul.mubr.bf16.gmra.mrb[0].mxu0 %v851
      %v905 = vpop.f32.mrb[0].mxu0
      %v906 = vadd.f32 0.0, %v905
      %v907 = vpop.f32.mrb[0].mxu0
      %v908 = vpop.f32.mrb[0].mxu0
      %v909 = vadd.f32 0.0, %v908
      %v910 = vpop.f32.mrb[0].mxu0
      %911 = vmatprep.mubr.bf16.mxu0 0
      %912 = vmatmul.mubr.bf16.gmra.mrb[0].mxu0 %v854
      %v913 = vpop.f32.mrb[0].mxu0
      %v914 = vadd.f32 0.0, %v913
      %v915 = vpop.f32.mrb[0].mxu0
      %v916 = vpop.f32.mrb[0].mxu0
      %v917 = vadd.f32 0.0, %v916
      %v918 = vpop.f32.mrb[0].mxu0
      %919 = vmatprep.mubr.bf16.mxu0 0
      %920 = vmatmul.mubr.bf16.gmra.mrb[0].mxu0 %v857
      %v921 = vpop.f32.mrb[0].mxu0
      %v922 = vadd.f32 0.0, %v921
      %v923 = vpop.f32.mrb[0].mxu0
      %v924 = vpop.f32.mrb[0].mxu0
      %v925 = vadd.f32 0.0, %v924
      %v926 = vpop.f32.mrb[0].mxu0
      %927 = vdwg.mxu0
      %v928 = vadd.f32 %v818, %v898
      %v929 = vadd.f32 %v819, %v901
      %v930 = vadd.f32 %v820, %v906
      %v931 = vadd.f32 %v821, %v909
      %v932 = vadd.f32 %v822, %v914
      %v933 = vadd.f32 %v823, %v917
      %v934 = vadd.f32 %v824, %v922
      %v935 = vadd.f32 %v825, %v925
      %936 = vst [vmem:[#allocation3] sm:$0xff] %v928
      %937 = vst [vmem:[#allocation3 + $0x8] sm:$0xff] %v929
      %938 = vst [vmem:[#allocation3 + $0x10] sm:$0xff] %v930
      %939 = vst [vmem:[#allocation3 + $0x18] sm:$0xff] %v931
      %940 = vst [vmem:[#allocation3 + $0x20] sm:$0xff] %v932
      %941 = vst [vmem:[#allocation3 + $0x28] sm:$0xff] %v933
      %942 = vst [vmem:[#allocation3 + $0x30] sm:$0xff] %v934
      %943 = vst [vmem:[#allocation3 + $0x38] sm:$0xff] %v935
      %p944 = scmp.eq.s32.totalorder %s22, 2
      // Predicated region
      $region33: #{double_conv.4} parent=27 // pred_check
        %p945 = pneg %p944
      $region34: #{double_conv.4} parent=27 // pred_check_branch
        %947 = sbr.rel (%p945) target = $region36
      $region35: #{double_conv.4} parent=27 // pred_region
        %v948 = vld [vmem:[#allocation3] sm:$0xff]
        %v949 = vld [vmem:[#allocation3 + $0x8] sm:$0xff]
        %v950 = vld [vmem:[#allocation3 + $0x10] sm:$0xff]
        %v951 = vld [vmem:[#allocation3 + $0x18] sm:$0xff]
        %v952 = vld [vmem:[#allocation3 + $0x20] sm:$0xff]
        %v953 = vld [vmem:[#allocation3 + $0x28] sm:$0xff]
        %v954 = vld [vmem:[#allocation3 + $0x30] sm:$0xff]
        %v955 = vld [vmem:[#allocation3 + $0x38] sm:$0xff]
        %956 = vst [vmem:[%s253] sm:$0xff] %v948
        %957 = vst [vmem:[%s253 + $0x8] sm:$0xff] %v949
        %958 = vst [vmem:[%s253 + $0x10] sm:$0xff] %v950
        %959 = vst [vmem:[%s253 + $0x18] sm:$0xff] %v951
        %960 = vst [vmem:[%s253 + $0x20] sm:$0xff] %v952
        %961 = vst [vmem:[%s253 + $0x28] sm:$0xff] %v953
        %962 = vst [vmem:[%s253 + $0x30] sm:$0xff] %v954
        %963 = vst [vmem:[%s253 + $0x38] sm:$0xff] %v955
        %964 = vst [vmem:[%s261] sm:$0xff] 0.0
        %v965 = vadd.f32 %v948, %v949
        %v966 = vadd.f32 %v965, %v950
        %v967 = vadd.f32 %v966, %v951
        %v968 = vadd.f32 %v967, %v952
        %v969 = vadd.f32 %v968, %v953
        %v970 = vadd.f32 %v969, %v954
        %v971 = vadd.f32 %v970, %v955
        %v972 = vrot.slane %v971, 4
        %v973 = vadd.f32 %v971, %v972
        %v974 = vrot.slane %v973, 2
        %v975 = vadd.f32 %v973, %v974
        %v976 = vrot.slane %v975, 1
        %v977 = vadd.f32 %v975, %v976
        %978 = vst [vmem:[%s261] sm:$0x1] %v977
        %v979 = vmul.f32 %v948, %v948
        %v980 = vmul.f32 %v949, %v949
        %v981 = vmul.f32 %v950, %v950
        %v982 = vmul.f32 %v951, %v951
        %v983 = vmul.f32 %v952, %v952
        %v984 = vmul.f32 %v953, %v953
        %v985 = vmul.f32 %v954, %v954
        %v986 = vmul.f32 %v955, %v955
        %v987 = vadd.f32 %v979, %v980
        %v988 = vadd.f32 %v987, %v981
        %v989 = vadd.f32 %v988, %v982
        %v990 = vadd.f32 %v989, %v983
        %v991 = vadd.f32 %v990, %v984
        %v992 = vadd.f32 %v991, %v985
        %v993 = vadd.f32 %v992, %v986
        %v994 = vrot.slane %v993, 4
        %v995 = vadd.f32 %v993, %v994
        %v996 = vrot.slane %v995, 2
        %v997 = vadd.f32 %v995, %v996
        %v998 = vrot.slane %v997, 1
        %v999 = vadd.f32 %v997, %v998
        %1000 = vst [vmem:[%s261 + $0x1] sm:$0x1] %v999
      $region36: #{double_conv.4} parent=27 // pred_fallthru
        _
      %p1001 = scmp.lt.s32.totalorder %s20, 1
      %s1002 = scalar_select %p1001, %s20, 1
      %p1003 = scmp.lt.s32.totalorder %s21, 7
      %s1004 = scalar_select %p1003, %s21, 7
      %s1005 = smul.addr %s1004, 8
      %s1006 = smul.addr %s1002, 64
      %s1007 = sadd.s32 %s1005, %s1006
      %s1008 = smul.addr %s1007, 8
      %s1009 = scalar_lea.vmem %s2, %s1008
      %p1010 = scmp.lt.s32.totalorder %s20, 1
      %s1011 = scalar_select %p1010, %s20, 1
      %p1012 = scmp.lt.s32.totalorder %s21, 7
      %s1013 = scalar_select %p1012, %s21, 7
      %s1014 = smul.addr %s1011, 8
      %s1015 = sadd.s32 %s1013, %s1014
      %s1016 = smul.addr %s1015, 8
      %s1017 = scalar_lea.vmem %s3, %s1016
      // Predicated region
      $region37: #{double_conv.4} parent=27 // pred_check
        %p1018 = pneg %p110
      $region38: #{double_conv.4} parent=27 // pred_check_branch
        %1020 = sbr.rel (%p1018) target = $region40
      $region39: #{double_conv.4} parent=27 // pred_region
        _
      $region40: #{double_conv.4} parent=27 // pred_fallthru
        _
      // Predicated region
      $region41: #{double_conv.4} parent=27 // pred_check
        %p1021 = pneg %p138
      $region42: #{double_conv.4} parent=27 // pred_check_branch
        %1023 = sbr.rel (%p1021) target = $region44
      $region43: #{double_conv.4} parent=27 // pred_region
        _
      $region44: #{double_conv.4} parent=27 // pred_fallthru
        _
    $region28: #{double_conv.4} parent=5 // pred_fallthru
      _
    %p1024 = scmp.le.s32.totalorder 2, %s10
    // Predicated region
    $region45: #{double_conv.4} parent=5 // pred_check
      %p1025 = pneg %p1024
    $region46: #{double_conv.4} parent=5 // pred_check_branch
      %1027 = sbr.rel (%p1025) target = $region48
    $region47: #{double_conv.4} parent=5 // pred_region
      %s1028 = ssub.s32 %s10, 2
      // Predicated region
      $region49: #{double_conv.4} parent=47 // pred_check
        %p1029 = pneg %p116
      $region50: #{double_conv.4} parent=47 // pred_check_branch
        %1031 = sbr.rel (%p1029) target = $region52
      $region51: #{double_conv.4} parent=47 // pred_region
        %p1032 = scmp.lt.s32.totalorder %s23, 1
        %s1033 = scalar_select %p1032, %s23, 1
        %p1034 = scmp.lt.s32.totalorder %s24, 7
        %s1035 = scalar_select %p1034, %s24, 7
        %s1036 = smul.addr %s1035, 8
        %s1037 = smul.addr %s1033, 64
        %s1038 = sadd.s32 %s1036, %s1037
        %s1039 = smul.addr %s1038, 8
        %s1040 = scalar_lea.vmem %s2, %s1039
      $region52: #{double_conv.4} parent=47 // pred_fallthru
        _
      // Predicated region
      $region53: #{double_conv.4} parent=47 // pred_check
        %p1041 = pneg %p144
      $region54: #{double_conv.4} parent=47 // pred_check_branch
        %1043 = sbr.rel (%p1041) target = $region56
      $region55: #{double_conv.4} parent=47 // pred_region
        %p1044 = scmp.lt.s32.totalorder %s23, 1
        %s1045 = scalar_select %p1044, %s23, 1
        %p1046 = scmp.lt.s32.totalorder %s24, 7
        %s1047 = scalar_select %p1046, %s24, 7
        %s1048 = smul.addr %s1045, 8
        %s1049 = sadd.s32 %s1047, %s1048
        %s1050 = smul.addr %s1049, 8
        %s1051 = scalar_lea.vmem %s3, %s1050
      $region56: #{double_conv.4} parent=47 // pred_fallthru
        _
    $region48: #{double_conv.4} parent=5 // pred_fallthru
      _
  $region6: #{double_conv.4} parent=0 // loop_footer
    %s14 = sadd.s32 1, %s10
  $region7: #{double_conv.4} parent=0 // loop_footer_branch
    %9 = sbr.rel target = $region3
  $region8: #{double_conv.4} parent=0 // loop_exit
    _

// kernel: double_conv.5
$region0: #{double_conv.5}
  #allocation0 [shape = 'u32[]', space=smem, size = 0x4, offset = 0x4, fixed_abs, tag = 'smem constant byte address 0x4 - core index']
  #allocation1 [shape = 'u32[144,128]{1,0:T(1,128)}', space=vmem, size = 0x12000, scoped, tag = 'internal scratch']
  %s0 = inlined_call_operand.vmem [shape: f32[1024,128], index: 0, kind: input, shape index: {}]
  %s1 = inlined_call_operand.vmem [shape: f32[1,8], index: 1, kind: input, shape index: {}]
  %s2 = inlined_call_operand.vmem [shape: f32[1,8], index: 2, kind: input, shape index: {}]
  %s3 = inlined_call_operand.vmem [shape: bf16[1024,8], index: 3, kind: output, shape index: {}]
  %s4 = sld [smem:[#allocation0]]
  $region45: #{double_conv.5} parent=0
    _
  %s6 = ssub.s32 1, %s4
  %s7 = scalar_select 0, %s6, %s4
  loop: start=0, step=1, limit=4
  $region2: #{double_conv.5} parent=0 // loop_pre_header
    _
  $region3: #{double_conv.5} parent=0 // loop_header
    %s9 = sphi 0, %s13
    %p10 = scmp.ge.s32.totalorder %s9, 4
    %s19 = sphi 0, %s21
    %s22 = sphi 0, %s19
    %s23 = sphi 0, %s22
    %s39 = sphi 0, %s23
    %s43 = sphi 0, %s43
    %s45 = sphi 0, %s43
    %s46 = sphi 0, %s45
    %s60 = sphi 0, %s46
    %s64 = sphi 0, %s64
    %s66 = sphi 0, %s64
    %s67 = sphi 0, %s66
    %s81 = sphi 0, %s67
    %s87 = sphi 0, %s89
    %s90 = sphi 0, %s87
    %s91 = sphi 0, %s90
    %s107 = sphi 0, %s91
  $region4: #{double_conv.5} parent=0 // loop_header_branch
    %12 = sbr.rel (%p10) target = $region8
  $region5: #{double_conv.5} parent=0 // loop_body
    %s14 = ssub.s32 %s9, 1
    %s15 = ssub.s32 %s9, 2
    %s16 = sadd.s32 %s9, 1
    %s17 = ssub.s32 %s9, %s16
    %p18 = scmp.eq.s32.totalorder %s17, 0
    %s20 = sadd.s32 %s19, 1
    %s21 = scalar_select %p18, %s19, %s20
    %p24 = pneg %p18
    %p25 = scmp.eq.s32.totalorder %s9, 1
    %p26 = por %p24, %p25
    %p27 = scmp.ne.s32.totalorder %s19, %s22
    %p28 = scmp.eq.s32.totalorder %s9, 0
    %p29 = por %p27, %p28
    %p30 = scmp.ne.s32.totalorder %s19, %s22
    %p31 = scmp.eq.s32.totalorder %s14, 1
    %p32 = por %p30, %p31
    %p33 = scmp.ne.s32.totalorder %s22, %s23
    %p34 = scmp.eq.s32.totalorder %s14, 0
    %p35 = por %p33, %p34
    %p36 = scmp.ne.s32.totalorder %s22, %s23
    %p37 = scmp.eq.s32.totalorder %s15, 1
    %p38 = por %p36, %p37
    %p40 = scmp.ne.s32.totalorder %s23, %s39
    %p41 = scmp.eq.s32.totalorder %s15, 0
    %p42 = por %p40, %p41
    %s44 = sadd.s32 %s43, 1
    %p47 = scmp.eq.s32.totalorder %s9, 1
    %p48 = scmp.ne.s32.totalorder %s43, %s45
    %p49 = scmp.eq.s32.totalorder %s9, 0
    %p50 = por %p48, %p49
    %p51 = scmp.ne.s32.totalorder %s43, %s45
    %p52 = scmp.eq.s32.totalorder %s14, 1
    %p53 = por %p51, %p52
    %p54 = scmp.ne.s32.totalorder %s45, %s46
    %p55 = scmp.eq.s32.totalorder %s14, 0
    %p56 = por %p54, %p55
    %p57 = scmp.ne.s32.totalorder %s45, %s46
    %p58 = scmp.eq.s32.totalorder %s15, 1
    %p59 = por %p57, %p58
    %p61 = scmp.ne.s32.totalorder %s46, %s60
    %p62 = scmp.eq.s32.totalorder %s15, 0
    %p63 = por %p61, %p62
    %s65 = sadd.s32 %s64, 1
    %p68 = scmp.eq.s32.totalorder %s9, 1
    %p69 = scmp.ne.s32.totalorder %s64, %s66
    %p70 = scmp.eq.s32.totalorder %s9, 0
    %p71 = por %p69, %p70
    %p72 = scmp.ne.s32.totalorder %s64, %s66
    %p73 = scmp.eq.s32.totalorder %s14, 1
    %p74 = por %p72, %p73
    %p75 = scmp.ne.s32.totalorder %s66, %s67
    %p76 = scmp.eq.s32.totalorder %s14, 0
    %p77 = por %p75, %p76
    %p78 = scmp.ne.s32.totalorder %s66, %s67
    %p79 = scmp.eq.s32.totalorder %s15, 1
    %p80 = por %p78, %p79
    %p82 = scmp.ne.s32.totalorder %s67, %s81
    %p83 = scmp.eq.s32.totalorder %s15, 0
    %p84 = por %p82, %p83
    %s85 = ssub.s32 %s9, %s16
    %p86 = scmp.eq.s32.totalorder %s85, 0
    %s88 = sadd.s32 %s87, 1
    %s89 = scalar_select %p86, %s87, %s88
    %p92 = pneg %p86
    %p93 = scmp.eq.s32.totalorder %s9, 1
    %p94 = por %p92, %p93
    %p95 = scmp.ne.s32.totalorder %s87, %s90
    %p96 = scmp.eq.s32.totalorder %s9, 0
    %p97 = por %p95, %p96
    %p98 = scmp.ne.s32.totalorder %s87, %s90
    %p99 = scmp.eq.s32.totalorder %s14, 1
    %p100 = por %p98, %p99
    %p101 = scmp.ne.s32.totalorder %s90, %s91
    %p102 = scmp.eq.s32.totalorder %s14, 0
    %p103 = por %p101, %p102
    %p104 = scmp.ne.s32.totalorder %s90, %s91
    %p105 = scmp.eq.s32.totalorder %s15, 1
    %p106 = por %p104, %p105
    %p108 = scmp.ne.s32.totalorder %s91, %s107
    %p109 = scmp.eq.s32.totalorder %s15, 0
    %p110 = por %p108, %p109
    %p111 = scmp.le.s32.totalorder 1, %s9
    %p112 = scmp.lt.s32.totalorder %s9, 3
    %p113 = pnand %p111, %p112
    %p114 = pneg %p113
    // Predicated region
    $region9: #{double_conv.5} parent=5 // pred_check
      _
    $region10: #{double_conv.5} parent=5 // pred_check_branch
      %116 = sbr.rel (%p113) target = $region12
    $region11: #{double_conv.5} parent=5 // pred_region
      %s117 = ssub.s32 %s9, 1
      // Predicated region
      $region13: #{double_conv.5} parent=11 // pred_check
        %p118 = pneg %p56
      $region14: #{double_conv.5} parent=11 // pred_check_branch
        %120 = sbr.rel (%p118) target = $region16
      $region15: #{double_conv.5} parent=11 // pred_region
        _
      $region16: #{double_conv.5} parent=11 // pred_fallthru
        _
      // Predicated region
      $region17: #{double_conv.5} parent=11 // pred_check
        %p121 = pneg %p77
      $region18: #{double_conv.5} parent=11 // pred_check_branch
        %123 = sbr.rel (%p121) target = $region20
      $region19: #{double_conv.5} parent=11 // pred_region
        _
      $region20: #{double_conv.5} parent=11 // pred_fallthru
        _
    $region12: #{double_conv.5} parent=5 // pred_fallthru
      _
    %p124 = scmp.lt.s32.totalorder %s9, 2
    // Predicated region
    $region21: #{double_conv.5} parent=5 // pred_check
      %p125 = pneg %p124
    $region22: #{double_conv.5} parent=5 // pred_check_branch
      %127 = sbr.rel (%p125) target = $region24
    $region23: #{double_conv.5} parent=5 // pred_region
      // Predicated region
      $region25: #{double_conv.5} parent=23 // pred_check
        %p128 = pneg %p29
      $region26: #{double_conv.5} parent=23 // pred_check_branch
        %130 = sbr.rel (%p128) target = $region28
      $region27: #{double_conv.5} parent=23 // pred_region
        %s131 = smul.u32 64, %s9
        %p132 = scmp.lt.s32.totalorder %s131, 127
        %s133 = scalar_select %p132, %s131, 127
        %s134 = smul.addr %s133, 8
        %s135 = scalar_lea.vmem %s0, %s134
        %s136 = smul.u32 64, %s9
      $region28: #{double_conv.5} parent=23 // pred_fallthru
        _
    $region24: #{double_conv.5} parent=5 // pred_fallthru
      _
    %p137 = scmp.le.s32.totalorder 1, %s9
    %p138 = scmp.lt.s32.totalorder %s9, 3
    %p139 = pnand %p137, %p138
    %p140 = pneg %p139
    // Predicated region
    $region29: #{double_conv.5} parent=5 // pred_check
      _
    $region30: #{double_conv.5} parent=5 // pred_check_branch
      %142 = sbr.rel (%p139) target = $region32
    $region31: #{double_conv.5} parent=5 // pred_region
      %s143 = ssub.s32 %s9, 1
      %s144 = smul.u32 64, %s14
      %p145 = scmp.lt.s32.totalorder %s144, 127
      %s146 = scalar_select %p145, %s144, 127
      %s147 = smul.addr %s146, 8
      %s148 = scalar_lea.vmem %s0, %s147
      %p149 = pneg %p35
      %p150 = pneg %p32
      %p151 = pneg %p56
      %p152 = pneg %p53
      %p153 = pneg %p77
      %p154 = pneg %p74
      %p155 = pneg %p103
      %p156 = pneg %p100
      %s157 = smul.u32 64, %s14
      %p158 = scmp.lt.s32.totalorder %s157, 127
      %s159 = scalar_select %p158, %s157, 127
      %s160 = smul.addr %s159, 4
      %s161 = scalar_lea.vmem %s3, %s160
      %s162 = smul.u32 64, %s14
      %p163 = scmp.lt.s32.totalorder %s162, 127
      %s164 = scalar_select %p163, %s162, 127
      %s165 = smul.addr %s164, 8
      %s166 = scalar_lea.vmem %s0, %s165
      %s167 = smul.u32 64, %s14
      %s168 = smul.u32 64, %s14
      %p169 = scmp.lt.s32.totalorder %s168, 127
      %s170 = scalar_select %p169, %s168, 127
      %s171 = smul.addr %s170, 4
      %s172 = scalar_lea.vmem %s3, %s171
      %s173 = smul.u32 64, %s14
      %v174 = vld [vmem:[%s166] sm:$0xff]
      %v175 = vld [vmem:[%s166 + $0x8] sm:$0xff]
      %v176 = vld [vmem:[%s166 + $0x10] sm:$0xff]
      %v177 = vld [vmem:[%s166 + $0x18] sm:$0xff]
      %v178 = vld [vmem:[%s166 + $0x20] sm:$0xff]
      %v179 = vld [vmem:[%s166 + $0x28] sm:$0xff]
      %v180 = vld [vmem:[%s166 + $0x30] sm:$0xff]
      %v181 = vld [vmem:[%s166 + $0x38] sm:$0xff]
      %v182 = vld [vmem:[%s166 + $0x40] sm:$0xff]
      %v183 = vld [vmem:[%s166 + $0x48] sm:$0xff]
      %v184 = vld [vmem:[%s166 + $0x50] sm:$0xff]
      %v185 = vld [vmem:[%s166 + $0x58] sm:$0xff]
      %v186 = vld [vmem:[%s166 + $0x60] sm:$0xff]
      %v187 = vld [vmem:[%s166 + $0x68] sm:$0xff]
      %v188 = vld [vmem:[%s166 + $0x70] sm:$0xff]
      %v189 = vld [vmem:[%s166 + $0x78] sm:$0xff]
      %v190 = vld [vmem:[%s166 + $0x80] sm:$0xff]
      %v191 = vld [vmem:[%s166 + $0x88] sm:$0xff]
      %v192 = vld [vmem:[%s166 + $0x90] sm:$0xff]
      %v193 = vld [vmem:[%s166 + $0x98] sm:$0xff]
      %v194 = vld [vmem:[%s166 + $0xa0] sm:$0xff]
      %v195 = vld [vmem:[%s166 + $0xa8] sm:$0xff]
      %v196 = vld [vmem:[%s166 + $0xb0] sm:$0xff]
      %v197 = vld [vmem:[%s166 + $0xb8] sm:$0xff]
      %v198 = vld [vmem:[%s166 + $0xc0] sm:$0xff]
      %v199 = vld [vmem:[%s166 + $0xc8] sm:$0xff]
      %v200 = vld [vmem:[%s166 + $0xd0] sm:$0xff]
      %v201 = vld [vmem:[%s166 + $0xd8] sm:$0xff]
      %v202 = vld [vmem:[%s166 + $0xe0] sm:$0xff]
      %v203 = vld [vmem:[%s166 + $0xe8] sm:$0xff]
      %v204 = vld [vmem:[%s166 + $0xf0] sm:$0xff]
      %v205 = vld [vmem:[%s166 + $0xf8] sm:$0xff]
      %v206 = vld [vmem:[%s166 + $0x100] sm:$0xff]
      %v207 = vld [vmem:[%s166 + $0x108] sm:$0xff]
      %v208 = vld [vmem:[%s166 + $0x110] sm:$0xff]
      %v209 = vld [vmem:[%s166 + $0x118] sm:$0xff]
      %v210 = vld [vmem:[%s166 + $0x120] sm:$0xff]
      %v211 = vld [vmem:[%s166 + $0x128] sm:$0xff]
      %v212 = vld [vmem:[%s166 + $0x130] sm:$0xff]
      %v213 = vld [vmem:[%s166 + $0x138] sm:$0xff]
      %v214 = vld [vmem:[%s166 + $0x140] sm:$0xff]
      %v215 = vld [vmem:[%s166 + $0x148] sm:$0xff]
      %v216 = vld [vmem:[%s166 + $0x150] sm:$0xff]
      %v217 = vld [vmem:[%s166 + $0x158] sm:$0xff]
      %v218 = vld [vmem:[%s166 + $0x160] sm:$0xff]
      %v219 = vld [vmem:[%s166 + $0x168] sm:$0xff]
      %v220 = vld [vmem:[%s166 + $0x170] sm:$0xff]
      %v221 = vld [vmem:[%s166 + $0x178] sm:$0xff]
      %v222 = vld [vmem:[%s166 + $0x180] sm:$0xff]
      %v223 = vld [vmem:[%s166 + $0x188] sm:$0xff]
      %v224 = vld [vmem:[%s166 + $0x190] sm:$0xff]
      %v225 = vld [vmem:[%s166 + $0x198] sm:$0xff]
      %v226 = vld [vmem:[%s166 + $0x1a0] sm:$0xff]
      %v227 = vld [vmem:[%s166 + $0x1a8] sm:$0xff]
      %v228 = vld [vmem:[%s166 + $0x1b0] sm:$0xff]
      %v229 = vld [vmem:[%s166 + $0x1b8] sm:$0xff]
      %v230 = vld [vmem:[%s166 + $0x1c0] sm:$0xff]
      %v231 = vld [vmem:[%s166 + $0x1c8] sm:$0xff]
      %v232 = vld [vmem:[%s166 + $0x1d0] sm:$0xff]
      %v233 = vld [vmem:[%s166 + $0x1d8] sm:$0xff]
      %v234 = vld [vmem:[%s166 + $0x1e0] sm:$0xff]
      %v235 = vld [vmem:[%s166 + $0x1e8] sm:$0xff]
      %v236 = vld [vmem:[%s166 + $0x1f0] sm:$0xff]
      %v237 = vld [vmem:[%s166 + $0x1f8] sm:$0xff]
      %v238 = vld [vmem:[%s1] sm:$0x1]
      %v240 = vlaneseq
      %v241 = vshrl.u32 %v240, 7
      %v242 = vsub.s32 0, %v241
      %v243 = vrot.slane %v238, %v242
      %v245 = vmul.f32 %v174, %v243
      %v246 = vmul.f32 %v175, %v243
      %v247 = vmul.f32 %v176, %v243
      %v248 = vmul.f32 %v177, %v243
      %v249 = vmul.f32 %v178, %v243
      %v250 = vmul.f32 %v179, %v243
      %v251 = vmul.f32 %v180, %v243
      %v252 = vmul.f32 %v181, %v243
      %v253 = vmul.f32 %v182, %v243
      %v254 = vmul.f32 %v183, %v243
      %v255 = vmul.f32 %v184, %v243
      %v256 = vmul.f32 %v185, %v243
      %v257 = vmul.f32 %v186, %v243
      %v258 = vmul.f32 %v187, %v243
      %v259 = vmul.f32 %v188, %v243
      %v260 = vmul.f32 %v189, %v243
      %v261 = vmul.f32 %v190, %v243
      %v262 = vmul.f32 %v191, %v243
      %v263 = vmul.f32 %v192, %v243
      %v264 = vmul.f32 %v193, %v243
      %v265 = vmul.f32 %v194, %v243
      %v266 = vmul.f32 %v195, %v243
      %v267 = vmul.f32 %v196, %v243
      %v268 = vmul.f32 %v197, %v243
      %v269 = vmul.f32 %v198, %v243
      %v270 = vmul.f32 %v199, %v243
      %v271 = vmul.f32 %v200, %v243
      %v272 = vmul.f32 %v201, %v243
      %v273 = vmul.f32 %v202, %v243
      %v274 = vmul.f32 %v203, %v243
      %v275 = vmul.f32 %v204, %v243
      %v276 = vmul.f32 %v205, %v243
      %v277 = vmul.f32 %v206, %v243
      %v278 = vmul.f32 %v207, %v243
      %v279 = vmul.f32 %v208, %v243
      %v280 = vmul.f32 %v209, %v243
      %v281 = vmul.f32 %v210, %v243
      %v282 = vmul.f32 %v211, %v243
      %v283 = vmul.f32 %v212, %v243
      %v284 = vmul.f32 %v213, %v243
      %v285 = vmul.f32 %v214, %v243
      %v286 = vmul.f32 %v215, %v243
      %v287 = vmul.f32 %v216, %v243
      %v288 = vmul.f32 %v217, %v243
      %v289 = vmul.f32 %v218, %v243
      %v290 = vmul.f32 %v219, %v243
      %v291 = vmul.f32 %v220, %v243
      %v292 = vmul.f32 %v221, %v243
      %v293 = vmul.f32 %v222, %v243
      %v294 = vmul.f32 %v223, %v243
      %v295 = vmul.f32 %v224, %v243
      %v296 = vmul.f32 %v225, %v243
      %v297 = vmul.f32 %v226, %v243
      %v298 = vmul.f32 %v227, %v243
      %v299 = vmul.f32 %v228, %v243
      %v300 = vmul.f32 %v229, %v243
      %v301 = vmul.f32 %v230, %v243
      %v302 = vmul.f32 %v231, %v243
      %v303 = vmul.f32 %v232, %v243
      %v304 = vmul.f32 %v233, %v243
      %v305 = vmul.f32 %v234, %v243
      %v306 = vmul.f32 %v235, %v243
      %v307 = vmul.f32 %v236, %v243
      %v308 = vmul.f32 %v237, %v243
      %v309 = vld [vmem:[%s2] sm:$0x1]
      %v311 = vlaneseq
      %v312 = vshrl.u32 %v311, 7
      %v313 = vsub.s32 0, %v312
      %v314 = vrot.slane %v309, %v313
      %v316 = vadd.f32 %v245, %v314
      %v317 = vadd.f32 %v246, %v314
      %v318 = vadd.f32 %v247, %v314
      %v319 = vadd.f32 %v248, %v314
      %v320 = vadd.f32 %v249, %v314
      %v321 = vadd.f32 %v250, %v314
      %v322 = vadd.f32 %v251, %v314
      %v323 = vadd.f32 %v252, %v314
      %v324 = vadd.f32 %v253, %v314
      %v325 = vadd.f32 %v254, %v314
      %v326 = vadd.f32 %v255, %v314
      %v327 = vadd.f32 %v256, %v314
      %v328 = vadd.f32 %v257, %v314
      %v329 = vadd.f32 %v258, %v314
      %v330 = vadd.f32 %v259, %v314
      %v331 = vadd.f32 %v260, %v314
      %v332 = vadd.f32 %v261, %v314
      %v333 = vadd.f32 %v262, %v314
      %v334 = vadd.f32 %v263, %v314
      %v335 = vadd.f32 %v264, %v314
      %v336 = vadd.f32 %v265, %v314
      %v337 = vadd.f32 %v266, %v314
      %v338 = vadd.f32 %v267, %v314
      %v339 = vadd.f32 %v268, %v314
      %v340 = vadd.f32 %v269, %v314
      %v341 = vadd.f32 %v270, %v314
      %v342 = vadd.f32 %v271, %v314
      %v343 = vadd.f32 %v272, %v314
      %v344 = vadd.f32 %v273, %v314
      %v345 = vadd.f32 %v274, %v314
      %v346 = vadd.f32 %v275, %v314
      %v347 = vadd.f32 %v276, %v314
      %v348 = vadd.f32 %v277, %v314
      %v349 = vadd.f32 %v278, %v314
      %v350 = vadd.f32 %v279, %v314
      %v351 = vadd.f32 %v280, %v314
      %v352 = vadd.f32 %v281, %v314
      %v353 = vadd.f32 %v282, %v314
      %v354 = vadd.f32 %v283, %v314
      %v355 = vadd.f32 %v284, %v314
      %v356 = vadd.f32 %v285, %v314
      %v357 = vadd.f32 %v286, %v314
      %v358 = vadd.f32 %v287, %v314
      %v359 = vadd.f32 %v288, %v314
      %v360 = vadd.f32 %v289, %v314
      %v361 = vadd.f32 %v290, %v314
      %v362 = vadd.f32 %v291, %v314
      %v363 = vadd.f32 %v292, %v314
      %v364 = vadd.f32 %v293, %v314
      %v365 = vadd.f32 %v294, %v314
      %v366 = vadd.f32 %v295, %v314
      %v367 = vadd.f32 %v296, %v314
      %v368 = vadd.f32 %v297, %v314
      %v369 = vadd.f32 %v298, %v314
      %v370 = vadd.f32 %v299, %v314
      %v371 = vadd.f32 %v300, %v314
      %v372 = vadd.f32 %v301, %v314
      %v373 = vadd.f32 %v302, %v314
      %v374 = vadd.f32 %v303, %v314
      %v375 = vadd.f32 %v304, %v314
      %v376 = vadd.f32 %v305, %v314
      %v377 = vadd.f32 %v306, %v314
      %v378 = vadd.f32 %v307, %v314
      %v379 = vadd.f32 %v308, %v314
      %v380 = vmax.f32 %v316, 0.0
      %v381 = vmax.f32 %v317, 0.0
      %v382 = vmax.f32 %v318, 0.0
      %v383 = vmax.f32 %v319, 0.0
      %v384 = vmax.f32 %v320, 0.0
      %v385 = vmax.f32 %v321, 0.0
      %v386 = vmax.f32 %v322, 0.0
      %v387 = vmax.f32 %v323, 0.0
      %v388 = vmax.f32 %v324, 0.0
      %v389 = vmax.f32 %v325, 0.0
      %v390 = vmax.f32 %v326, 0.0
      %v391 = vmax.f32 %v327, 0.0
      %v392 = vmax.f32 %v328, 0.0
      %v393 = vmax.f32 %v329, 0.0
      %v394 = vmax.f32 %v330, 0.0
      %v395 = vmax.f32 %v331, 0.0
      %v396 = vmax.f32 %v332, 0.0
      %v397 = vmax.f32 %v333, 0.0
      %v398 = vmax.f32 %v334, 0.0
      %v399 = vmax.f32 %v335, 0.0
      %v400 = vmax.f32 %v336, 0.0
      %v401 = vmax.f32 %v337, 0.0
      %v402 = vmax.f32 %v338, 0.0
      %v403 = vmax.f32 %v339, 0.0
      %v404 = vmax.f32 %v340, 0.0
      %v405 = vmax.f32 %v341, 0.0
      %v406 = vmax.f32 %v342, 0.0
      %v407 = vmax.f32 %v343, 0.0
      %v408 = vmax.f32 %v344, 0.0
      %v409 = vmax.f32 %v345, 0.0
      %v410 = vmax.f32 %v346, 0.0
      %v411 = vmax.f32 %v347, 0.0
      %v412 = vmax.f32 %v348, 0.0
      %v413 = vmax.f32 %v349, 0.0
      %v414 = vmax.f32 %v350, 0.0
      %v415 = vmax.f32 %v351, 0.0
      %v416 = vmax.f32 %v352, 0.0
      %v417 = vmax.f32 %v353, 0.0
      %v418 = vmax.f32 %v354, 0.0
      %v419 = vmax.f32 %v355, 0.0
      %v420 = vmax.f32 %v356, 0.0
      %v421 = vmax.f32 %v357, 0.0
      %v422 = vmax.f32 %v358, 0.0
      %v423 = vmax.f32 %v359, 0.0
      %v424 = vmax.f32 %v360, 0.0
      %v425 = vmax.f32 %v361, 0.0
      %v426 = vmax.f32 %v362, 0.0
      %v427 = vmax.f32 %v363, 0.0
      %v428 = vmax.f32 %v364, 0.0
      %v429 = vmax.f32 %v365, 0.0
      %v430 = vmax.f32 %v366, 0.0
      %v431 = vmax.f32 %v367, 0.0
      %v432 = vmax.f32 %v368, 0.0
      %v433 = vmax.f32 %v369, 0.0
      %v434 = vmax.f32 %v370, 0.0
      %v435 = vmax.f32 %v371, 0.0
      %v436 = vmax.f32 %v372, 0.0
      %v437 = vmax.f32 %v373, 0.0
      %v438 = vmax.f32 %v374, 0.0
      %v439 = vmax.f32 %v375, 0.0
      %v440 = vmax.f32 %v376, 0.0
      %v441 = vmax.f32 %v377, 0.0
      %v442 = vmax.f32 %v378, 0.0
      %v443 = vmax.f32 %v379, 0.0
      %v444 = vpack.c.bf16 %v381, %v380
      %v445 = vpack.c.bf16 %v383, %v382
      %v446 = vpack.c.bf16 %v385, %v384
      %v447 = vpack.c.bf16 %v387, %v386
      %v448 = vpack.c.bf16 %v389, %v388
      %v449 = vpack.c.bf16 %v391, %v390
      %v450 = vpack.c.bf16 %v393, %v392
      %v451 = vpack.c.bf16 %v395, %v394
      %v452 = vpack.c.bf16 %v397, %v396
      %v453 = vpack.c.bf16 %v399, %v398
      %v454 = vpack.c.bf16 %v401, %v400
      %v455 = vpack.c.bf16 %v403, %v402
      %v456 = vpack.c.bf16 %v405, %v404
      %v457 = vpack.c.bf16 %v407, %v406
      %v458 = vpack.c.bf16 %v409, %v408
      %v459 = vpack.c.bf16 %v411, %v410
      %v460 = vpack.c.bf16 %v413, %v412
      %v461 = vpack.c.bf16 %v415, %v414
      %v462 = vpack.c.bf16 %v417, %v416
      %v463 = vpack.c.bf16 %v419, %v418
      %v464 = vpack.c.bf16 %v421, %v420
      %v465 = vpack.c.bf16 %v423, %v422
      %v466 = vpack.c.bf16 %v425, %v424
      %v467 = vpack.c.bf16 %v427, %v426
      %v468 = vpack.c.bf16 %v429, %v428
      %v469 = vpack.c.bf16 %v431, %v430
      %v470 = vpack.c.bf16 %v433, %v432
      %v471 = vpack.c.bf16 %v435, %v434
      %v472 = vpack.c.bf16 %v437, %v436
      %v473 = vpack.c.bf16 %v439, %v438
      %v474 = vpack.c.bf16 %v441, %v440
      %v475 = vpack.c.bf16 %v443, %v442
      %v508 = vunpack.c.l.b16 %v444
      %v509 = vunpack.c.h.b16 %v444
      %v510 = vunpack.c.l.b16 %v445
      %v511 = vunpack.c.h.b16 %v445
      %v512 = vunpack.c.l.b16 %v446
      %v513 = vunpack.c.h.b16 %v446
      %v514 = vunpack.c.l.b16 %v447
      %v515 = vunpack.c.h.b16 %v447
      %v516 = vunpack.c.l.b16 %v448
      %v517 = vunpack.c.h.b16 %v448
      %v518 = vunpack.c.l.b16 %v449
      %v519 = vunpack.c.h.b16 %v449
      %v520 = vunpack.c.l.b16 %v450
      %v521 = vunpack.c.h.b16 %v450
      %v522 = vunpack.c.l.b16 %v451
      %v523 = vunpack.c.h.b16 %v451
      %v524 = vunpack.c.l.b16 %v452
      %v525 = vunpack.c.h.b16 %v452
      %v526 = vunpack.c.l.b16 %v453
      %v527 = vunpack.c.h.b16 %v453
      %v528 = vunpack.c.l.b16 %v454
      %v529 = vunpack.c.h.b16 %v454
      %v530 = vunpack.c.l.b16 %v455
      %v531 = vunpack.c.h.b16 %v455
      %v532 = vunpack.c.l.b16 %v456
      %v533 = vunpack.c.h.b16 %v456
      %v534 = vunpack.c.l.b16 %v457
      %v535 = vunpack.c.h.b16 %v457
      %v536 = vunpack.c.l.b16 %v458
      %v537 = vunpack.c.h.b16 %v458
      %v538 = vunpack.c.l.b16 %v459
      %v539 = vunpack.c.h.b16 %v459
      %v540 = vunpack.c.l.b16 %v460
      %v541 = vunpack.c.h.b16 %v460
      %v542 = vunpack.c.l.b16 %v461
      %v543 = vunpack.c.h.b16 %v461
      %v544 = vunpack.c.l.b16 %v462
      %v545 = vunpack.c.h.b16 %v462
      %v546 = vunpack.c.l.b16 %v463
      %v547 = vunpack.c.h.b16 %v463
      %v548 = vunpack.c.l.b16 %v464
      %v549 = vunpack.c.h.b16 %v464
      %v550 = vunpack.c.l.b16 %v465
      %v551 = vunpack.c.h.b16 %v465
      %v552 = vunpack.c.l.b16 %v466
      %v553 = vunpack.c.h.b16 %v466
      %v554 = vunpack.c.l.b16 %v467
      %v555 = vunpack.c.h.b16 %v467
      %v556 = vunpack.c.l.b16 %v468
      %v557 = vunpack.c.h.b16 %v468
      %v558 = vunpack.c.l.b16 %v469
      %v559 = vunpack.c.h.b16 %v469
      %v560 = vunpack.c.l.b16 %v470
      %v561 = vunpack.c.h.b16 %v470
      %v562 = vunpack.c.l.b16 %v471
      %v563 = vunpack.c.h.b16 %v471
      %v564 = vunpack.c.l.b16 %v472
      %v565 = vunpack.c.h.b16 %v472
      %v566 = vunpack.c.l.b16 %v473
      %v567 = vunpack.c.h.b16 %v473
      %v568 = vunpack.c.l.b16 %v474
      %v569 = vunpack.c.h.b16 %v474
      %v570 = vunpack.c.l.b16 %v475
      %v571 = vunpack.c.h.b16 %v475
      %v572 = vpack.c.b16 %v508, %v508
      %v573 = vpack.c.b16 %v509, %v509
      %v574 = vpack.c.b16 %v510, %v510
      %v575 = vpack.c.b16 %v511, %v511
      %v576 = vpack.c.b16 %v512, %v512
      %v577 = vpack.c.b16 %v513, %v513
      %v578 = vpack.c.b16 %v514, %v514
      %v579 = vpack.c.b16 %v515, %v515
      %v580 = vpack.c.b16 %v516, %v516
      %v581 = vpack.c.b16 %v517, %v517
      %v582 = vpack.c.b16 %v518, %v518
      %v583 = vpack.c.b16 %v519, %v519
      %v584 = vpack.c.b16 %v520, %v520
      %v585 = vpack.c.b16 %v521, %v521
      %v586 = vpack.c.b16 %v522, %v522
      %v587 = vpack.c.b16 %v523, %v523
      %v588 = vpack.c.b16 %v524, %v524
      %v589 = vpack.c.b16 %v525, %v525
      %v590 = vpack.c.b16 %v526, %v526
      %v591 = vpack.c.b16 %v527, %v527
      %v592 = vpack.c.b16 %v528, %v528
      %v593 = vpack.c.b16 %v529, %v529
      %v594 = vpack.c.b16 %v530, %v530
      %v595 = vpack.c.b16 %v531, %v531
      %v596 = vpack.c.b16 %v532, %v532
      %v597 = vpack.c.b16 %v533, %v533
      %v598 = vpack.c.b16 %v534, %v534
      %v599 = vpack.c.b16 %v535, %v535
      %v600 = vpack.c.b16 %v536, %v536
      %v601 = vpack.c.b16 %v537, %v537
      %v602 = vpack.c.b16 %v538, %v538
      %v603 = vpack.c.b16 %v539, %v539
      %v604 = vpack.c.b16 %v540, %v540
      %v605 = vpack.c.b16 %v541, %v541
      %v606 = vpack.c.b16 %v542, %v542
      %v607 = vpack.c.b16 %v543, %v543
      %v608 = vpack.c.b16 %v544, %v544
      %v609 = vpack.c.b16 %v545, %v545
      %v610 = vpack.c.b16 %v546, %v546
      %v611 = vpack.c.b16 %v547, %v547
      %v612 = vpack.c.b16 %v548, %v548
      %v613 = vpack.c.b16 %v549, %v549
      %v614 = vpack.c.b16 %v550, %v550
      %v615 = vpack.c.b16 %v551, %v551
      %v616 = vpack.c.b16 %v552, %v552
      %v617 = vpack.c.b16 %v553, %v553
      %v618 = vpack.c.b16 %v554, %v554
      %v619 = vpack.c.b16 %v555, %v555
      %v620 = vpack.c.b16 %v556, %v556
      %v621 = vpack.c.b16 %v557, %v557
      %v622 = vpack.c.b16 %v558, %v558
      %v623 = vpack.c.b16 %v559, %v559
      %v624 = vpack.c.b16 %v560, %v560
      %v625 = vpack.c.b16 %v561, %v561
      %v626 = vpack.c.b16 %v562, %v562
      %v627 = vpack.c.b16 %v563, %v563
      %v628 = vpack.c.b16 %v564, %v564
      %v629 = vpack.c.b16 %v565, %v565
      %v630 = vpack.c.b16 %v566, %v566
      %v631 = vpack.c.b16 %v567, %v567
      %v632 = vpack.c.b16 %v568, %v568
      %v633 = vpack.c.b16 %v569, %v569
      %v634 = vpack.c.b16 %v570, %v570
      %v635 = vpack.c.b16 %v571, %v571
      %vm700 = vcmask 60416
      %701 = vst.msk [vmem:[%s172] sm:$0xf] %vm700, %v572
      %702 = vst.msk [vmem:[%s172 + $0x4] sm:$0xf] %vm700, %v573
      %703 = vst.msk [vmem:[%s172 + $0x8] sm:$0xf] %vm700, %v574
      %704 = vst.msk [vmem:[%s172 + $0xc] sm:$0xf] %vm700, %v575
      %705 = vst.msk [vmem:[%s172 + $0x10] sm:$0xf] %vm700, %v576
      %706 = vst.msk [vmem:[%s172 + $0x14] sm:$0xf] %vm700, %v577
      %707 = vst.msk [vmem:[%s172 + $0x18] sm:$0xf] %vm700, %v578
      %708 = vst.msk [vmem:[%s172 + $0x1c] sm:$0xf] %vm700, %v579
      %709 = vst.msk [vmem:[%s172 + $0x20] sm:$0xf] %vm700, %v580
      %710 = vst.msk [vmem:[%s172 + $0x24] sm:$0xf] %vm700, %v581
      %711 = vst.msk [vmem:[%s172 + $0x28] sm:$0xf] %vm700, %v582
      %712 = vst.msk [vmem:[%s172 + $0x2c] sm:$0xf] %vm700, %v583
      %713 = vst.msk [vmem:[%s172 + $0x30] sm:$0xf] %vm700, %v584
      %714 = vst.msk [vmem:[%s172 + $0x34] sm:$0xf] %vm700, %v585
      %715 = vst.msk [vmem:[%s172 + $0x38] sm:$0xf] %vm700, %v586
      %716 = vst.msk [vmem:[%s172 + $0x3c] sm:$0xf] %vm700, %v587
      %717 = vst.msk [vmem:[%s172 + $0x40] sm:$0xf] %vm700, %v588
      %718 = vst.msk [vmem:[%s172 + $0x44] sm:$0xf] %vm700, %v589
      %719 = vst.msk [vmem:[%s172 + $0x48] sm:$0xf] %vm700, %v590
      %720 = vst.msk [vmem:[%s172 + $0x4c] sm:$0xf] %vm700, %v591
      %721 = vst.msk [vmem:[%s172 + $0x50] sm:$0xf] %vm700, %v592
      %722 = vst.msk [vmem:[%s172 + $0x54] sm:$0xf] %vm700, %v593
      %723 = vst.msk [vmem:[%s172 + $0x58] sm:$0xf] %vm700, %v594
      %724 = vst.msk [vmem:[%s172 + $0x5c] sm:$0xf] %vm700, %v595
      %725 = vst.msk [vmem:[%s172 + $0x60] sm:$0xf] %vm700, %v596
      %726 = vst.msk [vmem:[%s172 + $0x64] sm:$0xf] %vm700, %v597
      %727 = vst.msk [vmem:[%s172 + $0x68] sm:$0xf] %vm700, %v598
      %728 = vst.msk [vmem:[%s172 + $0x6c] sm:$0xf] %vm700, %v599
      %729 = vst.msk [vmem:[%s172 + $0x70] sm:$0xf] %vm700, %v600
      %730 = vst.msk [vmem:[%s172 + $0x74] sm:$0xf] %vm700, %v601
      %731 = vst.msk [vmem:[%s172 + $0x78] sm:$0xf] %vm700, %v602
      %732 = vst.msk [vmem:[%s172 + $0x7c] sm:$0xf] %vm700, %v603
      %733 = vst.msk [vmem:[%s172 + $0x80] sm:$0xf] %vm700, %v604
      %734 = vst.msk [vmem:[%s172 + $0x84] sm:$0xf] %vm700, %v605
      %735 = vst.msk [vmem:[%s172 + $0x88] sm:$0xf] %vm700, %v606
      %736 = vst.msk [vmem:[%s172 + $0x8c] sm:$0xf] %vm700, %v607
      %737 = vst.msk [vmem:[%s172 + $0x90] sm:$0xf] %vm700, %v608
      %738 = vst.msk [vmem:[%s172 + $0x94] sm:$0xf] %vm700, %v609
      %739 = vst.msk [vmem:[%s172 + $0x98] sm:$0xf] %vm700, %v610
      %740 = vst.msk [vmem:[%s172 + $0x9c] sm:$0xf] %vm700, %v611
      %741 = vst.msk [vmem:[%s172 + $0xa0] sm:$0xf] %vm700, %v612
      %742 = vst.msk [vmem:[%s172 + $0xa4] sm:$0xf] %vm700, %v613
      %743 = vst.msk [vmem:[%s172 + $0xa8] sm:$0xf] %vm700, %v614
      %744 = vst.msk [vmem:[%s172 + $0xac] sm:$0xf] %vm700, %v615
      %745 = vst.msk [vmem:[%s172 + $0xb0] sm:$0xf] %vm700, %v616
      %746 = vst.msk [vmem:[%s172 + $0xb4] sm:$0xf] %vm700, %v617
      %747 = vst.msk [vmem:[%s172 + $0xb8] sm:$0xf] %vm700, %v618
      %748 = vst.msk [vmem:[%s172 + $0xbc] sm:$0xf] %vm700, %v619
      %749 = vst.msk [vmem:[%s172 + $0xc0] sm:$0xf] %vm700, %v620
      %750 = vst.msk [vmem:[%s172 + $0xc4] sm:$0xf] %vm700, %v621
      %751 = vst.msk [vmem:[%s172 + $0xc8] sm:$0xf] %vm700, %v622
      %752 = vst.msk [vmem:[%s172 + $0xcc] sm:$0xf] %vm700, %v623
      %753 = vst.msk [vmem:[%s172 + $0xd0] sm:$0xf] %vm700, %v624
      %754 = vst.msk [vmem:[%s172 + $0xd4] sm:$0xf] %vm700, %v625
      %755 = vst.msk [vmem:[%s172 + $0xd8] sm:$0xf] %vm700, %v626
      %756 = vst.msk [vmem:[%s172 + $0xdc] sm:$0xf] %vm700, %v627
      %757 = vst.msk [vmem:[%s172 + $0xe0] sm:$0xf] %vm700, %v628
      %758 = vst.msk [vmem:[%s172 + $0xe4] sm:$0xf] %vm700, %v629
      %759 = vst.msk [vmem:[%s172 + $0xe8] sm:$0xf] %vm700, %v630
      %760 = vst.msk [vmem:[%s172 + $0xec] sm:$0xf] %vm700, %v631
      %761 = vst.msk [vmem:[%s172 + $0xf0] sm:$0xf] %vm700, %v632
      %762 = vst.msk [vmem:[%s172 + $0xf4] sm:$0xf] %vm700, %v633
      %763 = vst.msk [vmem:[%s172 + $0xf8] sm:$0xf] %vm700, %v634
      %764 = vst.msk [vmem:[%s172 + $0xfc] sm:$0xf] %vm700, %v635
      %s765 = smul.u32 64, %s14
      %p766 = scmp.lt.s32.totalorder %s765, 127
      %s767 = scalar_select %p766, %s765, 127
      %s768 = smul.addr %s767, 4
      %s769 = scalar_lea.vmem %s3, %s768
      // Predicated region
      $region33: #{double_conv.5} parent=31 // pred_check
        %p770 = pneg %p100
      $region34: #{double_conv.5} parent=31 // pred_check_branch
        %772 = sbr.rel (%p770) target = $region36
      $region35: #{double_conv.5} parent=31 // pred_region
        %s773 = smul.u32 64, %s14
      $region36: #{double_conv.5} parent=31 // pred_fallthru
        _
    $region32: #{double_conv.5} parent=5 // pred_fallthru
      _
    %p774 = scmp.le.s32.totalorder 2, %s9
    // Predicated region
    $region37: #{double_conv.5} parent=5 // pred_check
      %p775 = pneg %p774
    $region38: #{double_conv.5} parent=5 // pred_check_branch
      %777 = sbr.rel (%p775) target = $region40
    $region39: #{double_conv.5} parent=5 // pred_region
      %s778 = ssub.s32 %s9, 2
      // Predicated region
      $region41: #{double_conv.5} parent=39 // pred_check
        %p779 = pneg %p106
      $region42: #{double_conv.5} parent=39 // pred_check_branch
        %781 = sbr.rel (%p779) target = $region44
      $region43: #{double_conv.5} parent=39 // pred_region
        %s782 = smul.u32 64, %s15
        %p783 = scmp.lt.s32.totalorder %s782, 127
        %s784 = scalar_select %p783, %s782, 127
        %s785 = smul.addr %s784, 4
        %s786 = scalar_lea.vmem %s3, %s785
      $region44: #{double_conv.5} parent=39 // pred_fallthru
        _
    $region40: #{double_conv.5} parent=5 // pred_fallthru
      _
  $region6: #{double_conv.5} parent=0 // loop_footer
    %s13 = sadd.s32 1, %s9
  $region7: #{double_conv.5} parent=0 // loop_footer_branch
    %8 = sbr.rel target = $region3
  $region8: #{double_conv.5} parent=0 // loop_exit
    _

// kernel: double_conv.7
$region0: #{double_conv.7}
  #allocation0 [shape = 'u32[]', space=smem, size = 0x4, offset = 0x4, fixed_abs, tag = 'smem constant byte address 0x4 - core index']
  #allocation1 [shape = 'u32[144,128]{1,0:T(1,128)}', space=vmem, size = 0x12000, scoped, tag = 'internal scratch']
  %s0 = inlined_call_operand.vmem [shape: f32[1024,128], index: 0, kind: input, shape index: {}]
  %s1 = inlined_call_operand.vmem [shape: f32[1,8], index: 1, kind: input, shape index: {}]
  %s2 = inlined_call_operand.vmem [shape: f32[1,8], index: 2, kind: input, shape index: {}]
  %s3 = inlined_call_operand.hbm [shape: f32[1024,8], index: 3, kind: output, shape index: {}]
  %s4 = sld [smem:[#allocation0]]
  $region45: #{double_conv.7} parent=0
    _
  %s6 = ssub.s32 1, %s4
  %s7 = scalar_select 0, %s6, %s4
  $region1: #{double_conv.7} parent=0
    #allocation2 [shape = 'u8[524288]{0}', space=vmem, size = 0x80000, scoped, tag = 'output window, operand 0']
    #allocation3 [shape = 's32[2]{0}', space=sflag, size = 0x8, scoped, tag = 'scoped memory for double_conv.7']
    %8 = vsyncpa [#allocation3], 0
    %s9 = scalar_lea.sflag [#allocation3], 1
    %10 = vsyncpa %s9, 0
    loop: start=0, step=1, limit=4
    $region2: #{double_conv.7} parent=1 // loop_pre_header
      _
    $region3: #{double_conv.7} parent=1 // loop_header
      %s12 = sphi 0, %s16
      %p13 = scmp.ge.s32.totalorder %s12, 4
      %s22 = sphi 0, %s24
      %s25 = sphi 0, %s22
      %s26 = sphi 0, %s25
      %s42 = sphi 0, %s26
      %s46 = sphi 0, %s46
      %s48 = sphi 0, %s46
      %s49 = sphi 0, %s48
      %s63 = sphi 0, %s49
      %s67 = sphi 0, %s67
      %s69 = sphi 0, %s67
      %s70 = sphi 0, %s69
      %s84 = sphi 0, %s70
      %s90 = sphi 0, %s92
      %s93 = sphi 0, %s90
      %s94 = sphi 0, %s93
      %s110 = sphi 0, %s94
    $region4: #{double_conv.7} parent=1 // loop_header_branch
      %15 = sbr.rel (%p13) target = $region8
    $region5: #{double_conv.7} parent=1 // loop_body
      %s17 = ssub.s32 %s12, 1
      %s18 = ssub.s32 %s12, 2
      %s19 = sadd.s32 %s12, 1
      %s20 = ssub.s32 %s12, %s19
      %p21 = scmp.eq.s32.totalorder %s20, 0
      %s23 = sadd.s32 %s22, 1
      %s24 = scalar_select %p21, %s22, %s23
      %p27 = pneg %p21
      %p28 = scmp.eq.s32.totalorder %s12, 1
      %p29 = por %p27, %p28
      %p30 = scmp.ne.s32.totalorder %s22, %s25
      %p31 = scmp.eq.s32.totalorder %s12, 0
      %p32 = por %p30, %p31
      %p33 = scmp.ne.s32.totalorder %s22, %s25
      %p34 = scmp.eq.s32.totalorder %s17, 1
      %p35 = por %p33, %p34
      %p36 = scmp.ne.s32.totalorder %s25, %s26
      %p37 = scmp.eq.s32.totalorder %s17, 0
      %p38 = por %p36, %p37
      %p39 = scmp.ne.s32.totalorder %s25, %s26
      %p40 = scmp.eq.s32.totalorder %s18, 1
      %p41 = por %p39, %p40
      %p43 = scmp.ne.s32.totalorder %s26, %s42
      %p44 = scmp.eq.s32.totalorder %s18, 0
      %p45 = por %p43, %p44
      %s47 = sadd.s32 %s46, 1
      %p50 = scmp.eq.s32.totalorder %s12, 1
      %p51 = scmp.ne.s32.totalorder %s46, %s48
      %p52 = scmp.eq.s32.totalorder %s12, 0
      %p53 = por %p51, %p52
      %p54 = scmp.ne.s32.totalorder %s46, %s48
      %p55 = scmp.eq.s32.totalorder %s17, 1
      %p56 = por %p54, %p55
      %p57 = scmp.ne.s32.totalorder %s48, %s49
      %p58 = scmp.eq.s32.totalorder %s17, 0
      %p59 = por %p57, %p58
      %p60 = scmp.ne.s32.totalorder %s48, %s49
      %p61 = scmp.eq.s32.totalorder %s18, 1
      %p62 = por %p60, %p61
      %p64 = scmp.ne.s32.totalorder %s49, %s63
      %p65 = scmp.eq.s32.totalorder %s18, 0
      %p66 = por %p64, %p65
      %s68 = sadd.s32 %s67, 1
      %p71 = scmp.eq.s32.totalorder %s12, 1
      %p72 = scmp.ne.s32.totalorder %s67, %s69
      %p73 = scmp.eq.s32.totalorder %s12, 0
      %p74 = por %p72, %p73
      %p75 = scmp.ne.s32.totalorder %s67, %s69
      %p76 = scmp.eq.s32.totalorder %s17, 1
      %p77 = por %p75, %p76
      %p78 = scmp.ne.s32.totalorder %s69, %s70
      %p79 = scmp.eq.s32.totalorder %s17, 0
      %p80 = por %p78, %p79
      %p81 = scmp.ne.s32.totalorder %s69, %s70
      %p82 = scmp.eq.s32.totalorder %s18, 1
      %p83 = por %p81, %p82
      %p85 = scmp.ne.s32.totalorder %s70, %s84
      %p86 = scmp.eq.s32.totalorder %s18, 0
      %p87 = por %p85, %p86
      %s88 = ssub.s32 %s12, %s19
      %p89 = scmp.eq.s32.totalorder %s88, 0
      %s91 = sadd.s32 %s90, 1
      %s92 = scalar_select %p89, %s90, %s91
      %p95 = pneg %p89
      %p96 = scmp.eq.s32.totalorder %s12, 1
      %p97 = por %p95, %p96
      %p98 = scmp.ne.s32.totalorder %s90, %s93
      %p99 = scmp.eq.s32.totalorder %s12, 0
      %p100 = por %p98, %p99
      %p101 = scmp.ne.s32.totalorder %s90, %s93
      %p102 = scmp.eq.s32.totalorder %s17, 1
      %p103 = por %p101, %p102
      %p104 = scmp.ne.s32.totalorder %s93, %s94
      %p105 = scmp.eq.s32.totalorder %s17, 0
      %p106 = por %p104, %p105
      %p107 = scmp.ne.s32.totalorder %s93, %s94
      %p108 = scmp.eq.s32.totalorder %s18, 1
      %p109 = por %p107, %p108
      %p111 = scmp.ne.s32.totalorder %s94, %s110
      %p112 = scmp.eq.s32.totalorder %s18, 0
      %p113 = por %p111, %p112
      %p114 = scmp.le.s32.totalorder 1, %s12
      %p115 = scmp.lt.s32.totalorder %s12, 3
      %p116 = pnand %p114, %p115
      %p117 = pneg %p116
      // Predicated region
      $region9: #{double_conv.7} parent=5 // pred_check
        _
      $region10: #{double_conv.7} parent=5 // pred_check_branch
        %119 = sbr.rel (%p116) target = $region12
      $region11: #{double_conv.7} parent=5 // pred_region
        %s120 = ssub.s32 %s12, 1
        // Predicated region
        $region13: #{double_conv.7} parent=11 // pred_check
          %p121 = pneg %p59
        $region14: #{double_conv.7} parent=11 // pred_check_branch
          %123 = sbr.rel (%p121) target = $region16
        $region15: #{double_conv.7} parent=11 // pred_region
          _
        $region16: #{double_conv.7} parent=11 // pred_fallthru
          _
        // Predicated region
        $region17: #{double_conv.7} parent=11 // pred_check
          %p124 = pneg %p80
        $region18: #{double_conv.7} parent=11 // pred_check_branch
          %126 = sbr.rel (%p124) target = $region20
        $region19: #{double_conv.7} parent=11 // pred_region
          _
        $region20: #{double_conv.7} parent=11 // pred_fallthru
          _
      $region12: #{double_conv.7} parent=5 // pred_fallthru
        _
      %p127 = scmp.lt.s32.totalorder %s12, 2
      // Predicated region
      $region21: #{double_conv.7} parent=5 // pred_check
        %p128 = pneg %p127
      $region22: #{double_conv.7} parent=5 // pred_check_branch
        %130 = sbr.rel (%p128) target = $region24
      $region23: #{double_conv.7} parent=5 // pred_region
        // Predicated region
        $region25: #{double_conv.7} parent=23 // pred_check
          %p131 = pneg %p32
        $region26: #{double_conv.7} parent=23 // pred_check_branch
          %133 = sbr.rel (%p131) target = $region28
        $region27: #{double_conv.7} parent=23 // pred_region
          %s134 = smul.u32 64, %s12
          %p135 = scmp.lt.s32.totalorder %s134, 127
          %s136 = scalar_select %p135, %s134, 127
          %s137 = smul.addr %s136, 8
          %s138 = scalar_lea.vmem %s0, %s137
          %s139 = smul.u32 64, %s12
        $region28: #{double_conv.7} parent=23 // pred_fallthru
          _
      $region24: #{double_conv.7} parent=5 // pred_fallthru
        _
      %p140 = scmp.le.s32.totalorder 1, %s12
      %p141 = scmp.lt.s32.totalorder %s12, 3
      %p142 = pnand %p140, %p141
      %p143 = pneg %p142
      // Predicated region
      $region29: #{double_conv.7} parent=5 // pred_check
        _
      $region30: #{double_conv.7} parent=5 // pred_check_branch
        %145 = sbr.rel (%p142) target = $region32
      $region31: #{double_conv.7} parent=5 // pred_region
        %s146 = ssub.s32 %s12, 1
        %s147 = smul.u32 64, %s17
        %p148 = scmp.lt.s32.totalorder %s147, 127
        %s149 = scalar_select %p148, %s147, 127
        %s150 = smul.addr %s149, 8
        %s151 = scalar_lea.vmem %s0, %s150
        %p152 = pneg %p38
        %p153 = pneg %p35
        %p154 = pneg %p59
        %p155 = pneg %p56
        %p156 = pneg %p80
        %p157 = pneg %p77
        %p158 = pneg %p106
        %p159 = pneg %p103
        %s160 = sand.u32 %s93, 1
        %s161 = scalar_lea.sflag [#allocation3], %s160
        %s162 = sand.u32 %s93, 1
        %s163 = smul.addr %s162, 512
        %s164 = scalar_lea.vmem [#allocation2], %s163
        %s165 = smul.u32 64, %s17
        %p166 = scmp.lt.s32.totalorder %s165, 127
        %s167 = scalar_select %p166, %s165, 127
        %s168 = smul.addr %s167, 8
        %s169 = scalar_lea.vmem %s0, %s168
        %s170 = smul.u32 64, %s17
        %s171 = smul.u32 64, %s17
        %v172 = vld [vmem:[%s169] sm:$0xff]
        %v173 = vld [vmem:[%s169 + $0x8] sm:$0xff]
        %v174 = vld [vmem:[%s169 + $0x10] sm:$0xff]
        %v175 = vld [vmem:[%s169 + $0x18] sm:$0xff]
        %v176 = vld [vmem:[%s169 + $0x20] sm:$0xff]
        %v177 = vld [vmem:[%s169 + $0x28] sm:$0xff]
        %v178 = vld [vmem:[%s169 + $0x30] sm:$0xff]
        %v179 = vld [vmem:[%s169 + $0x38] sm:$0xff]
        %v180 = vld [vmem:[%s169 + $0x40] sm:$0xff]
        %v181 = vld [vmem:[%s169 + $0x48] sm:$0xff]
        %v182 = vld [vmem:[%s169 + $0x50] sm:$0xff]
        %v183 = vld [vmem:[%s169 + $0x58] sm:$0xff]
        %v184 = vld [vmem:[%s169 + $0x60] sm:$0xff]
        %v185 = vld [vmem:[%s169 + $0x68] sm:$0xff]
        %v186 = vld [vmem:[%s169 + $0x70] sm:$0xff]
        %v187 = vld [vmem:[%s169 + $0x78] sm:$0xff]
        %v188 = vld [vmem:[%s169 + $0x80] sm:$0xff]
        %v189 = vld [vmem:[%s169 + $0x88] sm:$0xff]
        %v190 = vld [vmem:[%s169 + $0x90] sm:$0xff]
        %v191 = vld [vmem:[%s169 + $0x98] sm:$0xff]
        %v192 = vld [vmem:[%s169 + $0xa0] sm:$0xff]
        %v193 = vld [vmem:[%s169 + $0xa8] sm:$0xff]
        %v194 = vld [vmem:[%s169 + $0xb0] sm:$0xff]
        %v195 = vld [vmem:[%s169 + $0xb8] sm:$0xff]
        %v196 = vld [vmem:[%s169 + $0xc0] sm:$0xff]
        %v197 = vld [vmem:[%s169 + $0xc8] sm:$0xff]
        %v198 = vld [vmem:[%s169 + $0xd0] sm:$0xff]
        %v199 = vld [vmem:[%s169 + $0xd8] sm:$0xff]
        %v200 = vld [vmem:[%s169 + $0xe0] sm:$0xff]
        %v201 = vld [vmem:[%s169 + $0xe8] sm:$0xff]
        %v202 = vld [vmem:[%s169 + $0xf0] sm:$0xff]
        %v203 = vld [vmem:[%s169 + $0xf8] sm:$0xff]
        %v204 = vld [vmem:[%s169 + $0x100] sm:$0xff]
        %v205 = vld [vmem:[%s169 + $0x108] sm:$0xff]
        %v206 = vld [vmem:[%s169 + $0x110] sm:$0xff]
        %v207 = vld [vmem:[%s169 + $0x118] sm:$0xff]
        %v208 = vld [vmem:[%s169 + $0x120] sm:$0xff]
        %v209 = vld [vmem:[%s169 + $0x128] sm:$0xff]
        %v210 = vld [vmem:[%s169 + $0x130] sm:$0xff]
        %v211 = vld [vmem:[%s169 + $0x138] sm:$0xff]
        %v212 = vld [vmem:[%s169 + $0x140] sm:$0xff]
        %v213 = vld [vmem:[%s169 + $0x148] sm:$0xff]
        %v214 = vld [vmem:[%s169 + $0x150] sm:$0xff]
        %v215 = vld [vmem:[%s169 + $0x158] sm:$0xff]
        %v216 = vld [vmem:[%s169 + $0x160] sm:$0xff]
        %v217 = vld [vmem:[%s169 + $0x168] sm:$0xff]
        %v218 = vld [vmem:[%s169 + $0x170] sm:$0xff]
        %v219 = vld [vmem:[%s169 + $0x178] sm:$0xff]
        %v220 = vld [vmem:[%s169 + $0x180] sm:$0xff]
        %v221 = vld [vmem:[%s169 + $0x188] sm:$0xff]
        %v222 = vld [vmem:[%s169 + $0x190] sm:$0xff]
        %v223 = vld [vmem:[%s169 + $0x198] sm:$0xff]
        %v224 = vld [vmem:[%s169 + $0x1a0] sm:$0xff]
        %v225 = vld [vmem:[%s169 + $0x1a8] sm:$0xff]
        %v226 = vld [vmem:[%s169 + $0x1b0] sm:$0xff]
        %v227 = vld [vmem:[%s169 + $0x1b8] sm:$0xff]
        %v228 = vld [vmem:[%s169 + $0x1c0] sm:$0xff]
        %v229 = vld [vmem:[%s169 + $0x1c8] sm:$0xff]
        %v230 = vld [vmem:[%s169 + $0x1d0] sm:$0xff]
        %v231 = vld [vmem:[%s169 + $0x1d8] sm:$0xff]
        %v232 = vld [vmem:[%s169 + $0x1e0] sm:$0xff]
        %v233 = vld [vmem:[%s169 + $0x1e8] sm:$0xff]
        %v234 = vld [vmem:[%s169 + $0x1f0] sm:$0xff]
        %v235 = vld [vmem:[%s169 + $0x1f8] sm:$0xff]
        %v236 = vld [vmem:[%s1] sm:$0x1]
        %v238 = vlaneseq
        %v239 = vshrl.u32 %v238, 7
        %v240 = vsub.s32 0, %v239
        %v241 = vrot.slane %v236, %v240
        %v243 = vmul.f32 %v172, %v241
        %v244 = vmul.f32 %v173, %v241
        %v245 = vmul.f32 %v174, %v241
        %v246 = vmul.f32 %v175, %v241
        %v247 = vmul.f32 %v176, %v241
        %v248 = vmul.f32 %v177, %v241
        %v249 = vmul.f32 %v178, %v241
        %v250 = vmul.f32 %v179, %v241
        %v251 = vmul.f32 %v180, %v241
        %v252 = vmul.f32 %v181, %v241
        %v253 = vmul.f32 %v182, %v241
        %v254 = vmul.f32 %v183, %v241
        %v255 = vmul.f32 %v184, %v241
        %v256 = vmul.f32 %v185, %v241
        %v257 = vmul.f32 %v186, %v241
        %v258 = vmul.f32 %v187, %v241
        %v259 = vmul.f32 %v188, %v241
        %v260 = vmul.f32 %v189, %v241
        %v261 = vmul.f32 %v190, %v241
        %v262 = vmul.f32 %v191, %v241
        %v263 = vmul.f32 %v192, %v241
        %v264 = vmul.f32 %v193, %v241
        %v265 = vmul.f32 %v194, %v241
        %v266 = vmul.f32 %v195, %v241
        %v267 = vmul.f32 %v196, %v241
        %v268 = vmul.f32 %v197, %v241
        %v269 = vmul.f32 %v198, %v241
        %v270 = vmul.f32 %v199, %v241
        %v271 = vmul.f32 %v200, %v241
        %v272 = vmul.f32 %v201, %v241
        %v273 = vmul.f32 %v202, %v241
        %v274 = vmul.f32 %v203, %v241
        %v275 = vmul.f32 %v204, %v241
        %v276 = vmul.f32 %v205, %v241
        %v277 = vmul.f32 %v206, %v241
        %v278 = vmul.f32 %v207, %v241
        %v279 = vmul.f32 %v208, %v241
        %v280 = vmul.f32 %v209, %v241
        %v281 = vmul.f32 %v210, %v241
        %v282 = vmul.f32 %v211, %v241
        %v283 = vmul.f32 %v212, %v241
        %v284 = vmul.f32 %v213, %v241
        %v285 = vmul.f32 %v214, %v241
        %v286 = vmul.f32 %v215, %v241
        %v287 = vmul.f32 %v216, %v241
        %v288 = vmul.f32 %v217, %v241
        %v289 = vmul.f32 %v218, %v241
        %v290 = vmul.f32 %v219, %v241
        %v291 = vmul.f32 %v220, %v241
        %v292 = vmul.f32 %v221, %v241
        %v293 = vmul.f32 %v222, %v241
        %v294 = vmul.f32 %v223, %v241
        %v295 = vmul.f32 %v224, %v241
        %v296 = vmul.f32 %v225, %v241
        %v297 = vmul.f32 %v226, %v241
        %v298 = vmul.f32 %v227, %v241
        %v299 = vmul.f32 %v228, %v241
        %v300 = vmul.f32 %v229, %v241
        %v301 = vmul.f32 %v230, %v241
        %v302 = vmul.f32 %v231, %v241
        %v303 = vmul.f32 %v232, %v241
        %v304 = vmul.f32 %v233, %v241
        %v305 = vmul.f32 %v234, %v241
        %v306 = vmul.f32 %v235, %v241
        %v307 = vld [vmem:[%s2] sm:$0x1]
        %v309 = vlaneseq
        %v310 = vshrl.u32 %v309, 7
        %v311 = vsub.s32 0, %v310
        %v312 = vrot.slane %v307, %v311
        %v314 = vadd.f32 %v243, %v312
        %v315 = vadd.f32 %v244, %v312
        %v316 = vadd.f32 %v245, %v312
        %v317 = vadd.f32 %v246, %v312
        %v318 = vadd.f32 %v247, %v312
        %v319 = vadd.f32 %v248, %v312
        %v320 = vadd.f32 %v249, %v312
        %v321 = vadd.f32 %v250, %v312
        %v322 = vadd.f32 %v251, %v312
        %v323 = vadd.f32 %v252, %v312
        %v324 = vadd.f32 %v253, %v312
        %v325 = vadd.f32 %v254, %v312
        %v326 = vadd.f32 %v255, %v312
        %v327 = vadd.f32 %v256, %v312
        %v328 = vadd.f32 %v257, %v312
        %v329 = vadd.f32 %v258, %v312
        %v330 = vadd.f32 %v259, %v312
        %v331 = vadd.f32 %v260, %v312
        %v332 = vadd.f32 %v261, %v312
        %v333 = vadd.f32 %v262, %v312
        %v334 = vadd.f32 %v263, %v312
        %v335 = vadd.f32 %v264, %v312
        %v336 = vadd.f32 %v265, %v312
        %v337 = vadd.f32 %v266, %v312
        %v338 = vadd.f32 %v267, %v312
        %v339 = vadd.f32 %v268, %v312
        %v340 = vadd.f32 %v269, %v312
        %v341 = vadd.f32 %v270, %v312
        %v342 = vadd.f32 %v271, %v312
        %v343 = vadd.f32 %v272, %v312
        %v344 = vadd.f32 %v273, %v312
        %v345 = vadd.f32 %v274, %v312
        %v346 = vadd.f32 %v275, %v312
        %v347 = vadd.f32 %v276, %v312
        %v348 = vadd.f32 %v277, %v312
        %v349 = vadd.f32 %v278, %v312
        %v350 = vadd.f32 %v279, %v312
        %v351 = vadd.f32 %v280, %v312
        %v352 = vadd.f32 %v281, %v312
        %v353 = vadd.f32 %v282, %v312
        %v354 = vadd.f32 %v283, %v312
        %v355 = vadd.f32 %v284, %v312
        %v356 = vadd.f32 %v285, %v312
        %v357 = vadd.f32 %v286, %v312
        %v358 = vadd.f32 %v287, %v312
        %v359 = vadd.f32 %v288, %v312
        %v360 = vadd.f32 %v289, %v312
        %v361 = vadd.f32 %v290, %v312
        %v362 = vadd.f32 %v291, %v312
        %v363 = vadd.f32 %v292, %v312
        %v364 = vadd.f32 %v293, %v312
        %v365 = vadd.f32 %v294, %v312
        %v366 = vadd.f32 %v295, %v312
        %v367 = vadd.f32 %v296, %v312
        %v368 = vadd.f32 %v297, %v312
        %v369 = vadd.f32 %v298, %v312
        %v370 = vadd.f32 %v299, %v312
        %v371 = vadd.f32 %v300, %v312
        %v372 = vadd.f32 %v301, %v312
        %v373 = vadd.f32 %v302, %v312
        %v374 = vadd.f32 %v303, %v312
        %v375 = vadd.f32 %v304, %v312
        %v376 = vadd.f32 %v305, %v312
        %v377 = vadd.f32 %v306, %v312
        %v378 = vmax.f32 %v314, 0.0
        %v379 = vmax.f32 %v315, 0.0
        %v380 = vmax.f32 %v316, 0.0
        %v381 = vmax.f32 %v317, 0.0
        %v382 = vmax.f32 %v318, 0.0
        %v383 = vmax.f32 %v319, 0.0
        %v384 = vmax.f32 %v320, 0.0
        %v385 = vmax.f32 %v321, 0.0
        %v386 = vmax.f32 %v322, 0.0
        %v387 = vmax.f32 %v323, 0.0
        %v388 = vmax.f32 %v324, 0.0
        %v389 = vmax.f32 %v325, 0.0
        %v390 = vmax.f32 %v326, 0.0
        %v391 = vmax.f32 %v327, 0.0
        %v392 = vmax.f32 %v328, 0.0
        %v393 = vmax.f32 %v329, 0.0
        %v394 = vmax.f32 %v330, 0.0
        %v395 = vmax.f32 %v331, 0.0
        %v396 = vmax.f32 %v332, 0.0
        %v397 = vmax.f32 %v333, 0.0
        %v398 = vmax.f32 %v334, 0.0
        %v399 = vmax.f32 %v335, 0.0
        %v400 = vmax.f32 %v336, 0.0
        %v401 = vmax.f32 %v337, 0.0
        %v402 = vmax.f32 %v338, 0.0
        %v403 = vmax.f32 %v339, 0.0
        %v404 = vmax.f32 %v340, 0.0
        %v405 = vmax.f32 %v341, 0.0
        %v406 = vmax.f32 %v342, 0.0
        %v407 = vmax.f32 %v343, 0.0
        %v408 = vmax.f32 %v344, 0.0
        %v409 = vmax.f32 %v345, 0.0
        %v410 = vmax.f32 %v346, 0.0
        %v411 = vmax.f32 %v347, 0.0
        %v412 = vmax.f32 %v348, 0.0
        %v413 = vmax.f32 %v349, 0.0
        %v414 = vmax.f32 %v350, 0.0
        %v415 = vmax.f32 %v351, 0.0
        %v416 = vmax.f32 %v352, 0.0
        %v417 = vmax.f32 %v353, 0.0
        %v418 = vmax.f32 %v354, 0.0
        %v419 = vmax.f32 %v355, 0.0
        %v420 = vmax.f32 %v356, 0.0
        %v421 = vmax.f32 %v357, 0.0
        %v422 = vmax.f32 %v358, 0.0
        %v423 = vmax.f32 %v359, 0.0
        %v424 = vmax.f32 %v360, 0.0
        %v425 = vmax.f32 %v361, 0.0
        %v426 = vmax.f32 %v362, 0.0
        %v427 = vmax.f32 %v363, 0.0
        %v428 = vmax.f32 %v364, 0.0
        %v429 = vmax.f32 %v365, 0.0
        %v430 = vmax.f32 %v366, 0.0
        %v431 = vmax.f32 %v367, 0.0
        %v432 = vmax.f32 %v368, 0.0
        %v433 = vmax.f32 %v369, 0.0
        %v434 = vmax.f32 %v370, 0.0
        %v435 = vmax.f32 %v371, 0.0
        %v436 = vmax.f32 %v372, 0.0
        %v437 = vmax.f32 %v373, 0.0
        %v438 = vmax.f32 %v374, 0.0
        %v439 = vmax.f32 %v375, 0.0
        %v440 = vmax.f32 %v376, 0.0
        %v441 = vmax.f32 %v377, 0.0
        %vm442 = vcmask 64512
        %443 = vst.msk [vmem:[%s164] sm:$0xff] %vm442, %v378
        %444 = vst.msk [vmem:[%s164 + $0x8] sm:$0xff] %vm442, %v379
        %445 = vst.msk [vmem:[%s164 + $0x10] sm:$0xff] %vm442, %v380
        %446 = vst.msk [vmem:[%s164 + $0x18] sm:$0xff] %vm442, %v381
        %447 = vst.msk [vmem:[%s164 + $0x20] sm:$0xff] %vm442, %v382
        %448 = vst.msk [vmem:[%s164 + $0x28] sm:$0xff] %vm442, %v383
        %449 = vst.msk [vmem:[%s164 + $0x30] sm:$0xff] %vm442, %v384
        %450 = vst.msk [vmem:[%s164 + $0x38] sm:$0xff] %vm442, %v385
        %451 = vst.msk [vmem:[%s164 + $0x40] sm:$0xff] %vm442, %v386
        %452 = vst.msk [vmem:[%s164 + $0x48] sm:$0xff] %vm442, %v387
        %453 = vst.msk [vmem:[%s164 + $0x50] sm:$0xff] %vm442, %v388
        %454 = vst.msk [vmem:[%s164 + $0x58] sm:$0xff] %vm442, %v389
        %455 = vst.msk [vmem:[%s164 + $0x60] sm:$0xff] %vm442, %v390
        %456 = vst.msk [vmem:[%s164 + $0x68] sm:$0xff] %vm442, %v391
        %457 = vst.msk [vmem:[%s164 + $0x70] sm:$0xff] %vm442, %v392
        %458 = vst.msk [vmem:[%s164 + $0x78] sm:$0xff] %vm442, %v393
        %459 = vst.msk [vmem:[%s164 + $0x80] sm:$0xff] %vm442, %v394
        %460 = vst.msk [vmem:[%s164 + $0x88] sm:$0xff] %vm442, %v395
        %461 = vst.msk [vmem:[%s164 + $0x90] sm:$0xff] %vm442, %v396
        %462 = vst.msk [vmem:[%s164 + $0x98] sm:$0xff] %vm442, %v397
        %463 = vst.msk [vmem:[%s164 + $0xa0] sm:$0xff] %vm442, %v398
        %464 = vst.msk [vmem:[%s164 + $0xa8] sm:$0xff] %vm442, %v399
        %465 = vst.msk [vmem:[%s164 + $0xb0] sm:$0xff] %vm442, %v400
        %466 = vst.msk [vmem:[%s164 + $0xb8] sm:$0xff] %vm442, %v401
        %467 = vst.msk [vmem:[%s164 + $0xc0] sm:$0xff] %vm442, %v402
        %468 = vst.msk [vmem:[%s164 + $0xc8] sm:$0xff] %vm442, %v403
        %469 = vst.msk [vmem:[%s164 + $0xd0] sm:$0xff] %vm442, %v404
        %470 = vst.msk [vmem:[%s164 + $0xd8] sm:$0xff] %vm442, %v405
        %471 = vst.msk [vmem:[%s164 + $0xe0] sm:$0xff] %vm442, %v406
        %472 = vst.msk [vmem:[%s164 + $0xe8] sm:$0xff] %vm442, %v407
        %473 = vst.msk [vmem:[%s164 + $0xf0] sm:$0xff] %vm442, %v408
        %474 = vst.msk [vmem:[%s164 + $0xf8] sm:$0xff] %vm442, %v409
        %475 = vst.msk [vmem:[%s164 + $0x100] sm:$0xff] %vm442, %v410
        %476 = vst.msk [vmem:[%s164 + $0x108] sm:$0xff] %vm442, %v411
        %477 = vst.msk [vmem:[%s164 + $0x110] sm:$0xff] %vm442, %v412
        %478 = vst.msk [vmem:[%s164 + $0x118] sm:$0xff] %vm442, %v413
        %479 = vst.msk [vmem:[%s164 + $0x120] sm:$0xff] %vm442, %v414
        %480 = vst.msk [vmem:[%s164 + $0x128] sm:$0xff] %vm442, %v415
        %481 = vst.msk [vmem:[%s164 + $0x130] sm:$0xff] %vm442, %v416
        %482 = vst.msk [vmem:[%s164 + $0x138] sm:$0xff] %vm442, %v417
        %483 = vst.msk [vmem:[%s164 + $0x140] sm:$0xff] %vm442, %v418
        %484 = vst.msk [vmem:[%s164 + $0x148] sm:$0xff] %vm442, %v419
        %485 = vst.msk [vmem:[%s164 + $0x150] sm:$0xff] %vm442, %v420
        %486 = vst.msk [vmem:[%s164 + $0x158] sm:$0xff] %vm442, %v421
        %487 = vst.msk [vmem:[%s164 + $0x160] sm:$0xff] %vm442, %v422
        %488 = vst.msk [vmem:[%s164 + $0x168] sm:$0xff] %vm442, %v423
        %489 = vst.msk [vmem:[%s164 + $0x170] sm:$0xff] %vm442, %v424
        %490 = vst.msk [vmem:[%s164 + $0x178] sm:$0xff] %vm442, %v425
        %491 = vst.msk [vmem:[%s164 + $0x180] sm:$0xff] %vm442, %v426
        %492 = vst.msk [vmem:[%s164 + $0x188] sm:$0xff] %vm442, %v427
        %493 = vst.msk [vmem:[%s164 + $0x190] sm:$0xff] %vm442, %v428
        %494 = vst.msk [vmem:[%s164 + $0x198] sm:$0xff] %vm442, %v429
        %495 = vst.msk [vmem:[%s164 + $0x1a0] sm:$0xff] %vm442, %v430
        %496 = vst.msk [vmem:[%s164 + $0x1a8] sm:$0xff] %vm442, %v431
        %497 = vst.msk [vmem:[%s164 + $0x1b0] sm:$0xff] %vm442, %v432
        %498 = vst.msk [vmem:[%s164 + $0x1b8] sm:$0xff] %vm442, %v433
        %499 = vst.msk [vmem:[%s164 + $0x1c0] sm:$0xff] %vm442, %v434
        %500 = vst.msk [vmem:[%s164 + $0x1c8] sm:$0xff] %vm442, %v435
        %501 = vst.msk [vmem:[%s164 + $0x1d0] sm:$0xff] %vm442, %v436
        %502 = vst.msk [vmem:[%s164 + $0x1d8] sm:$0xff] %vm442, %v437
        %503 = vst.msk [vmem:[%s164 + $0x1e0] sm:$0xff] %vm442, %v438
        %504 = vst.msk [vmem:[%s164 + $0x1e8] sm:$0xff] %vm442, %v439
        %505 = vst.msk [vmem:[%s164 + $0x1f0] sm:$0xff] %vm442, %v440
        %506 = vst.msk [vmem:[%s164 + $0x1f8] sm:$0xff] %vm442, %v441
        %s507 = sand.u32 %s93, 1
        %s508 = scalar_lea.sflag [#allocation3], %s507
        %s509 = sand.u32 %s93, 1
        %s510 = smul.addr %s509, 512
        %s511 = scalar_lea.vmem [#allocation2], %s510
        // Predicated region
        $region33: #{double_conv.7} parent=31 // pred_check
          %p512 = pneg %p103
        $region34: #{double_conv.7} parent=31 // pred_check_branch
          %514 = sbr.rel (%p512) target = $region36
        $region35: #{double_conv.7} parent=31 // pred_region
          %s515 = smul.u32 64, %s17
          %s517 = ssub.s32 8192, 8192
          %518 = vsyncadd %s508, %s517
          %s519 = smul.addr %s515, 128
          %s520 = scalar_lea.hbm %s3, %s519
          %s521 = sshll.u32 %s511, 4
          %s522 = int_to_ptr.vmem [resolvable:$true] %s521
          %527 = dma.vmem_to_hbm [thread:$0]  %s522, 8192, %s520, %s508, 128, 128, 8
        $region36: #{double_conv.7} parent=31 // pred_fallthru
          _
      $region32: #{double_conv.7} parent=5 // pred_fallthru
        _
      %p528 = scmp.le.s32.totalorder 2, %s12
      // Predicated region
      $region37: #{double_conv.7} parent=5 // pred_check
        %p529 = pneg %p528
      $region38: #{double_conv.7} parent=5 // pred_check_branch
        %531 = sbr.rel (%p529) target = $region40
      $region39: #{double_conv.7} parent=5 // pred_region
        %s532 = ssub.s32 %s12, 2
        // Predicated region
        $region41: #{double_conv.7} parent=39 // pred_check
          %p533 = pneg %p109
        $region42: #{double_conv.7} parent=39 // pred_check_branch
          %535 = sbr.rel (%p533) target = $region44
        $region43: #{double_conv.7} parent=39 // pred_region
          %s536 = sand.u32 %s94, 1
          %s537 = scalar_lea.sflag [#allocation3], %s536
          %s538 = sand.u32 %s94, 1
          %s539 = smul.addr %s538, 512
          %s540 = scalar_lea.vmem [#allocation2], %s539
          %541 = dma.done %s537, 8192
        $region44: #{double_conv.7} parent=39 // pred_fallthru
          _
      $region40: #{double_conv.7} parent=5 // pred_fallthru
        _
    $region6: #{double_conv.7} parent=1 // loop_footer
      %s16 = sadd.s32 1, %s12
    $region7: #{double_conv.7} parent=1 // loop_footer_branch
      %11 = sbr.rel target = $region3
    $region8: #{double_conv.7} parent=1 // loop_exit
      _
    %542 = vsyncpa [#allocation3], 1
    %s543 = scalar_lea.sflag [#allocation3], 1
    %544 = vsyncpa %s543, 1

// kernel: double_conv.6
$region0: #{double_conv.6}
  #allocation0 [shape = 'u32[]', space=smem, size = 0x4, offset = 0x4, fixed_abs, tag = 'smem constant byte address 0x4 - core index']
  #allocation1 [shape = 'u32[144,128]{1,0:T(1,128)}', space=vmem, size = 0x12000, scoped, tag = 'internal scratch']
  #allocation2 [shape = 'f32[8,8,72]{2,1,0:T(8,128)}', space=vmem, size = 0x8000, scoped, tag = 'scratch operand']
  #allocation3 [shape = 'f32[64,128]{1,0:T(8,128)}', space=vmem, size = 0x8000, scoped, tag = 'scratch operand']
  %s0 = inlined_call_operand.vmem [shape: bf16[2,10,10,10,8], index: 0, kind: input, shape index: {}]
  %s1 = inlined_call_operand.vmem [shape: bf16[3,72,128], index: 1, kind: input, shape index: {}]
  %s2 = inlined_call_operand.vmem [shape: f32[2,8,64,128], index: 2, kind: output, shape index: {0}]
  %s3 = inlined_call_operand.vmem [shape: f32[2,8,8,128], index: 3, kind: output, shape index: {1}]
  %4 = xla_tuple %s2, %s3
  %s5 = sld [smem:[#allocation0]]
  $region57: #{double_conv.6} parent=0
    _
  %s7 = ssub.s32 1, %s5
  %s8 = scalar_select 0, %s7, %s5
  loop: start=0, step=1, limit=50
  $region2: #{double_conv.6} parent=0 // loop_pre_header
    _
  $region3: #{double_conv.6} parent=0 // loop_header
    %s10 = sphi 0, %s14
    %p11 = scmp.ge.s32.totalorder %s10, 50
    %s17 = sphi 0, %s36
    %s18 = sphi 0, %s32
    %s19 = sphi 0, %s28
    %s20 = sphi 0, %s17
    %s21 = sphi 0, %s18
    %s22 = sphi 0, %s19
    %s23 = sphi 0, %s20
    %s24 = sphi 0, %s21
    %s25 = sphi 0, %s22
    %s43 = sphi 0, %s45
    %s46 = sphi 0, %s43
    %s47 = sphi 0, %s46
    %s63 = sphi 0, %s47
    %s69 = sphi 0, %s71
    %s72 = sphi 0, %s69
    %s73 = sphi 0, %s72
    %s89 = sphi 0, %s73
    %s97 = sphi 0, %s99
    %s100 = sphi 0, %s97
    %s101 = sphi 0, %s100
    %s117 = sphi 0, %s101
    %s125 = sphi 0, %s127
    %s128 = sphi 0, %s125
    %s129 = sphi 0, %s128
    %s145 = sphi 0, %s129
  $region4: #{double_conv.6} parent=0 // loop_header_branch
    %13 = sbr.rel (%p11) target = $region8
  $region5: #{double_conv.6} parent=0 // loop_body
    %s15 = ssub.s32 %s10, 1
    %s16 = ssub.s32 %s10, 2
    %s26 = sadd.s32 1, %s19
    %p27 = scmp.ge.s32.totalorder %s26, 3
    %s28 = scalar_select %p27, 0, %s26
    %s29 = sadd.s32 1, %s18
    %s30 = scalar_select %p27, %s29, %s18
    %p31 = scmp.ge.s32.totalorder %s30, 8
    %s32 = scalar_select %p31, 0, %s30
    %s33 = sadd.s32 1, %s17
    %s34 = scalar_select %p31, %s33, %s17
    %p35 = scmp.ge.s32.totalorder %s34, 2
    %s36 = scalar_select %p35, 0, %s34
    %s37 = sadd.s32 %s18, %s19
    %s38 = sadd.s32 %s32, %s28
    %s39 = ssub.s32 %s17, %s36
    %s40 = ssub.s32 %s37, %s38
    %s41 = sor.u32 %s39, %s40
    %p42 = scmp.eq.s32.totalorder %s41, 0
    %s44 = sadd.s32 %s43, 1
    %s45 = scalar_select %p42, %s43, %s44
    %p48 = pneg %p42
    %p49 = scmp.eq.s32.totalorder %s10, 47
    %p50 = por %p48, %p49
    %p51 = scmp.ne.s32.totalorder %s43, %s46
    %p52 = scmp.eq.s32.totalorder %s10, 0
    %p53 = por %p51, %p52
    %p54 = scmp.ne.s32.totalorder %s43, %s46
    %p55 = scmp.eq.s32.totalorder %s15, 47
    %p56 = por %p54, %p55
    %p57 = scmp.ne.s32.totalorder %s46, %s47
    %p58 = scmp.eq.s32.totalorder %s15, 0
    %p59 = por %p57, %p58
    %p60 = scmp.ne.s32.totalorder %s46, %s47
    %p61 = scmp.eq.s32.totalorder %s16, 47
    %p62 = por %p60, %p61
    %p64 = scmp.ne.s32.totalorder %s47, %s63
    %p65 = scmp.eq.s32.totalorder %s16, 0
    %p66 = por %p64, %p65
    %s67 = ssub.s32 %s19, %s28
    %p68 = scmp.eq.s32.totalorder %s67, 0
    %s70 = sadd.s32 %s69, 1
    %s71 = scalar_select %p68, %s69, %s70
    %p74 = pneg %p68
    %p75 = scmp.eq.s32.totalorder %s10, 47
    %p76 = por %p74, %p75
    %p77 = scmp.ne.s32.totalorder %s69, %s72
    %p78 = scmp.eq.s32.totalorder %s10, 0
    %p79 = por %p77, %p78
    %p80 = scmp.ne.s32.totalorder %s69, %s72
    %p81 = scmp.eq.s32.totalorder %s15, 47
    %p82 = por %p80, %p81
    %p83 = scmp.ne.s32.totalorder %s72, %s73
    %p84 = scmp.eq.s32.totalorder %s15, 0
    %p85 = por %p83, %p84
    %p86 = scmp.ne.s32.totalorder %s72, %s73
    %p87 = scmp.eq.s32.totalorder %s16, 47
    %p88 = por %p86, %p87
    %p90 = scmp.ne.s32.totalorder %s73, %s89
    %p91 = scmp.eq.s32.totalorder %s16, 0
    %p92 = por %p90, %p91
    %s93 = ssub.s32 %s17, %s36
    %s94 = ssub.s32 %s18, %s32
    %s95 = sor.u32 %s93, %s94
    %p96 = scmp.eq.s32.totalorder %s95, 0
    %s98 = sadd.s32 %s97, 1
    %s99 = scalar_select %p96, %s97, %s98
    %p102 = pneg %p96
    %p103 = scmp.eq.s32.totalorder %s10, 47
    %p104 = por %p102, %p103
    %p105 = scmp.ne.s32.totalorder %s97, %s100
    %p106 = scmp.eq.s32.totalorder %s10, 0
    %p107 = por %p105, %p106
    %p108 = scmp.ne.s32.totalorder %s97, %s100
    %p109 = scmp.eq.s32.totalorder %s15, 47
    %p110 = por %p108, %p109
    %p111 = scmp.ne.s32.totalorder %s100, %s101
    %p112 = scmp.eq.s32.totalorder %s15, 0
    %p113 = por %p111, %p112
    %p114 = scmp.ne.s32.totalorder %s100, %s101
    %p115 = scmp.eq.s32.totalorder %s16, 47
    %p116 = por %p114, %p115
    %p118 = scmp.ne.s32.totalorder %s101, %s117
    %p119 = scmp.eq.s32.totalorder %s16, 0
    %p120 = por %p118, %p119
    %s121 = ssub.s32 %s17, %s36
    %s122 = ssub.s32 %s18, %s32
    %s123 = sor.u32 %s121, %s122
    %p124 = scmp.eq.s32.totalorder %s123, 0
    %s126 = sadd.s32 %s125, 1
    %s127 = scalar_select %p124, %s125, %s126
    %p130 = pneg %p124
    %p131 = scmp.eq.s32.totalorder %s10, 47
    %p132 = por %p130, %p131
    %p133 = scmp.ne.s32.totalorder %s125, %s128
    %p134 = scmp.eq.s32.totalorder %s10, 0
    %p135 = por %p133, %p134
    %p136 = scmp.ne.s32.totalorder %s125, %s128
    %p137 = scmp.eq.s32.totalorder %s15, 47
    %p138 = por %p136, %p137
    %p139 = scmp.ne.s32.totalorder %s128, %s129
    %p140 = scmp.eq.s32.totalorder %s15, 0
    %p141 = por %p139, %p140
    %p142 = scmp.ne.s32.totalorder %s128, %s129
    %p143 = scmp.eq.s32.totalorder %s16, 47
    %p144 = por %p142, %p143
    %p146 = scmp.ne.s32.totalorder %s129, %s145
    %p147 = scmp.eq.s32.totalorder %s16, 0
    %p148 = por %p146, %p147
    %p149 = scmp.le.s32.totalorder 1, %s10
    %p150 = scmp.lt.s32.totalorder %s10, 49
    %p151 = pnand %p149, %p150
    %p152 = pneg %p151
    // Predicated region
    $region9: #{double_conv.6} parent=5 // pred_check
      _
    $region10: #{double_conv.6} parent=5 // pred_check_branch
      %154 = sbr.rel (%p151) target = $region12
    $region11: #{double_conv.6} parent=5 // pred_region
      %s155 = ssub.s32 %s10, 1
    $region12: #{double_conv.6} parent=5 // pred_fallthru
      _
    %p156 = scmp.lt.s32.totalorder %s10, 48
    // Predicated region
    $region13: #{double_conv.6} parent=5 // pred_check
      %p157 = pneg %p156
    $region14: #{double_conv.6} parent=5 // pred_check_branch
      %159 = sbr.rel (%p157) target = $region16
    $region15: #{double_conv.6} parent=5 // pred_region
      // Predicated region
      $region17: #{double_conv.6} parent=15 // pred_check
        %p160 = pneg %p53
      $region18: #{double_conv.6} parent=15 // pred_check_branch
        %162 = sbr.rel (%p160) target = $region20
      $region19: #{double_conv.6} parent=15 // pred_region
        %s163 = sadd.s32 %s18, %s19
        %p164 = scmp.lt.s32.totalorder %s17, 1
        %s165 = scalar_select %p164, %s17, 1
        %p166 = scmp.lt.s32.totalorder %s163, 9
        %s167 = scalar_select %p166, %s163, 9
        %s168 = smul.addr %s167, 20
        %s169 = smul.addr %s165, 200
        %s170 = sadd.s32 %s168, %s169
        %s171 = smul.addr %s170, 4
        %s172 = scalar_lea.vmem %s0, %s171
        %s173 = sadd.s32 %s18, %s19
      $region20: #{double_conv.6} parent=15 // pred_fallthru
        _
      // Predicated region
      $region21: #{double_conv.6} parent=15 // pred_check
        %p174 = pneg %p79
      $region22: #{double_conv.6} parent=15 // pred_check_branch
        %176 = sbr.rel (%p174) target = $region24
      $region23: #{double_conv.6} parent=15 // pred_region
        %p177 = scmp.lt.s32.totalorder %s19, 2
        %s178 = scalar_select %p177, %s19, 2
        %s179 = smul.addr %s178, 9
        %s180 = smul.addr %s179, 4
        %s181 = scalar_lea.vmem %s1, %s180
      $region24: #{double_conv.6} parent=15 // pred_fallthru
        _
    $region16: #{double_conv.6} parent=5 // pred_fallthru
      _
    %p182 = scmp.le.s32.totalorder 1, %s10
    %p183 = scmp.lt.s32.totalorder %s10, 49
    %p184 = pnand %p182, %p183
    %p185 = pneg %p184
    // Predicated region
    $region25: #{double_conv.6} parent=5 // pred_check
      _
    $region26: #{double_conv.6} parent=5 // pred_check_branch
      %187 = sbr.rel (%p184) target = $region28
    $region27: #{double_conv.6} parent=5 // pred_region
      %s188 = ssub.s32 %s10, 1
      %s189 = sadd.s32 %s21, %s22
      %p190 = scmp.lt.s32.totalorder %s20, 1
      %s191 = scalar_select %p190, %s20, 1
      %p192 = scmp.lt.s32.totalorder %s189, 9
      %s193 = scalar_select %p192, %s189, 9
      %s194 = smul.addr %s193, 20
      %s195 = smul.addr %s191, 200
      %s196 = sadd.s32 %s194, %s195
      %s197 = smul.addr %s196, 4
      %s198 = scalar_lea.vmem %s0, %s197
      %p199 = pneg %p59
      %p200 = pneg %p56
      %p201 = scmp.lt.s32.totalorder %s22, 2
      %s202 = scalar_select %p201, %s22, 2
      %s203 = smul.addr %s202, 9
      %s204 = smul.addr %s203, 4
      %s205 = scalar_lea.vmem %s1, %s204
      %p206 = pneg %p85
      %p207 = pneg %p82
      %p208 = pneg %p113
      %p209 = pneg %p110
      %p210 = scmp.lt.s32.totalorder %s20, 1
      %s211 = scalar_select %p210, %s20, 1
      %p212 = scmp.lt.s32.totalorder %s21, 7
      %s213 = scalar_select %p212, %s21, 7
      %s214 = smul.addr %s213, 8
      %s215 = smul.addr %s211, 64
      %s216 = sadd.s32 %s214, %s215
      %s217 = smul.addr %s216, 8
      %s218 = scalar_lea.vmem %s2, %s217
      %p219 = pneg %p141
      %p220 = pneg %p138
      %p221 = scmp.lt.s32.totalorder %s20, 1
      %s222 = scalar_select %p221, %s20, 1
      %p223 = scmp.lt.s32.totalorder %s21, 7
      %s224 = scalar_select %p223, %s21, 7
      %s225 = smul.addr %s222, 8
      %s226 = sadd.s32 %s224, %s225
      %s227 = smul.addr %s226, 8
      %s228 = scalar_lea.vmem %s3, %s227
      %s229 = sadd.s32 %s21, %s22
      %p230 = scmp.lt.s32.totalorder %s20, 1
      %s231 = scalar_select %p230, %s20, 1
      %p232 = scmp.lt.s32.totalorder %s229, 9
      %s233 = scalar_select %p232, %s229, 9
      %s234 = smul.addr %s233, 20
      %s235 = smul.addr %s231, 200
      %s236 = sadd.s32 %s234, %s235
      %s237 = smul.addr %s236, 4
      %s238 = scalar_lea.vmem %s0, %s237
      %s239 = sadd.s32 %s21, %s22
      %p240 = scmp.lt.s32.totalorder %s22, 2
      %s241 = scalar_select %p240, %s22, 2
      %s242 = smul.addr %s241, 9
      %s243 = smul.addr %s242, 4
      %s244 = scalar_lea.vmem %s1, %s243
      %p245 = scmp.lt.s32.totalorder %s20, 1
      %s246 = scalar_select %p245, %s20, 1
      %p247 = scmp.lt.s32.totalorder %s21, 7
      %s248 = scalar_select %p247, %s21, 7
      %s249 = smul.addr %s248, 8
      %s250 = smul.addr %s246, 64
      %s251 = sadd.s32 %s249, %s250
      %s252 = smul.addr %s251, 8
      %s253 = scalar_lea.vmem %s2, %s252
      %p254 = scmp.lt.s32.totalorder %s20, 1
      %s255 = scalar_select %p254, %s20, 1
      %p256 = scmp.lt.s32.totalorder %s21, 7
      %s257 = scalar_select %p256, %s21, 7
      %s258 = smul.addr %s255, 8
      %s259 = sadd.s32 %s257, %s258
      %s260 = smul.addr %s259, 8
      %s261 = scalar_lea.vmem %s3, %s260
      %p263 = scmp.eq.s32.totalorder %s22, 0
      // Predicated region
      $region29: #{double_conv.6} parent=27 // pred_check
        %p264 = pneg %p263
      $region30: #{double_conv.6} parent=27 // pred_check_branch
        %266 = sbr.rel (%p264) target = $region32
      $region31: #{double_conv.6} parent=27 // pred_region
        %267 = vst [vmem:[#allocation3] sm:$0xff] 0.0
        %268 = vst [vmem:[#allocation3 + $0x8] sm:$0xff] 0.0
        %269 = vst [vmem:[#allocation3 + $0x10] sm:$0xff] 0.0
        %270 = vst [vmem:[#allocation3 + $0x18] sm:$0xff] 0.0
        %271 = vst [vmem:[#allocation3 + $0x20] sm:$0xff] 0.0
        %272 = vst [vmem:[#allocation3 + $0x28] sm:$0xff] 0.0
        %273 = vst [vmem:[#allocation3 + $0x30] sm:$0xff] 0.0
        %274 = vst [vmem:[#allocation3 + $0x38] sm:$0xff] 0.0
      $region32: #{double_conv.6} parent=27 // pred_fallthru
        _
      %v275 = vld [vmem:[%s238] sm:$0xf]
      %v276 = vld [vmem:[%s238 + $0x4] sm:$0x1]
      %v277 = vld [vmem:[%s238 + $0x8] sm:$0xf]
      %v278 = vld [vmem:[%s238 + $0xc] sm:$0x1]
      %v279 = vld [vmem:[%s238 + $0x10] sm:$0xf]
      %v280 = vld [vmem:[%s238 + $0x14] sm:$0x1]
      %v281 = vld [vmem:[%s238 + $0x18] sm:$0xf]
      %v282 = vld [vmem:[%s238 + $0x1c] sm:$0x1]
      %v283 = vld [vmem:[%s238 + $0x20] sm:$0xf]
      %v284 = vld [vmem:[%s238 + $0x24] sm:$0x1]
      %v285 = vld [vmem:[%s238 + $0x28] sm:$0xf]
      %v286 = vld [vmem:[%s238 + $0x2c] sm:$0x1]
      %v287 = vld [vmem:[%s238 + $0x30] sm:$0xf]
      %v288 = vld [vmem:[%s238 + $0x34] sm:$0x1]
      %v289 = vld [vmem:[%s238 + $0x38] sm:$0xf]
      %v290 = vld [vmem:[%s238 + $0x3c] sm:$0x1]
      %v291 = vld [vmem:[%s238 + $0x40] sm:$0xf]
      %v292 = vld [vmem:[%s238 + $0x44] sm:$0x1]
      %v293 = vld [vmem:[%s238 + $0x48] sm:$0xf]
      %v294 = vld [vmem:[%s238 + $0x4c] sm:$0x1]
      %v295 = vunpack.c.l.bf16 %v275
      %v296 = vunpack.c.l.bf16 %v276
      %v297 = vunpack.c.l.bf16 %v277
      %v298 = vunpack.c.l.bf16 %v278
      %v299 = vunpack.c.l.bf16 %v279
      %v300 = vunpack.c.l.bf16 %v280
      %v301 = vunpack.c.l.bf16 %v281
      %v302 = vunpack.c.l.bf16 %v282
      %v303 = vunpack.c.l.bf16 %v283
      %v304 = vunpack.c.l.bf16 %v284
      %v305 = vunpack.c.l.bf16 %v285
      %v306 = vunpack.c.l.bf16 %v286
      %v307 = vunpack.c.l.bf16 %v287
      %v308 = vunpack.c.l.bf16 %v288
      %v309 = vunpack.c.l.bf16 %v289
      %v310 = vunpack.c.l.bf16 %v290
      %v311 = vunpack.c.l.bf16 %v291
      %v312 = vunpack.c.l.bf16 %v292
      %v313 = vunpack.c.l.bf16 %v293
      %v314 = vunpack.c.l.bf16 %v294
      %vm315 = vcmask 64512
      %316 = vst.msk [vmem:[#allocation2] sm:$0xff] %vm315, %v295
      %317 = vst.msk [vmem:[#allocation2 + $0x8] sm:$0xff] %vm315, %v297
      %318 = vst.msk [vmem:[#allocation2 + $0x10] sm:$0xff] %vm315, %v299
      %319 = vst.msk [vmem:[#allocation2 + $0x18] sm:$0xff] %vm315, %v301
      %320 = vst.msk [vmem:[#allocation2 + $0x20] sm:$0xff] %vm315, %v303
      %321 = vst.msk [vmem:[#allocation2 + $0x28] sm:$0xff] %vm315, %v305
      %322 = vst.msk [vmem:[#allocation2 + $0x30] sm:$0xff] %vm315, %v307
      %323 = vst.msk [vmem:[#allocation2 + $0x38] sm:$0xff] %vm315, %v309
      %340 = vrot.lane.b32.xlu0 %v295, 8
      %v341 = vpop.permute.xlu0 %340
      %342 = vrot.lane.b32.xlu0 %v296, 8
      %v343 = vpop.permute.xlu0 %342
      %344 = vrot.lane.b32.xlu0 %v297, 8
      %v345 = vpop.permute.xlu0 %344
      %346 = vrot.lane.b32.xlu0 %v298, 8
      %v347 = vpop.permute.xlu0 %346
      %348 = vrot.lane.b32.xlu0 %v299, 8
      %v349 = vpop.permute.xlu0 %348
      %350 = vrot.lane.b32.xlu0 %v300, 8
      %v351 = vpop.permute.xlu0 %350
      %352 = vrot.lane.b32.xlu0 %v301, 8
      %v353 = vpop.permute.xlu0 %352
      %354 = vrot.lane.b32.xlu0 %v302, 8
      %v355 = vpop.permute.xlu0 %354
      %356 = vrot.lane.b32.xlu0 %v303, 8
      %v357 = vpop.permute.xlu0 %356
      %358 = vrot.lane.b32.xlu0 %v304, 8
      %v359 = vpop.permute.xlu0 %358
      %360 = vrot.lane.b32.xlu0 %v305, 8
      %v361 = vpop.permute.xlu0 %360
      %362 = vrot.lane.b32.xlu0 %v306, 8
      %v363 = vpop.permute.xlu0 %362
      %364 = vrot.lane.b32.xlu0 %v307, 8
      %v365 = vpop.permute.xlu0 %364
      %366 = vrot.lane.b32.xlu0 %v308, 8
      %v367 = vpop.permute.xlu0 %366
      %368 = vrot.lane.b32.xlu0 %v309, 8
      %v369 = vpop.permute.xlu0 %368
      %370 = vrot.lane.b32.xlu0 %v310, 8
      %v371 = vpop.permute.xlu0 %370
      %vm388 = vcmask 130113
      %389 = vst.msk [vmem:[#allocation2 - $0x1] sm:$0xfe] %vm388, %v341
      %vm390 = vcmask 122944
      %391 = vst.msk [vmem:[#allocation2 + $0x7] sm:$0x1] %vm390, %v343
      %392 = vst.msk [vmem:[#allocation2 + $0x7] sm:$0xfe] %vm388, %v345
      %393 = vst.msk [vmem:[#allocation2 + $0xf] sm:$0x1] %vm390, %v347
      %394 = vst.msk [vmem:[#allocation2 + $0xf] sm:$0xfe] %vm388, %v349
      %395 = vst.msk [vmem:[#allocation2 + $0x17] sm:$0x1] %vm390, %v351
      %396 = vst.msk [vmem:[#allocation2 + $0x17] sm:$0xfe] %vm388, %v353
      %397 = vst.msk [vmem:[#allocation2 + $0x1f] sm:$0x1] %vm390, %v355
      %398 = vst.msk [vmem:[#allocation2 + $0x1f] sm:$0xfe] %vm388, %v357
      %399 = vst.msk [vmem:[#allocation2 + $0x27] sm:$0x1] %vm390, %v359
      %400 = vst.msk [vmem:[#allocation2 + $0x27] sm:$0xfe] %vm388, %v361
      %401 = vst.msk [vmem:[#allocation2 + $0x2f] sm:$0x1] %vm390, %v363
      %402 = vst.msk [vmem:[#allocation2 + $0x2f] sm:$0xfe] %vm388, %v365
      %403 = vst.msk [vmem:[#allocation2 + $0x37] sm:$0x1] %vm390, %v367
      %404 = vst.msk [vmem:[#allocation2 + $0x37] sm:$0xfe] %vm388, %v369
      %405 = vst.msk [vmem:[#allocation2 + $0x3f] sm:$0x1] %vm390, %v371
      %406 = vrot.lane.b32.xlu0 %v295, 16
      %v407 = vpop.permute.xlu0 %406
      %408 = vrot.lane.b32.xlu0 %v296, 16
      %v409 = vpop.permute.xlu0 %408
      %410 = vrot.lane.b32.xlu0 %v297, 16
      %v411 = vpop.permute.xlu0 %410
      %412 = vrot.lane.b32.xlu0 %v298, 16
      %v413 = vpop.permute.xlu0 %412
      %414 = vrot.lane.b32.xlu0 %v299, 16
      %v415 = vpop.permute.xlu0 %414
      %416 = vrot.lane.b32.xlu0 %v300, 16
      %v417 = vpop.permute.xlu0 %416
      %418 = vrot.lane.b32.xlu0 %v301, 16
      %v419 = vpop.permute.xlu0 %418
      %420 = vrot.lane.b32.xlu0 %v302, 16
      %v421 = vpop.permute.xlu0 %420
      %422 = vrot.lane.b32.xlu0 %v303, 16
      %v423 = vpop.permute.xlu0 %422
      %424 = vrot.lane.b32.xlu0 %v304, 16
      %v425 = vpop.permute.xlu0 %424
      %426 = vrot.lane.b32.xlu0 %v305, 16
      %v427 = vpop.permute.xlu0 %426
      %428 = vrot.lane.b32.xlu0 %v306, 16
      %v429 = vpop.permute.xlu0 %428
      %430 = vrot.lane.b32.xlu0 %v307, 16
      %v431 = vpop.permute.xlu0 %430
      %432 = vrot.lane.b32.xlu0 %v308, 16
      %v433 = vpop.permute.xlu0 %432
      %434 = vrot.lane.b32.xlu0 %v309, 16
      %v435 = vpop.permute.xlu0 %434
      %436 = vrot.lane.b32.xlu0 %v310, 16
      %v437 = vpop.permute.xlu0 %436
      %vm454 = vcmask 195714
      %455 = vst.msk [vmem:[#allocation2 - $0x2] sm:$0xfc] %vm454, %v407
      %vm456 = vcmask 189568
      %457 = vst.msk [vmem:[#allocation2 + $0x6] sm:$0x3] %vm456, %v409
      %458 = vst.msk [vmem:[#allocation2 + $0x6] sm:$0xfc] %vm454, %v411
      %459 = vst.msk [vmem:[#allocation2 + $0xe] sm:$0x3] %vm456, %v413
      %460 = vst.msk [vmem:[#allocation2 + $0xe] sm:$0xfc] %vm454, %v415
      %461 = vst.msk [vmem:[#allocation2 + $0x16] sm:$0x3] %vm456, %v417
      %462 = vst.msk [vmem:[#allocation2 + $0x16] sm:$0xfc] %vm454, %v419
      %463 = vst.msk [vmem:[#allocation2 + $0x1e] sm:$0x3] %vm456, %v421
      %464 = vst.msk [vmem:[#allocation2 + $0x1e] sm:$0xfc] %vm454, %v423
      %465 = vst.msk [vmem:[#allocation2 + $0x26] sm:$0x3] %vm456, %v425
      %466 = vst.msk [vmem:[#allocation2 + $0x26] sm:$0xfc] %vm454, %v427
      %467 = vst.msk [vmem:[#allocation2 + $0x2e] sm:$0x3] %vm456, %v429
      %468 = vst.msk [vmem:[#allocation2 + $0x2e] sm:$0xfc] %vm454, %v431
      %469 = vst.msk [vmem:[#allocation2 + $0x36] sm:$0x3] %vm456, %v433
      %470 = vst.msk [vmem:[#allocation2 + $0x36] sm:$0xfc] %vm454, %v435
      %471 = vst.msk [vmem:[#allocation2 + $0x3e] sm:$0x3] %vm456, %v437
      %473 = vrot.lane.b32.xlu0 %v297, 24
      %v474 = vpop.permute.xlu0 %473
      %475 = vrot.lane.b32.xlu0 %v299, 24
      %v476 = vpop.permute.xlu0 %475
      %477 = vrot.lane.b32.xlu0 %v301, 24
      %v478 = vpop.permute.xlu0 %477
      %479 = vrot.lane.b32.xlu0 %v303, 24
      %v480 = vpop.permute.xlu0 %479
      %481 = vrot.lane.b32.xlu0 %v305, 24
      %v482 = vpop.permute.xlu0 %481
      %483 = vrot.lane.b32.xlu0 %v307, 24
      %v484 = vpop.permute.xlu0 %483
      %485 = vrot.lane.b32.xlu0 %v309, 24
      %v486 = vpop.permute.xlu0 %485
      %487 = vrot.lane.b32.xlu0 %v311, 24
      %v488 = vpop.permute.xlu0 %487
      %vm497 = vcmask 261312
      %498 = vst.msk [vmem:[#allocation2] sm:$0xff] %vm497, %v474
      %499 = vst.msk [vmem:[#allocation2 + $0x8] sm:$0xff] %vm497, %v476
      %500 = vst.msk [vmem:[#allocation2 + $0x10] sm:$0xff] %vm497, %v478
      %501 = vst.msk [vmem:[#allocation2 + $0x18] sm:$0xff] %vm497, %v480
      %502 = vst.msk [vmem:[#allocation2 + $0x20] sm:$0xff] %vm497, %v482
      %503 = vst.msk [vmem:[#allocation2 + $0x28] sm:$0xff] %vm497, %v484
      %504 = vst.msk [vmem:[#allocation2 + $0x30] sm:$0xff] %vm497, %v486
      %505 = vst.msk [vmem:[#allocation2 + $0x38] sm:$0xff] %vm497, %v488
      %507 = vrot.lane.b32.xlu0 %v297, 32
      %v508 = vpop.permute.xlu0 %507
      %509 = vrot.lane.b32.xlu0 %v298, 32
      %v510 = vpop.permute.xlu0 %509
      %511 = vrot.lane.b32.xlu0 %v299, 32
      %v512 = vpop.permute.xlu0 %511
      %513 = vrot.lane.b32.xlu0 %v300, 32
      %v514 = vpop.permute.xlu0 %513
      %515 = vrot.lane.b32.xlu0 %v301, 32
      %v516 = vpop.permute.xlu0 %515
      %517 = vrot.lane.b32.xlu0 %v302, 32
      %v518 = vpop.permute.xlu0 %517
      %519 = vrot.lane.b32.xlu0 %v303, 32
      %v520 = vpop.permute.xlu0 %519
      %521 = vrot.lane.b32.xlu0 %v304, 32
      %v522 = vpop.permute.xlu0 %521
      %523 = vrot.lane.b32.xlu0 %v305, 32
      %v524 = vpop.permute.xlu0 %523
      %525 = vrot.lane.b32.xlu0 %v306, 32
      %v526 = vpop.permute.xlu0 %525
      %527 = vrot.lane.b32.xlu0 %v307, 32
      %v528 = vpop.permute.xlu0 %527
      %529 = vrot.lane.b32.xlu0 %v308, 32
      %v530 = vpop.permute.xlu0 %529
      %531 = vrot.lane.b32.xlu0 %v309, 32
      %v532 = vpop.permute.xlu0 %531
      %533 = vrot.lane.b32.xlu0 %v310, 32
      %v534 = vpop.permute.xlu0 %533
      %535 = vrot.lane.b32.xlu0 %v311, 32
      %v536 = vpop.permute.xlu0 %535
      %537 = vrot.lane.b32.xlu0 %v312, 32
      %v538 = vpop.permute.xlu0 %537
      %vm555 = vcmask 326913
      %556 = vst.msk [vmem:[#allocation2 - $0x1] sm:$0xfe] %vm555, %v508
      %vm557 = vcmask 319744
      %558 = vst.msk [vmem:[#allocation2 + $0x7] sm:$0x1] %vm557, %v510
      %559 = vst.msk [vmem:[#allocation2 + $0x7] sm:$0xfe] %vm555, %v512
      %560 = vst.msk [vmem:[#allocation2 + $0xf] sm:$0x1] %vm557, %v514
      %561 = vst.msk [vmem:[#allocation2 + $0xf] sm:$0xfe] %vm555, %v516
      %562 = vst.msk [vmem:[#allocation2 + $0x17] sm:$0x1] %vm557, %v518
      %563 = vst.msk [vmem:[#allocation2 + $0x17] sm:$0xfe] %vm555, %v520
      %564 = vst.msk [vmem:[#allocation2 + $0x1f] sm:$0x1] %vm557, %v522
      %565 = vst.msk [vmem:[#allocation2 + $0x1f] sm:$0xfe] %vm555, %v524
      %566 = vst.msk [vmem:[#allocation2 + $0x27] sm:$0x1] %vm557, %v526
      %567 = vst.msk [vmem:[#allocation2 + $0x27] sm:$0xfe] %vm555, %v528
      %568 = vst.msk [vmem:[#allocation2 + $0x2f] sm:$0x1] %vm557, %v530
      %569 = vst.msk [vmem:[#allocation2 + $0x2f] sm:$0xfe] %vm555, %v532
      %570 = vst.msk [vmem:[#allocation2 + $0x37] sm:$0x1] %vm557, %v534
      %571 = vst.msk [vmem:[#allocation2 + $0x37] sm:$0xfe] %vm555, %v536
      %572 = vst.msk [vmem:[#allocation2 + $0x3f] sm:$0x1] %vm557, %v538
      %573 = vrot.lane.b32.xlu0 %v297, 40
      %v574 = vpop.permute.xlu0 %573
      %575 = vrot.lane.b32.xlu0 %v298, 40
      %v576 = vpop.permute.xlu0 %575
      %577 = vrot.lane.b32.xlu0 %v299, 40
      %v578 = vpop.permute.xlu0 %577
      %579 = vrot.lane.b32.xlu0 %v300, 40
      %v580 = vpop.permute.xlu0 %579
      %581 = vrot.lane.b32.xlu0 %v301, 40
      %v582 = vpop.permute.xlu0 %581
      %583 = vrot.lane.b32.xlu0 %v302, 40
      %v584 = vpop.permute.xlu0 %583
      %585 = vrot.lane.b32.xlu0 %v303, 40
      %v586 = vpop.permute.xlu0 %585
      %587 = vrot.lane.b32.xlu0 %v304, 40
      %v588 = vpop.permute.xlu0 %587
      %589 = vrot.lane.b32.xlu0 %v305, 40
      %v590 = vpop.permute.xlu0 %589
      %591 = vrot.lane.b32.xlu0 %v306, 40
      %v592 = vpop.permute.xlu0 %591
      %593 = vrot.lane.b32.xlu0 %v307, 40
      %v594 = vpop.permute.xlu0 %593
      %595 = vrot.lane.b32.xlu0 %v308, 40
      %v596 = vpop.permute.xlu0 %595
      %597 = vrot.lane.b32.xlu0 %v309, 40
      %v598 = vpop.permute.xlu0 %597
      %599 = vrot.lane.b32.xlu0 %v310, 40
      %v600 = vpop.permute.xlu0 %599
      %601 = vrot.lane.b32.xlu0 %v311, 40
      %v602 = vpop.permute.xlu0 %601
      %603 = vrot.lane.b32.xlu0 %v312, 40
      %v604 = vpop.permute.xlu0 %603
      %vm621 = vcmask 392514
      %622 = vst.msk [vmem:[#allocation2 - $0x2] sm:$0xfc] %vm621, %v574
      %vm623 = vcmask 386368
      %624 = vst.msk [vmem:[#allocation2 + $0x6] sm:$0x3] %vm623, %v576
      %625 = vst.msk [vmem:[#allocation2 + $0x6] sm:$0xfc] %vm621, %v578
      %626 = vst.msk [vmem:[#allocation2 + $0xe] sm:$0x3] %vm623, %v580
      %627 = vst.msk [vmem:[#allocation2 + $0xe] sm:$0xfc] %vm621, %v582
      %628 = vst.msk [vmem:[#allocation2 + $0x16] sm:$0x3] %vm623, %v584
      %629 = vst.msk [vmem:[#allocation2 + $0x16] sm:$0xfc] %vm621, %v586
      %630 = vst.msk [vmem:[#allocation2 + $0x1e] sm:$0x3] %vm623, %v588
      %631 = vst.msk [vmem:[#allocation2 + $0x1e] sm:$0xfc] %vm621, %v590
      %632 = vst.msk [vmem:[#allocation2 + $0x26] sm:$0x3] %vm623, %v592
      %633 = vst.msk [vmem:[#allocation2 + $0x26] sm:$0xfc] %vm621, %v594
      %634 = vst.msk [vmem:[#allocation2 + $0x2e] sm:$0x3] %vm623, %v596
      %635 = vst.msk [vmem:[#allocation2 + $0x2e] sm:$0xfc] %vm621, %v598
      %636 = vst.msk [vmem:[#allocation2 + $0x36] sm:$0x3] %vm623, %v600
      %637 = vst.msk [vmem:[#allocation2 + $0x36] sm:$0xfc] %vm621, %v602
      %638 = vst.msk [vmem:[#allocation2 + $0x3e] sm:$0x3] %vm623, %v604
      %640 = vrot.lane.b32.xlu0 %v299, 48
      %v641 = vpop.permute.xlu0 %640
      %642 = vrot.lane.b32.xlu0 %v301, 48
      %v643 = vpop.permute.xlu0 %642
      %644 = vrot.lane.b32.xlu0 %v303, 48
      %v645 = vpop.permute.xlu0 %644
      %646 = vrot.lane.b32.xlu0 %v305, 48
      %v647 = vpop.permute.xlu0 %646
      %648 = vrot.lane.b32.xlu0 %v307, 48
      %v649 = vpop.permute.xlu0 %648
      %650 = vrot.lane.b32.xlu0 %v309, 48
      %v651 = vpop.permute.xlu0 %650
      %652 = vrot.lane.b32.xlu0 %v311, 48
      %v653 = vpop.permute.xlu0 %652
      %654 = vrot.lane.b32.xlu0 %v313, 48
      %v655 = vpop.permute.xlu0 %654
      %vm664 = vcmask 458112
      %665 = vst.msk [vmem:[#allocation2] sm:$0xff] %vm664, %v641
      %666 = vst.msk [vmem:[#allocation2 + $0x8] sm:$0xff] %vm664, %v643
      %667 = vst.msk [vmem:[#allocation2 + $0x10] sm:$0xff] %vm664, %v645
      %668 = vst.msk [vmem:[#allocation2 + $0x18] sm:$0xff] %vm664, %v647
      %669 = vst.msk [vmem:[#allocation2 + $0x20] sm:$0xff] %vm664, %v649
      %670 = vst.msk [vmem:[#allocation2 + $0x28] sm:$0xff] %vm664, %v651
      %671 = vst.msk [vmem:[#allocation2 + $0x30] sm:$0xff] %vm664, %v653
      %672 = vst.msk [vmem:[#allocation2 + $0x38] sm:$0xff] %vm664, %v655
      %674 = vrot.lane.b32.xlu0 %v299, 56
      %v675 = vpop.permute.xlu0 %674
      %676 = vrot.lane.b32.xlu0 %v300, 56
      %v677 = vpop.permute.xlu0 %676
      %678 = vrot.lane.b32.xlu0 %v301, 56
      %v679 = vpop.permute.xlu0 %678
      %680 = vrot.lane.b32.xlu0 %v302, 56
      %v681 = vpop.permute.xlu0 %680
      %682 = vrot.lane.b32.xlu0 %v303, 56
      %v683 = vpop.permute.xlu0 %682
      %684 = vrot.lane.b32.xlu0 %v304, 56
      %v685 = vpop.permute.xlu0 %684
      %686 = vrot.lane.b32.xlu0 %v305, 56
      %v687 = vpop.permute.xlu0 %686
      %688 = vrot.lane.b32.xlu0 %v306, 56
      %v689 = vpop.permute.xlu0 %688
      %690 = vrot.lane.b32.xlu0 %v307, 56
      %v691 = vpop.permute.xlu0 %690
      %692 = vrot.lane.b32.xlu0 %v308, 56
      %v693 = vpop.permute.xlu0 %692
      %694 = vrot.lane.b32.xlu0 %v309, 56
      %v695 = vpop.permute.xlu0 %694
      %696 = vrot.lane.b32.xlu0 %v310, 56
      %v697 = vpop.permute.xlu0 %696
      %698 = vrot.lane.b32.xlu0 %v311, 56
      %v699 = vpop.permute.xlu0 %698
      %700 = vrot.lane.b32.xlu0 %v312, 56
      %v701 = vpop.permute.xlu0 %700
      %702 = vrot.lane.b32.xlu0 %v313, 56
      %v703 = vpop.permute.xlu0 %702
      %704 = vrot.lane.b32.xlu0 %v314, 56
      %v705 = vpop.permute.xlu0 %704
      %vm722 = vcmask 523713
      %723 = vst.msk [vmem:[#allocation2 - $0x1] sm:$0xfe] %vm722, %v675
      %vm724 = vcmask 516544
      %725 = vst.msk [vmem:[#allocation2 + $0x7] sm:$0x1] %vm724, %v677
      %726 = vst.msk [vmem:[#allocation2 + $0x7] sm:$0xfe] %vm722, %v679
      %727 = vst.msk [vmem:[#allocation2 + $0xf] sm:$0x1] %vm724, %v681
      %728 = vst.msk [vmem:[#allocation2 + $0xf] sm:$0xfe] %vm722, %v683
      %729 = vst.msk [vmem:[#allocation2 + $0x17] sm:$0x1] %vm724, %v685
      %730 = vst.msk [vmem:[#allocation2 + $0x17] sm:$0xfe] %vm722, %v687
      %731 = vst.msk [vmem:[#allocation2 + $0x1f] sm:$0x1] %vm724, %v689
      %732 = vst.msk [vmem:[#allocation2 + $0x1f] sm:$0xfe] %vm722, %v691
      %733 = vst.msk [vmem:[#allocation2 + $0x27] sm:$0x1] %vm724, %v693
      %734 = vst.msk [vmem:[#allocation2 + $0x27] sm:$0xfe] %vm722, %v695
      %735 = vst.msk [vmem:[#allocation2 + $0x2f] sm:$0x1] %vm724, %v697
      %736 = vst.msk [vmem:[#allocation2 + $0x2f] sm:$0xfe] %vm722, %v699
      %737 = vst.msk [vmem:[#allocation2 + $0x37] sm:$0x1] %vm724, %v701
      %738 = vst.msk [vmem:[#allocation2 + $0x37] sm:$0xfe] %vm722, %v703
      %739 = vst.msk [vmem:[#allocation2 + $0x3f] sm:$0x1] %vm724, %v705
      %740 = vrot.lane.b32.xlu0 %v299, 64
      %v741 = vpop.permute.xlu0 %740
      %742 = vrot.lane.b32.xlu0 %v300, 64
      %v743 = vpop.permute.xlu0 %742
      %744 = vrot.lane.b32.xlu0 %v301, 64
      %v745 = vpop.permute.xlu0 %744
      %746 = vrot.lane.b32.xlu0 %v302, 64
      %v747 = vpop.permute.xlu0 %746
      %748 = vrot.lane.b32.xlu0 %v303, 64
      %v749 = vpop.permute.xlu0 %748
      %750 = vrot.lane.b32.xlu0 %v304, 64
      %v751 = vpop.permute.xlu0 %750
      %752 = vrot.lane.b32.xlu0 %v305, 64
      %v753 = vpop.permute.xlu0 %752
      %754 = vrot.lane.b32.xlu0 %v306, 64
      %v755 = vpop.permute.xlu0 %754
      %756 = vrot.lane.b32.xlu0 %v307, 64
      %v757 = vpop.permute.xlu0 %756
      %758 = vrot.lane.b32.xlu0 %v308, 64
      %v759 = vpop.permute.xlu0 %758
      %760 = vrot.lane.b32.xlu0 %v309, 64
      %v761 = vpop.permute.xlu0 %760
      %762 = vrot.lane.b32.xlu0 %v310, 64
      %v763 = vpop.permute.xlu0 %762
      %764 = vrot.lane.b32.xlu0 %v311, 64
      %v765 = vpop.permute.xlu0 %764
      %766 = vrot.lane.b32.xlu0 %v312, 64
      %v767 = vpop.permute.xlu0 %766
      %768 = vrot.lane.b32.xlu0 %v313, 64
      %v769 = vpop.permute.xlu0 %768
      %770 = vrot.lane.b32.xlu0 %v314, 64
      %v771 = vpop.permute.xlu0 %770
      %vm788 = vcmask 589314
      %789 = vst.msk [vmem:[#allocation2 - $0x2] sm:$0xfc] %vm788, %v741
      %vm790 = vcmask 583168
      %791 = vst.msk [vmem:[#allocation2 + $0x6] sm:$0x3] %vm790, %v743
      %792 = vst.msk [vmem:[#allocation2 + $0x6] sm:$0xfc] %vm788, %v745
      %793 = vst.msk [vmem:[#allocation2 + $0xe] sm:$0x3] %vm790, %v747
      %794 = vst.msk [vmem:[#allocation2 + $0xe] sm:$0xfc] %vm788, %v749
      %795 = vst.msk [vmem:[#allocation2 + $0x16] sm:$0x3] %vm790, %v751
      %796 = vst.msk [vmem:[#allocation2 + $0x16] sm:$0xfc] %vm788, %v753
      %797 = vst.msk [vmem:[#allocation2 + $0x1e] sm:$0x3] %vm790, %v755
      %798 = vst.msk [vmem:[#allocation2 + $0x1e] sm:$0xfc] %vm788, %v757
      %799 = vst.msk [vmem:[#allocation2 + $0x26] sm:$0x3] %vm790, %v759
      %800 = vst.msk [vmem:[#allocation2 + $0x26] sm:$0xfc] %vm788, %v761
      %801 = vst.msk [vmem:[#allocation2 + $0x2e] sm:$0x3] %vm790, %v763
      %802 = vst.msk [vmem:[#allocation2 + $0x2e] sm:$0xfc] %vm788, %v765
      %803 = vst.msk [vmem:[#allocation2 + $0x36] sm:$0x3] %vm790, %v767
      %804 = vst.msk [vmem:[#allocation2 + $0x36] sm:$0xfc] %vm788, %v769
      %805 = vst.msk [vmem:[#allocation2 + $0x3e] sm:$0x3] %vm790, %v771
      %v806 = vld [vmem:[#allocation2] sm:$0xff]
      %v807 = vld [vmem:[#allocation2 + $0x8] sm:$0xff]
      %v808 = vld [vmem:[#allocation2 + $0x10] sm:$0xff]
      %v809 = vld [vmem:[#allocation2 + $0x18] sm:$0xff]
      %v810 = vld [vmem:[#allocation2 + $0x20] sm:$0xff]
      %v811 = vld [vmem:[#allocation2 + $0x28] sm:$0xff]
      %v812 = vld [vmem:[#allocation2 + $0x30] sm:$0xff]
      %v813 = vld [vmem:[#allocation2 + $0x38] sm:$0xff]
      %v814 = vpack.c.bf16 %v807, %v806
      %v815 = vpack.c.bf16 %v809, %v808
      %v816 = vpack.c.bf16 %v811, %v810
      %v817 = vpack.c.bf16 %v813, %v812
      %v818 = vld [vmem:[#allocation3] sm:$0xff]
      %v819 = vld [vmem:[#allocation3 + $0x8] sm:$0xff]
      %v820 = vld [vmem:[#allocation3 + $0x10] sm:$0xff]
      %v821 = vld [vmem:[#allocation3 + $0x18] sm:$0xff]
      %v822 = vld [vmem:[#allocation3 + $0x20] sm:$0xff]
      %v823 = vld [vmem:[#allocation3 + $0x28] sm:$0xff]
      %v824 = vld [vmem:[#allocation3 + $0x30] sm:$0xff]
      %v825 = vld [vmem:[#allocation3 + $0x38] sm:$0xff]
      %v826 = vld [vmem:[%s244] sm:$0xf]
      %v827 = vld [vmem:[%s244 + $0x4] sm:$0xf]
      %v828 = vld [vmem:[%s244 + $0x8] sm:$0xf]
      %v829 = vld [vmem:[%s244 + $0xc] sm:$0xf]
      %v830 = vld [vmem:[%s244 + $0x10] sm:$0xf]
      %v831 = vld [vmem:[%s244 + $0x14] sm:$0xf]
      %v832 = vld [vmem:[%s244 + $0x18] sm:$0xf]
      %v833 = vld [vmem:[%s244 + $0x1c] sm:$0xf]
      %v834 = vld [vmem:[%s244 + $0x20] sm:$0xf]
      %v844 = vunpack.c.l.b16 %v826
      %v845 = vunpack.c.l.b16 %v827
      %v846 = vunpack.c.l.b16 %v828
      %v847 = vunpack.c.l.b16 %v829
      %v848 = vunpack.c.l.b16 %v830
      %v849 = vunpack.c.l.b16 %v831
      %v850 = vunpack.c.l.b16 %v832
      %v851 = vunpack.c.l.b16 %v833
      %v852 = vunpack.c.l.b16 %v834
      %v853 = vpack.c.b16 %v845, %v844
      %v854 = vpack.c.b16 %v847, %v846
      %v855 = vpack.c.b16 %v849, %v848
      %v856 = vpack.c.b16 %v851, %v850
      %v857 = vpack.c.b16 %v852, %v852
      %vm862 = vcmask 588800
      %v864 = vsel %vm862, %v814, 0
      %v867 = vsel %vm862, %v815, 0
      %v870 = vsel %vm862, %v816, 0
      %v873 = vsel %vm862, %v817, 0
      %vm875 = vcmask 1043456
      %v877 = vsel %vm875, %v857, 0
      %879 = vmatprep.subr.bf16.mxu0 0
      %880 = vmatpush1.bf16.msra.mxu0 %v853
      %881 = vmatprep.subr.bf16.mxu0 0
      %882 = vmatpush1.bf16.msra.mxu0 %v854
      %883 = vmatprep.subr.bf16.mxu0 0
      %884 = vmatpush1.bf16.msra.mxu0 %v855
      %885 = vmatprep.subr.bf16.mxu0 0
      %886 = vmatpush1.bf16.msra.mxu0 %v856
      %887 = vmatprep.subr.bf16.mxu0 0
      %888 = vmatpush1.bf16.msra.mxu0 %v877
      %889 = vmatprep.subr.bf16.mxu0 0
      %890 = vmatpush1.bf16.msra.mxu0 0
      %891 = vmatprep.subr.bf16.mxu0 0
      %892 = vmatpush1.bf16.msra.mxu0 0
      %893 = vmatprep.subr.bf16.mxu0 0
      %894 = vmatpush1.bf16.msra.mxu0 0
      %895 = vmatprep.subr.bf16.mxu0 0
      %896 = vmatpush1.bf16.msra.mxu0 0
      %897 = vmatprep.subr.bf16.mxu0 0
      %898 = vmatpush1.bf16.msra.mxu0 0
      %899 = vmatprep.subr.bf16.mxu0 0
      %900 = vmatpush1.bf16.msra.mxu0 0
      %901 = vmatprep.subr.bf16.mxu0 0
      %902 = vmatpush1.bf16.msra.mxu0 0
      %903 = vmatprep.subr.bf16.mxu0 0
      %904 = vmatpush1.bf16.msra.mxu0 0
      %905 = vmatprep.subr.bf16.mxu0 0
      %906 = vmatpush1.bf16.msra.mxu0 0
      %907 = vmatprep.subr.bf16.mxu0 0
      %908 = vmatpush1.bf16.msra.mxu0 0
      %909 = vmatprep.subr.bf16.mxu0 0
      %910 = vmatpush1.bf16.msra.mxu0 0
      %911 = vmatprep.mubr.bf16.mxu0 0
      %912 = vmatmul.mubr.bf16.gmra.mrb[0].mxu0 %v864
      %v913 = vpop.f32.mrb[0].mxu0
      %v914 = vadd.f32 0.0, %v913
      %v915 = vpop.f32.mrb[0].mxu0
      %v916 = vpop.f32.mrb[0].mxu0
      %v917 = vadd.f32 0.0, %v916
      %v918 = vpop.f32.mrb[0].mxu0
      %919 = vmatprep.mubr.bf16.mxu0 0
      %920 = vmatmul.mubr.bf16.gmra.mrb[0].mxu0 %v867
      %v921 = vpop.f32.mrb[0].mxu0
      %v922 = vadd.f32 0.0, %v921
      %v923 = vpop.f32.mrb[0].mxu0
      %v924 = vpop.f32.mrb[0].mxu0
      %v925 = vadd.f32 0.0, %v924
      %v926 = vpop.f32.mrb[0].mxu0
      %927 = vmatprep.mubr.bf16.mxu0 0
      %928 = vmatmul.mubr.bf16.gmra.mrb[0].mxu0 %v870
      %v929 = vpop.f32.mrb[0].mxu0
      %v930 = vadd.f32 0.0, %v929
      %v931 = vpop.f32.mrb[0].mxu0
      %v932 = vpop.f32.mrb[0].mxu0
      %v933 = vadd.f32 0.0, %v932
      %v934 = vpop.f32.mrb[0].mxu0
      %935 = vmatprep.mubr.bf16.mxu0 0
      %936 = vmatmul.mubr.bf16.gmra.mrb[0].mxu0 %v873
      %v937 = vpop.f32.mrb[0].mxu0
      %v938 = vadd.f32 0.0, %v937
      %v939 = vpop.f32.mrb[0].mxu0
      %v940 = vpop.f32.mrb[0].mxu0
      %v941 = vadd.f32 0.0, %v940
      %v942 = vpop.f32.mrb[0].mxu0
      %943 = vdwg.mxu0
      %v944 = vadd.f32 %v818, %v914
      %v945 = vadd.f32 %v819, %v917
      %v946 = vadd.f32 %v820, %v922
      %v947 = vadd.f32 %v821, %v925
      %v948 = vadd.f32 %v822, %v930
      %v949 = vadd.f32 %v823, %v933
      %v950 = vadd.f32 %v824, %v938
      %v951 = vadd.f32 %v825, %v941
      %952 = vst [vmem:[#allocation3] sm:$0xff] %v944
      %953 = vst [vmem:[#allocation3 + $0x8] sm:$0xff] %v945
      %954 = vst [vmem:[#allocation3 + $0x10] sm:$0xff] %v946
      %955 = vst [vmem:[#allocation3 + $0x18] sm:$0xff] %v947
      %956 = vst [vmem:[#allocation3 + $0x20] sm:$0xff] %v948
      %957 = vst [vmem:[#allocation3 + $0x28] sm:$0xff] %v949
      %958 = vst [vmem:[#allocation3 + $0x30] sm:$0xff] %v950
      %959 = vst [vmem:[#allocation3 + $0x38] sm:$0xff] %v951
      %p960 = scmp.eq.s32.totalorder %s22, 2
      // Predicated region
      $region33: #{double_conv.6} parent=27 // pred_check
        %p961 = pneg %p960
      $region34: #{double_conv.6} parent=27 // pred_check_branch
        %963 = sbr.rel (%p961) target = $region36
      $region35: #{double_conv.6} parent=27 // pred_region
        %v964 = vld [vmem:[#allocation3] sm:$0xff]
        %v965 = vld [vmem:[#allocation3 + $0x8] sm:$0xff]
        %v966 = vld [vmem:[#allocation3 + $0x10] sm:$0xff]
        %v967 = vld [vmem:[#allocation3 + $0x18] sm:$0xff]
        %v968 = vld [vmem:[#allocation3 + $0x20] sm:$0xff]
        %v969 = vld [vmem:[#allocation3 + $0x28] sm:$0xff]
        %v970 = vld [vmem:[#allocation3 + $0x30] sm:$0xff]
        %v971 = vld [vmem:[#allocation3 + $0x38] sm:$0xff]
        %972 = vst [vmem:[%s253] sm:$0xff] %v964
        %973 = vst [vmem:[%s253 + $0x8] sm:$0xff] %v965
        %974 = vst [vmem:[%s253 + $0x10] sm:$0xff] %v966
        %975 = vst [vmem:[%s253 + $0x18] sm:$0xff] %v967
        %976 = vst [vmem:[%s253 + $0x20] sm:$0xff] %v968
        %977 = vst [vmem:[%s253 + $0x28] sm:$0xff] %v969
        %978 = vst [vmem:[%s253 + $0x30] sm:$0xff] %v970
        %979 = vst [vmem:[%s253 + $0x38] sm:$0xff] %v971
        %980 = vst [vmem:[%s261] sm:$0xff] 0.0
        %v981 = vadd.f32 %v964, %v965
        %v982 = vadd.f32 %v981, %v966
        %v983 = vadd.f32 %v982, %v967
        %v984 = vadd.f32 %v983, %v968
        %v985 = vadd.f32 %v984, %v969
        %v986 = vadd.f32 %v985, %v970
        %v987 = vadd.f32 %v986, %v971
        %v988 = vrot.slane %v987, 4
        %v989 = vadd.f32 %v987, %v988
        %v990 = vrot.slane %v989, 2
        %v991 = vadd.f32 %v989, %v990
        %v992 = vrot.slane %v991, 1
        %v993 = vadd.f32 %v991, %v992
        %994 = vst [vmem:[%s261] sm:$0x1] %v993
        %v995 = vmul.f32 %v964, %v964
        %v996 = vmul.f32 %v965, %v965
        %v997 = vmul.f32 %v966, %v966
        %v998 = vmul.f32 %v967, %v967
        %v999 = vmul.f32 %v968, %v968
        %v1000 = vmul.f32 %v969, %v969
        %v1001 = vmul.f32 %v970, %v970
        %v1002 = vmul.f32 %v971, %v971
        %v1003 = vadd.f32 %v995, %v996
        %v1004 = vadd.f32 %v1003, %v997
        %v1005 = vadd.f32 %v1004, %v998
        %v1006 = vadd.f32 %v1005, %v999
        %v1007 = vadd.f32 %v1006, %v1000
        %v1008 = vadd.f32 %v1007, %v1001
        %v1009 = vadd.f32 %v1008, %v1002
        %v1010 = vrot.slane %v1009, 4
        %v1011 = vadd.f32 %v1009, %v1010
        %v1012 = vrot.slane %v1011, 2
        %v1013 = vadd.f32 %v1011, %v1012
        %v1014 = vrot.slane %v1013, 1
        %v1015 = vadd.f32 %v1013, %v1014
        %1016 = vst [vmem:[%s261 + $0x1] sm:$0x1] %v1015
      $region36: #{double_conv.6} parent=27 // pred_fallthru
        _
      %p1017 = scmp.lt.s32.totalorder %s20, 1
      %s1018 = scalar_select %p1017, %s20, 1
      %p1019 = scmp.lt.s32.totalorder %s21, 7
      %s1020 = scalar_select %p1019, %s21, 7
      %s1021 = smul.addr %s1020, 8
      %s1022 = smul.addr %s1018, 64
      %s1023 = sadd.s32 %s1021, %s1022
      %s1024 = smul.addr %s1023, 8
      %s1025 = scalar_lea.vmem %s2, %s1024
      %p1026 = scmp.lt.s32.totalorder %s20, 1
      %s1027 = scalar_select %p1026, %s20, 1
      %p1028 = scmp.lt.s32.totalorder %s21, 7
      %s1029 = scalar_select %p1028, %s21, 7
      %s1030 = smul.addr %s1027, 8
      %s1031 = sadd.s32 %s1029, %s1030
      %s1032 = smul.addr %s1031, 8
      %s1033 = scalar_lea.vmem %s3, %s1032
      // Predicated region
      $region37: #{double_conv.6} parent=27 // pred_check
        %p1034 = pneg %p110
      $region38: #{double_conv.6} parent=27 // pred_check_branch
        %1036 = sbr.rel (%p1034) target = $region40
      $region39: #{double_conv.6} parent=27 // pred_region
        _
      $region40: #{double_conv.6} parent=27 // pred_fallthru
        _
      // Predicated region
      $region41: #{double_conv.6} parent=27 // pred_check
        %p1037 = pneg %p138
      $region42: #{double_conv.6} parent=27 // pred_check_branch
        %1039 = sbr.rel (%p1037) target = $region44
      $region43: #{double_conv.6} parent=27 // pred_region
        _
      $region44: #{double_conv.6} parent=27 // pred_fallthru
        _
    $region28: #{double_conv.6} parent=5 // pred_fallthru
      _
    %p1040 = scmp.le.s32.totalorder 2, %s10
    // Predicated region
    $region45: #{double_conv.6} parent=5 // pred_check
      %p1041 = pneg %p1040
    $region46: #{double_conv.6} parent=5 // pred_check_branch
      %1043 = sbr.rel (%p1041) target = $region48
    $region47: #{double_conv.6} parent=5 // pred_region
      %s1044 = ssub.s32 %s10, 2
      // Predicated region
      $region49: #{double_conv.6} parent=47 // pred_check
        %p1045 = pneg %p116
      $region50: #{double_conv.6} parent=47 // pred_check_branch
        %1047 = sbr.rel (%p1045) target = $region52
      $region51: #{double_conv.6} parent=47 // pred_region
        %p1048 = scmp.lt.s32.totalorder %s23, 1
        %s1049 = scalar_select %p1048, %s23, 1
        %p1050 = scmp.lt.s32.totalorder %s24, 7
        %s1051 = scalar_select %p1050, %s24, 7
        %s1052 = smul.addr %s1051, 8
        %s1053 = smul.addr %s1049, 64
        %s1054 = sadd.s32 %s1052, %s1053
        %s1055 = smul.addr %s1054, 8
        %s1056 = scalar_lea.vmem %s2, %s1055
      $region52: #{double_conv.6} parent=47 // pred_fallthru
        _
      // Predicated region
      $region53: #{double_conv.6} parent=47 // pred_check
        %p1057 = pneg %p144
      $region54: #{double_conv.6} parent=47 // pred_check_branch
        %1059 = sbr.rel (%p1057) target = $region56
      $region55: #{double_conv.6} parent=47 // pred_region
        %p1060 = scmp.lt.s32.totalorder %s23, 1
        %s1061 = scalar_select %p1060, %s23, 1
        %p1062 = scmp.lt.s32.totalorder %s24, 7
        %s1063 = scalar_select %p1062, %s24, 7
        %s1064 = smul.addr %s1061, 8
        %s1065 = sadd.s32 %s1063, %s1064
        %s1066 = smul.addr %s1065, 8
        %s1067 = scalar_lea.vmem %s3, %s1066
      $region56: #{double_conv.6} parent=47 // pred_fallthru
        _
    $region48: #{double_conv.6} parent=5 // pred_fallthru
      _
  $region6: #{double_conv.6} parent=0 // loop_footer
    %s14 = sadd.s32 1, %s10
  $region7: #{double_conv.6} parent=0 // loop_footer_branch
    %9 = sbr.rel target = $region3
  $region8: #{double_conv.6} parent=0 // loop_exit
    _

</llo_original>
